<compile_context>
chip_gen: v7x
topology: tpu7x:2x2x1
jax: 0.10.0
libtpu: 0.0.40
codegen_flags: <defaults>
</compile_context>

<pallas_src>
import functools
import math

import jax
import jax.numpy as jnp
from jax.experimental import pallas as pl
from jax.experimental.pallas import tpu as pltpu


def _round_up(n, m):
    return ((n + m - 1) // m) * m


def _physical_vmem_bytes():
    try:
        return int(pltpu.get_tpu_info().vmem_capacity_bytes)
    except Exception:
        return 128 << 20  # v5e / v6e default


def _vmem_footprint(tm, tf, D, act_bytes, w_bytes, wb):
    """Rough per-step VMEM bytes for the chosen tiles (wb = weight buffers)."""
    return (
        2 * tm * D * act_bytes          # x tile (double-buffered)
        + 2 * wb * D * tf * w_bytes     # w1 + w3 tiles
        + wb * tf * D * w_bytes         # w2 tile
        + 2 * tm * D * act_bytes        # output tile
        + tm * D * 4                    # f32 accumulator scratch
        + 4 * tm * tf * 4               # h1/h3/sig/gated f32 temporaries
        + tm * tf * w_bytes             # gated cast for the down-projection
    )


def _swiglu_ffn_kernel(x_ref, w1_ref, w3_ref, w2_ref, o_ref, acc_ref, *, precision):
    # x_ref:   (tm, D)   token tile (reused across the F reduction axis)
    # w1_ref:  (D, tf)   gate-projection chunk for F-chunk k
    # w3_ref:  (D, tf)   up-projection chunk for F-chunk k
    # w2_ref:  (tf, D)   down-projection chunk for F-chunk k
    # o_ref:   (tm, D)   output tile
    # acc_ref: (tm, D)   f32 VMEM accumulator, resident across the F axis
    k = pl.program_id(1)

    @pl.when(k == 0)
    def _init():
        acc_ref[...] = jnp.zeros_like(acc_ref)

    x = x_ref[...]
    # Gate / up projections for this F-chunk; f32 MXU accumulation.
    h1 = jnp.dot(x, w1_ref[...], preferred_element_type=jnp.float32,
                 precision=precision)                                  # (tm, tf)
    h3 = jnp.dot(x, w3_ref[...], preferred_element_type=jnp.float32,
                 precision=precision)                                  # (tm, tf)
    # SiLU gating in f32.  exp() and the approximate reciprocal both issue on
    # the EUP slot, keeping the (tm, tf) activation work off the VALU.
    sig = pl.reciprocal(1.0 + jnp.exp(-h1), approx=True)
    gated = (h1 * sig) * h3
    # Down-projection partial product; feed the MXU in the weight dtype and
    # accumulate in f32.
    acc_ref[...] += jnp.dot(gated.astype(w2_ref.dtype), w2_ref[...],
                            preferred_element_type=jnp.float32,
                            precision=precision)

    @pl.when(k == pl.num_programs(1) - 1)
    def _finalize():
        o_ref[...] = acc_ref[...].astype(o_ref.dtype)


def swiglu_ffn(x, w1, w3, w2, *, tm=None, tf=None, precision=None):
    """SwiGLU FFN.  x: [B, S, D]; w1, w3: [D, F]; w2: [F, D]  ->  [B, S, D].

    Tiling guidance:
      v6e: tm = 512-768, tf = 512 (128 MiB VMEM, knee ~650 FLOP/byte).
      v7x: tm ~ 512-640, tf = 256 (64 MiB VMEM, 2 TCs share HBM).
      v5e: tm = 256-384 is already at the ~240 FLOP/byte knee; larger tm only
           costs VMEM and pipeline fill.
    Defaults pick tm=512 and tf based on physical VMEM; both auto-shrink for
    small token counts / tight VMEM.
    """
    B, S, D = x.shape
    F = w1.shape[1]
    assert w1.shape == (D, F) and w3.shape == (D, F) and w2.shape == (F, D)
    assert F % 128 == 0, "d_ffn must be a multiple of 128"

    act_bytes = jnp.dtype(x.dtype).itemsize
    w_bytes = jnp.dtype(w2.dtype).itemsize

    phys_vmem = _physical_vmem_bytes()
    budget = phys_vmem - (8 << 20)  # headroom for Mosaic internal scratch / sems

    # --- chip-aware tile defaults ---
    if tm is None:
        tm = 512
    if tf is None:
        tf = 256 if phys_vmem <= (64 << 20) else 512

    # --- F (d_ffn) tiling: largest multiple of 128 dividing F, <= requested ---
    tf = max(128, (min(tf, F) // 128) * 128)
    while tf > 128 and F % tf != 0:
        tf -= 128
    assert F % tf == 0
    nk = F // tf

    # --- token (M) tiling: align to the activation dtype's sublane tile ---
    sub = 8 * max(1, 4 // act_bytes)  # 8 rows f32, 16 bf16, 32 int8/fp8
    T = B * S
    tm = _round_up(min(tm, _round_up(T, sub)), sub)

    # Shrink tm if the per-step footprint would not fit physical VMEM.
    while _vmem_footprint(tm, tf, D, act_bytes, w_bytes, 2) > budget and tm > sub:
        tm = _round_up(max(sub, tm // 2), sub)

    T_pad = _round_up(T, tm)
    x2 = x.reshape(T, D)
    if T_pad != T:
        x2 = jnp.pad(x2, ((0, T_pad - T), (0, 0)))

    # Weight pipelining depth: a third buffer hides DMA jitter on the dominant
    # (weight) transfers when the reduction is long and VMEM allows.
    wb = 3 if (nk >= 4 and
               _vmem_footprint(tm, tf, D, act_bytes, w_bytes, 3) <= budget) else 2

    def _wspec(shape, index_map):
        if wb > 2:
            return pl.BlockSpec(shape, index_map, pipeline_mode=pl.Buffered(wb))
        return pl.BlockSpec(shape, index_map)

    footprint = _vmem_footprint(tm, tf, D, act_bytes, w_bytes, wb)
    vmem_limit = int(min(max(footprint * 1.25 + (2 << 20), 32 << 20), budget))

    kernel = functools.partial(_swiglu_ffn_kernel, precision=precision)

    # TODO(synk): for d_model >= ~8192 on v7x, add a third (parallel) grid axis
    # tiling the output D of w2/o (keep the gated (tm, tf) activation in VMEM
    # scratch) so the (tm, D) accumulator and w2 tile stay inside 64 MiB
    # without shrinking tm.
    # TODO(synk): decode path (T_pad == tm) on v7x: split the F reduction
    # across the two TensorCores so the second core is not idle.
    out2 = pl.pallas_call(
        kernel,
        out_shape=jax.ShapeDtypeStruct((T_pad, D), x.dtype),
        grid_spec=pltpu.PrefetchScalarGridSpec(
            num_scalar_prefetch=0,
            grid=(T_pad // tm, nk),                            # (tokens, d_ffn): reduction last
            in_specs=[
                pl.BlockSpec((tm, D), lambda i, k: (i, 0)),    # x tile (reused over k)
                _wspec((D, tf), lambda i, k: (0, k)),          # w1 chunk
                _wspec((D, tf), lambda i, k: (0, k)),          # w3 chunk
                _wspec((tf, D), lambda i, k: (k, 0)),          # w2 chunk
            ],
            out_specs=pl.BlockSpec((tm, D), lambda i, k: (i, 0)),
            scratch_shapes=[pltpu.VMEM((tm, D), jnp.float32)],
        ),
        compiler_params=pltpu.CompilerParams(
            dimension_semantics=("parallel", "arbitrary"),
            vmem_limit_bytes=vmem_limit,
        ),
    )(x2, w1, w3, w2)

    return out2[:T].reshape(B, S, D)


if __name__ == "__main__":
    # Small shapes consistent with the module (d_model -> d_ffn -> d_model),
    # chosen so both grid axes take multiple steps (T/tm = 2, F/tf = 2) and the
    # output last dim is a multiple of 128 (lane-dense stores).
    B, S = 2, 64
    d_model, d_ffn = 256, 512

    key = jax.random.PRNGKey(0)
    kx, k1, k3, k2 = jax.random.split(key, 4)

    x = jax.random.normal(kx, (B, S, d_model), dtype=jnp.float32)
    # Weights pre-transposed vs. nn.Linear: w1, w3 -> [D, F]; w2 -> [F, D].
    w1 = jax.random.normal(k1, (d_model, d_ffn), dtype=jnp.float32) / math.sqrt(d_model)
    w3 = jax.random.normal(k3, (d_model, d_ffn), dtype=jnp.float32) / math.sqrt(d_model)
    w2 = jax.random.normal(k2, (d_ffn, d_model), dtype=jnp.float32) / math.sqrt(d_ffn)

    # High-precision reference (same math as the PyTorch forward).
    hp = jax.lax.Precision.HIGHEST
    h1 = jnp.dot(x, w1, precision=hp)
    ref = jnp.dot((h1 * jax.nn.sigmoid(h1)) * jnp.dot(x, w3, precision=hp),
                  w2, precision=hp)

    def rel_l2(a, b):
        return float(jnp.linalg.norm(a.astype(jnp.float32) - b)
                     / (jnp.linalg.norm(b) + 1e-6))

    # f32 operand path, explicit high precision on the MXU (documents the
    # default-precision deviation called out in review).
    out = swiglu_ffn(x, w1, w3, w2, tm=64, tf=256, precision=hp)
    out = jax.block_until_ready(out)
    assert out.shape == (B, S, d_model)
    e = rel_l2(out, ref)
    assert e < 1e-2, e

    # bf16 operand path (recommended on v6e/v7x): bf16 weights/activations,
    # f32 gating + accumulation inside the kernel.
    out_bf16 = swiglu_ffn(x.astype(jnp.bfloat16), w1.astype(jnp.bfloat16),
                          w3.astype(jnp.bfloat16), w2.astype(jnp.bfloat16),
                          tm=64, tf=256)
    out_bf16 = jax.block_until_ready(out_bf16)
    e_bf16 = rel_l2(out_bf16, ref)
    assert e_bf16 < 0.08, e_bf16

    # Chip-aware default tiles (tm/tf auto-derived, MXU default precision).
    out_def = jax.block_until_ready(swiglu_ffn(x, w1, w3, w2))
    e_def = rel_l2(out_def, ref)
    assert e_def < 0.03, e_def

    print("KERNEL_OK")
</pallas_src>

<mosaic_0001>
module attributes {stable_mosaic.version = 11 : i64} {
  func.func @_swiglu_ffn_kernel(%arg0: i32, %arg1: i32, %arg2: memref<64x256xf32, #tpu.memory_space<vmem>>, %arg3: memref<256x256xf32, #tpu.memory_space<vmem>>, %arg4: memref<256x256xf32, #tpu.memory_space<vmem>>, %arg5: memref<256x256xf32, #tpu.memory_space<vmem>>, %arg6: memref<64x256xf32, #tpu.memory_space<vmem>>, %arg7: memref<64x256xf32, #tpu.memory_space<vmem>>) attributes {dimension_semantics = [#tpu.dimension_semantics<parallel>, #tpu.dimension_semantics<arbitrary>], iteration_bounds = array<i64: 2, 2>, scalar_prefetch = 0 : i64, scratch_operands = 1 : i64, tpu.core_type = #tpu.core_type<tc>, window_params = [{transform_indices = @transform_0, window_bounds = array<i64: 64, 256>}, {transform_indices = @transform_1, window_bounds = array<i64: 256, 256>}, {transform_indices = @transform_2, window_bounds = array<i64: 256, 256>}, {transform_indices = @transform_3, window_bounds = array<i64: 256, 256>}, {transform_indices = @transform_4, window_bounds = array<i64: 64, 256>}]} {
    %c0_i32 = arith.constant 0 : i32
    %0 = arith.cmpi eq, %arg1, %c0_i32 : i32
    %1 = arith.extui %0 : i1 to i32
    %c0_i32_0 = arith.constant 0 : i32
    %2 = arith.cmpi ne, %1, %c0_i32_0 : i32
    scf.if %2 {
      %cst_17 = arith.constant 0.000000e+00 : f32
      %24 = vector.broadcast %cst_17 : f32 to vector<64x256xf32>
      %c0_18 = arith.constant 0 : index
      %c0_19 = arith.constant 0 : index
      %25 = vector.load %arg7[%c0_18, %c0_19] : memref<64x256xf32, #tpu.memory_space<vmem>>, vector<64x256xf32>
      tpu.vector_store %arg7[%c0_18, %c0_19], %24 {strides = array<i32>} : memref<64x256xf32, #tpu.memory_space<vmem>>, vector<64x256xf32>,
    } else {
    }
    %c0 = arith.constant 0 : index
    %c0_1 = arith.constant 0 : index
    %3 = vector.load %arg2[%c0, %c0_1] : memref<64x256xf32, #tpu.memory_space<vmem>>, vector<64x256xf32>
    %c0_2 = arith.constant 0 : index
    %c0_3 = arith.constant 0 : index
    %4 = vector.load %arg3[%c0_2, %c0_3] : memref<256x256xf32, #tpu.memory_space<vmem>>, vector<256x256xf32>
    %cst = arith.constant dense<0.000000e+00> : vector<64x256xf32>
    %5 = tpu.matmul %3, %4, %cst {dimension_numbers = #tpu.dot_dimension_numbers<[1], [0], [0], [1], [0, 0, 1, 1], [], []>, precision = #tpu.contract_precision<fp32>} : vector<64x256xf32>, vector<256x256xf32>, vector<64x256xf32> -> vector<64x256xf32>
    %c0_4 = arith.constant 0 : index
    %c0_5 = arith.constant 0 : index
    %6 = vector.load %arg4[%c0_4, %c0_5] : memref<256x256xf32, #tpu.memory_space<vmem>>, vector<256x256xf32>
    %cst_6 = arith.constant dense<0.000000e+00> : vector<64x256xf32>
    %7 = tpu.matmul %3, %6, %cst_6 {dimension_numbers = #tpu.dot_dimension_numbers<[1], [0], [0], [1], [0, 0, 1, 1], [], []>, precision = #tpu.contract_precision<fp32>} : vector<64x256xf32>, vector<256x256xf32>, vector<64x256xf32> -> vector<64x256xf32>
    %cst_7 = arith.constant 0.000000e+00 : f32
    %8 = vector.broadcast %cst_7 : f32 to vector<64x256xf32>
    %9 = arith.subf %8, %5 : vector<64x256xf32>
    %10 = math.exp %9 : vector<64x256xf32>
    %cst_8 = arith.constant 1.000000e+00 : f32
    %11 = vector.broadcast %cst_8 : f32 to vector<64x256xf32>
    %12 = arith.addf %11, %10 : vector<64x256xf32>
    %13 = tpu.reciprocal %12 {approx = true} : vector<64x256xf32> -> vector<64x256xf32>
    %14 = arith.mulf %5, %13 : vector<64x256xf32>
    %15 = arith.mulf %14, %7 : vector<64x256xf32>
    %c0_9 = arith.constant 0 : index
    %c0_10 = arith.constant 0 : index
    %16 = vector.load %arg7[%c0_9, %c0_10] : memref<64x256xf32, #tpu.memory_space<vmem>>, vector<64x256xf32>
    %c0_11 = arith.constant 0 : index
    %c0_12 = arith.constant 0 : index
    %17 = vector.load %arg5[%c0_11, %c0_12] : memref<256x256xf32, #tpu.memory_space<vmem>>, vector<256x256xf32>
    %cst_13 = arith.constant dense<0.000000e+00> : vector<64x256xf32>
    %18 = tpu.matmul %15, %17, %cst_13 {dimension_numbers = #tpu.dot_dimension_numbers<[1], [0], [0], [1], [0, 0, 1, 1], [], []>, precision = #tpu.contract_precision<fp32>} : vector<64x256xf32>, vector<256x256xf32>, vector<64x256xf32> -> vector<64x256xf32>
    %19 = arith.addf %16, %18 : vector<64x256xf32>
    %c0_14 = arith.constant 0 : index
    %c0_15 = arith.constant 0 : index
    %20 = vector.load %arg7[%c0_14, %c0_15] : memref<64x256xf32, #tpu.memory_space<vmem>>, vector<64x256xf32>
    tpu.vector_store %arg7[%c0_14, %c0_15], %19 {strides = array<i32>} : memref<64x256xf32, #tpu.memory_space<vmem>>, vector<64x256xf32>,
    %c1_i32 = arith.constant 1 : i32
    %21 = arith.cmpi eq, %arg1, %c1_i32 : i32
    %22 = arith.extui %21 : i1 to i32
    %c0_i32_16 = arith.constant 0 : i32
    %23 = arith.cmpi ne, %22, %c0_i32_16 : i32
    scf.if %23 {
      %c0_17 = arith.constant 0 : index
      %c0_18 = arith.constant 0 : index
      %24 = vector.load %arg7[%c0_17, %c0_18] : memref<64x256xf32, #tpu.memory_space<vmem>>, vector<64x256xf32>
      %c0_19 = arith.constant 0 : index
      %c0_20 = arith.constant 0 : index
      %25 = vector.load %arg6[%c0_19, %c0_20] : memref<64x256xf32, #tpu.memory_space<vmem>>, vector<64x256xf32>
      tpu.vector_store %arg6[%c0_19, %c0_20], %24 {strides = array<i32>} : memref<64x256xf32, #tpu.memory_space<vmem>>, vector<64x256xf32>,
    } else {
    }
    return
  }
  func.func @transform_0(%arg0: i32, %arg1: i32) -> (i32, i32) {
    %c0_i32 = arith.constant 0 : i32
    %c0_i32_0 = arith.constant 0 : i32
    return %arg0, %c0_i32 : i32, i32
  }
  func.func @transform_1(%arg0: i32, %arg1: i32) -> (i32, i32) {
    %c0_i32 = arith.constant 0 : i32
    %c0_i32_0 = arith.constant 0 : i32
    return %c0_i32, %arg1 : i32, i32
  }
  func.func @transform_2(%arg0: i32, %arg1: i32) -> (i32, i32) {
    %c0_i32 = arith.constant 0 : i32
    %c0_i32_0 = arith.constant 0 : i32
    return %c0_i32, %arg1 : i32, i32
  }
  func.func @transform_3(%arg0: i32, %arg1: i32) -> (i32, i32) {
    %c0_i32 = arith.constant 0 : i32
    %c0_i32_0 = arith.constant 0 : i32
    return %arg1, %c0_i32 : i32, i32
  }
  func.func @transform_4(%arg0: i32, %arg1: i32) -> (i32, i32) {
    %c0_i32 = arith.constant 0 : i32
    %c0_i32_0 = arith.constant 0 : i32
    return %arg0, %c0_i32 : i32, i32
  }
}

</mosaic_0001>

<llo_original>
// kernel: tpu_custom_call.1
$region0: #{tpu_custom_call.1}
  #allocation0 [shape = 'u32[]', space=smem, size = 0x4, offset = 0x4, fixed_abs, tag = 'smem constant byte address 0x4 - core index']
  #allocation1 [shape = 'u32[144,128]{1,0:T(1,128)}', space=vmem, size = 0x12000, scoped, tag = 'internal scratch']
  #allocation2 [shape = 'f32[64,256]{1,0:T(8,128)}', space=vmem, size = 0x10000, scoped, tag = 'scratch operand']
  %s0 = inlined_call_operand.hbm [shape: f32[128,256], index: 0, kind: input, shape index: {}]
  %s1 = inlined_call_operand.hbm [shape: f32[256,512], index: 1, kind: input, shape index: {}]
  %s2 = inlined_call_operand.hbm [shape: f32[256,512], index: 2, kind: input, shape index: {}]
  %s3 = inlined_call_operand.hbm [shape: f32[512,256], index: 3, kind: input, shape index: {}]
  %s4 = inlined_call_operand.hbm [shape: f32[128,256], index: 4, kind: output, shape index: {}]
  %s5 = sld [smem:[#allocation0]]
  $region73: #{tpu_custom_call.1} parent=0
    _
  %s7 = ssub.s32 1, %s5
  %s8 = scalar_select 0, %s7, %s5
  $region1: #{tpu_custom_call.1} parent=0
    #allocation3 [shape = 'u8[131072]{0}', space=vmem, size = 0x20000, scoped, tag = 'input window, operand 0']
    #allocation4 [shape = 's32[2]{0}', space=sflag, size = 0x8, scoped, tag = 'scoped memory for tpu_custom_call.1']
    #allocation5 [shape = 's32[2]{0}', space=sflag, size = 0x8, scoped, tag = 'scoped memory for tpu_custom_call.1']
    #allocation6 [shape = 'u8[524288]{0}', space=vmem, size = 0x80000, scoped, tag = 'input window, operand 1']
    #allocation7 [shape = 's32[2]{0}', space=sflag, size = 0x8, scoped, tag = 'scoped memory for tpu_custom_call.1']
    #allocation8 [shape = 'u8[524288]{0}', space=vmem, size = 0x80000, scoped, tag = 'input window, operand 2']
    #allocation9 [shape = 'u8[524288]{0}', space=vmem, size = 0x80000, scoped, tag = 'input window, operand 3']
    #allocation10 [shape = 's32[2]{0}', space=sflag, size = 0x8, scoped, tag = 'scoped memory for tpu_custom_call.1']
    #allocation11 [shape = 'u8[131072]{0}', space=vmem, size = 0x20000, scoped, tag = 'output window, operand 0']
    %9 = vsyncpa [#allocation4], 0
    %s10 = scalar_lea.sflag [#allocation4], 1
    %11 = vsyncpa %s10, 0
    %12 = vsyncpa [#allocation7], 0
    %s13 = scalar_lea.sflag [#allocation7], 1
    %14 = vsyncpa %s13, 0
    %15 = vsyncpa [#allocation10], 0
    %s16 = scalar_lea.sflag [#allocation10], 1
    %17 = vsyncpa %s16, 0
    %18 = vsyncpa [#allocation5], 0
    %s19 = scalar_lea.sflag [#allocation5], 1
    %20 = vsyncpa %s19, 0
    loop: start=0, step=1, limit=6
    $region2: #{tpu_custom_call.1} parent=1 // loop_pre_header
      _
    $region3: #{tpu_custom_call.1} parent=1 // loop_header
      %s22 = sphi 0, %s26
      %p23 = scmp.ge.s32.totalorder %s22, 6
      %s29 = sphi 0, %s41
      %s30 = sphi 0, %s37
      %s31 = sphi 0, %s29
      %s32 = sphi 0, %s30
      %s33 = sphi 0, %s31
      %s34 = sphi 0, %s32
      %s44 = sphi 0, %s46
      %s47 = sphi 0, %s44
      %s48 = sphi 0, %s47
      %s64 = sphi 0, %s48
      %s70 = sphi 0, %s72
      %s73 = sphi 0, %s70
      %s74 = sphi 0, %s73
      %s90 = sphi 0, %s74
      %s96 = sphi 0, %s98
      %s99 = sphi 0, %s96
      %s100 = sphi 0, %s99
      %s116 = sphi 0, %s100
      %s122 = sphi 0, %s124
      %s125 = sphi 0, %s122
      %s126 = sphi 0, %s125
      %s142 = sphi 0, %s126
      %s148 = sphi 0, %s150
      %s151 = sphi 0, %s148
      %s152 = sphi 0, %s151
      %s168 = sphi 0, %s152
    $region4: #{tpu_custom_call.1} parent=1 // loop_header_branch
      %25 = sbr.rel (%p23) target = $region8
    $region5: #{tpu_custom_call.1} parent=1 // loop_body
      %s27 = ssub.s32 %s22, 1
      %s28 = ssub.s32 %s22, 2
      %s35 = sadd.s32 1, %s30
      %p36 = scmp.ge.s32.totalorder %s35, 2
      %s37 = scalar_select %p36, 0, %s35
      %s38 = sadd.s32 1, %s29
      %s39 = scalar_select %p36, %s38, %s29
      %p40 = scmp.ge.s32.totalorder %s39, 2
      %s41 = scalar_select %p40, 0, %s39
      %s42 = ssub.s32 %s29, %s41
      %p43 = scmp.eq.s32.totalorder %s42, 0
      %s45 = sadd.s32 %s44, 1
      %s46 = scalar_select %p43, %s44, %s45
      %p49 = pneg %p43
      %p50 = scmp.eq.s32.totalorder %s22, 3
      %p51 = por %p49, %p50
      %p52 = scmp.ne.s32.totalorder %s44, %s47
      %p53 = scmp.eq.s32.totalorder %s22, 0
      %p54 = por %p52, %p53
      %p55 = scmp.ne.s32.totalorder %s44, %s47
      %p56 = scmp.eq.s32.totalorder %s27, 3
      %p57 = por %p55, %p56
      %p58 = scmp.ne.s32.totalorder %s47, %s48
      %p59 = scmp.eq.s32.totalorder %s27, 0
      %p60 = por %p58, %p59
      %p61 = scmp.ne.s32.totalorder %s47, %s48
      %p62 = scmp.eq.s32.totalorder %s28, 3
      %p63 = por %p61, %p62
      %p65 = scmp.ne.s32.totalorder %s48, %s64
      %p66 = scmp.eq.s32.totalorder %s28, 0
      %p67 = por %p65, %p66
      %s68 = ssub.s32 %s30, %s37
      %p69 = scmp.eq.s32.totalorder %s68, 0
      %s71 = sadd.s32 %s70, 1
      %s72 = scalar_select %p69, %s70, %s71
      %p75 = pneg %p69
      %p76 = scmp.eq.s32.totalorder %s22, 3
      %p77 = por %p75, %p76
      %p78 = scmp.ne.s32.totalorder %s70, %s73
      %p79 = scmp.eq.s32.totalorder %s22, 0
      %p80 = por %p78, %p79
      %p81 = scmp.ne.s32.totalorder %s70, %s73
      %p82 = scmp.eq.s32.totalorder %s27, 3
      %p83 = por %p81, %p82
      %p84 = scmp.ne.s32.totalorder %s73, %s74
      %p85 = scmp.eq.s32.totalorder %s27, 0
      %p86 = por %p84, %p85
      %p87 = scmp.ne.s32.totalorder %s73, %s74
      %p88 = scmp.eq.s32.totalorder %s28, 3
      %p89 = por %p87, %p88
      %p91 = scmp.ne.s32.totalorder %s74, %s90
      %p92 = scmp.eq.s32.totalorder %s28, 0
      %p93 = por %p91, %p92
      %s94 = ssub.s32 %s30, %s37
      %p95 = scmp.eq.s32.totalorder %s94, 0
      %s97 = sadd.s32 %s96, 1
      %s98 = scalar_select %p95, %s96, %s97
      %p101 = pneg %p95
      %p102 = scmp.eq.s32.totalorder %s22, 3
      %p103 = por %p101, %p102
      %p104 = scmp.ne.s32.totalorder %s96, %s99
      %p105 = scmp.eq.s32.totalorder %s22, 0
      %p106 = por %p104, %p105
      %p107 = scmp.ne.s32.totalorder %s96, %s99
      %p108 = scmp.eq.s32.totalorder %s27, 3
      %p109 = por %p107, %p108
      %p110 = scmp.ne.s32.totalorder %s99, %s100
      %p111 = scmp.eq.s32.totalorder %s27, 0
      %p112 = por %p110, %p111
      %p113 = scmp.ne.s32.totalorder %s99, %s100
      %p114 = scmp.eq.s32.totalorder %s28, 3
      %p115 = por %p113, %p114
      %p117 = scmp.ne.s32.totalorder %s100, %s116
      %p118 = scmp.eq.s32.totalorder %s28, 0
      %p119 = por %p117, %p118
      %s120 = ssub.s32 %s30, %s37
      %p121 = scmp.eq.s32.totalorder %s120, 0
      %s123 = sadd.s32 %s122, 1
      %s124 = scalar_select %p121, %s122, %s123
      %p127 = pneg %p121
      %p128 = scmp.eq.s32.totalorder %s22, 3
      %p129 = por %p127, %p128
      %p130 = scmp.ne.s32.totalorder %s122, %s125
      %p131 = scmp.eq.s32.totalorder %s22, 0
      %p132 = por %p130, %p131
      %p133 = scmp.ne.s32.totalorder %s122, %s125
      %p134 = scmp.eq.s32.totalorder %s27, 3
      %p135 = por %p133, %p134
      %p136 = scmp.ne.s32.totalorder %s125, %s126
      %p137 = scmp.eq.s32.totalorder %s27, 0
      %p138 = por %p136, %p137
      %p139 = scmp.ne.s32.totalorder %s125, %s126
      %p140 = scmp.eq.s32.totalorder %s28, 3
      %p141 = por %p139, %p140
      %p143 = scmp.ne.s32.totalorder %s126, %s142
      %p144 = scmp.eq.s32.totalorder %s28, 0
      %p145 = por %p143, %p144
      %s146 = ssub.s32 %s29, %s41
      %p147 = scmp.eq.s32.totalorder %s146, 0
      %s149 = sadd.s32 %s148, 1
      %s150 = scalar_select %p147, %s148, %s149
      %p153 = pneg %p147
      %p154 = scmp.eq.s32.totalorder %s22, 3
      %p155 = por %p153, %p154
      %p156 = scmp.ne.s32.totalorder %s148, %s151
      %p157 = scmp.eq.s32.totalorder %s22, 0
      %p158 = por %p156, %p157
      %p159 = scmp.ne.s32.totalorder %s148, %s151
      %p160 = scmp.eq.s32.totalorder %s27, 3
      %p161 = por %p159, %p160
      %p162 = scmp.ne.s32.totalorder %s151, %s152
      %p163 = scmp.eq.s32.totalorder %s27, 0
      %p164 = por %p162, %p163
      %p165 = scmp.ne.s32.totalorder %s151, %s152
      %p166 = scmp.eq.s32.totalorder %s28, 3
      %p167 = por %p165, %p166
      %p169 = scmp.ne.s32.totalorder %s152, %s168
      %p170 = scmp.eq.s32.totalorder %s28, 0
      %p171 = por %p169, %p170
      %p172 = scmp.le.s32.totalorder 1, %s22
      %p173 = scmp.lt.s32.totalorder %s22, 5
      %p174 = pnand %p172, %p173
      %p175 = pneg %p174
      // Predicated region
      $region9: #{tpu_custom_call.1} parent=5 // pred_check
        _
      $region10: #{tpu_custom_call.1} parent=5 // pred_check_branch
        %177 = sbr.rel (%p174) target = $region12
      $region11: #{tpu_custom_call.1} parent=5 // pred_region
        %s178 = ssub.s32 %s22, 1
      $region12: #{tpu_custom_call.1} parent=5 // pred_fallthru
        _
      %p179 = scmp.lt.s32.totalorder %s22, 4
      // Predicated region
      $region13: #{tpu_custom_call.1} parent=5 // pred_check
        %p180 = pneg %p179
      $region14: #{tpu_custom_call.1} parent=5 // pred_check_branch
        %182 = sbr.rel (%p180) target = $region16
      $region15: #{tpu_custom_call.1} parent=5 // pred_region
        // Predicated region
        $region17: #{tpu_custom_call.1} parent=15 // pred_check
          %p183 = pneg %p54
        $region18: #{tpu_custom_call.1} parent=15 // pred_check_branch
          %185 = sbr.rel (%p183) target = $region20
        $region19: #{tpu_custom_call.1} parent=15 // pred_region
          %s186 = sand.u32 %s44, 1
          %s187 = scalar_lea.sflag [#allocation4], %s186
          %s188 = sand.u32 %s44, 1
          %s189 = smul.addr %s188, 128
          %s190 = scalar_lea.vmem [#allocation3], %s189
          %s191 = smul.u32 8, %s29
          %s193 = ssub.s32 2048, 2048
          %194 = vsyncadd %s187, %s193
          %s195 = smul.addr %s191, 2
          %s196 = smul.addr %s195, 128
          %s197 = scalar_lea.hbm %s0, %s196
          %s198 = sshll.u32 %s190, 4
          %s199 = int_to_ptr.vmem [resolvable:$true] %s198
          %204 = dma.hbm_to_vmem [thread:$0]  %s197, 2048, %s199, %s187, 256, 256, 16
        $region20: #{tpu_custom_call.1} parent=15 // pred_fallthru
          _
        // Predicated region
        $region21: #{tpu_custom_call.1} parent=15 // pred_check
          %p205 = pneg %p80
        $region22: #{tpu_custom_call.1} parent=15 // pred_check_branch
          %207 = sbr.rel (%p205) target = $region24
        $region23: #{tpu_custom_call.1} parent=15 // pred_region
          %s208 = sand.u32 %s22, 1
          %s209 = scalar_lea.sflag [#allocation7], %s208
          %s210 = sand.u32 %s70, 1
          %s211 = smul.addr %s210, 512
          %s212 = scalar_lea.vmem [#allocation6], %s211
          %s213 = smul.u32 2, %s30
          %s215 = ssub.s32 8192, 8192
          %216 = vsyncadd %s209, %s215
          %s217 = smul.addr %s213, 128
          %s218 = scalar_lea.hbm %s1, %s217
          %s219 = sshll.u32 %s212, 4
          %s220 = int_to_ptr.vmem [resolvable:$true] %s219
          %225 = dma.hbm_to_vmem [thread:$0]  %s218, 8192, %s220, %s209, 512, 256, 16
        $region24: #{tpu_custom_call.1} parent=15 // pred_fallthru
          _
        // Predicated region
        $region25: #{tpu_custom_call.1} parent=15 // pred_check
          %p226 = pneg %p106
        $region26: #{tpu_custom_call.1} parent=15 // pred_check_branch
          %228 = sbr.rel (%p226) target = $region28
        $region27: #{tpu_custom_call.1} parent=15 // pred_region
          %s229 = sand.u32 %s22, 1
          %s230 = scalar_lea.sflag [#allocation7], %s229
          %s231 = sand.u32 %s96, 1
          %s232 = smul.addr %s231, 512
          %s233 = scalar_lea.vmem [#allocation8], %s232
          %s234 = smul.u32 2, %s30
          %s236 = ssub.s32 8192, 8192
          %237 = vsyncadd %s230, %s236
          %s238 = smul.addr %s234, 128
          %s239 = scalar_lea.hbm %s2, %s238
          %s240 = sshll.u32 %s233, 4
          %s241 = int_to_ptr.vmem [resolvable:$true] %s240
          %246 = dma.hbm_to_vmem [thread:$0]  %s239, 8192, %s241, %s230, 512, 256, 16
        $region28: #{tpu_custom_call.1} parent=15 // pred_fallthru
          _
        // Predicated region
        $region29: #{tpu_custom_call.1} parent=15 // pred_check
          %p247 = pneg %p132
        $region30: #{tpu_custom_call.1} parent=15 // pred_check_branch
          %249 = sbr.rel (%p247) target = $region32
        $region31: #{tpu_custom_call.1} parent=15 // pred_region
          %s250 = sand.u32 %s122, 1
          %s251 = scalar_lea.sflag [#allocation10], %s250
          %s252 = sand.u32 %s122, 1
          %s253 = smul.addr %s252, 512
          %s254 = scalar_lea.vmem [#allocation9], %s253
          %s255 = smul.u32 32, %s30
          %s257 = ssub.s32 8192, 8192
          %258 = vsyncadd %s251, %s257
          %s259 = smul.addr %s255, 2
          %s260 = smul.addr %s259, 128
          %s261 = scalar_lea.hbm %s3, %s260
          %s262 = sshll.u32 %s254, 4
          %s263 = int_to_ptr.vmem [resolvable:$true] %s262
          %268 = dma.hbm_to_vmem [thread:$0]  %s261, 8192, %s263, %s251, 256, 256, 16
        $region32: #{tpu_custom_call.1} parent=15 // pred_fallthru
          _
      $region16: #{tpu_custom_call.1} parent=5 // pred_fallthru
        _
      %p269 = scmp.le.s32.totalorder 1, %s22
      %p270 = scmp.lt.s32.totalorder %s22, 5
      %p271 = pnand %p269, %p270
      %p272 = pneg %p271
      // Predicated region
      $region33: #{tpu_custom_call.1} parent=5 // pred_check
        _
      $region34: #{tpu_custom_call.1} parent=5 // pred_check_branch
        %274 = sbr.rel (%p271) target = $region36
      $region35: #{tpu_custom_call.1} parent=5 // pred_region
        %s275 = ssub.s32 %s22, 1
        %s276 = sand.u32 %s47, 1
        %s277 = scalar_lea.sflag [#allocation4], %s276
        %s278 = sand.u32 %s47, 1
        %s279 = smul.addr %s278, 128
        %s280 = scalar_lea.vmem [#allocation3], %s279
        // Predicated region
        $region37: #{tpu_custom_call.1} parent=35 // pred_check
          %p281 = pneg %p60
        $region38: #{tpu_custom_call.1} parent=35 // pred_check_branch
          %283 = sbr.rel (%p281) target = $region40
        $region39: #{tpu_custom_call.1} parent=35 // pred_region
          %284 = dma.done %s277, 2048
        $region40: #{tpu_custom_call.1} parent=35 // pred_fallthru
          _
        %s285 = sand.u32 %s27, 1
        %s286 = scalar_lea.sflag [#allocation7], %s285
        %s287 = sand.u32 %s73, 1
        %s288 = smul.addr %s287, 512
        %s289 = scalar_lea.vmem [#allocation6], %s288
        // Predicated region
        $region41: #{tpu_custom_call.1} parent=35 // pred_check
          %p290 = pneg %p86
        $region42: #{tpu_custom_call.1} parent=35 // pred_check_branch
          %292 = sbr.rel (%p290) target = $region44
        $region43: #{tpu_custom_call.1} parent=35 // pred_region
          %293 = dma.done %s286, 8192
        $region44: #{tpu_custom_call.1} parent=35 // pred_fallthru
          _
        %s294 = sand.u32 %s27, 1
        %s295 = scalar_lea.sflag [#allocation7], %s294
        %s296 = sand.u32 %s99, 1
        %s297 = smul.addr %s296, 512
        %s298 = scalar_lea.vmem [#allocation8], %s297
        // Predicated region
        $region45: #{tpu_custom_call.1} parent=35 // pred_check
          %p299 = pneg %p112
        $region46: #{tpu_custom_call.1} parent=35 // pred_check_branch
          %301 = sbr.rel (%p299) target = $region48
        $region47: #{tpu_custom_call.1} parent=35 // pred_region
          %302 = dma.done %s295, 8192
        $region48: #{tpu_custom_call.1} parent=35 // pred_fallthru
          _
        %s303 = sand.u32 %s125, 1
        %s304 = scalar_lea.sflag [#allocation10], %s303
        %s305 = sand.u32 %s125, 1
        %s306 = smul.addr %s305, 512
        %s307 = scalar_lea.vmem [#allocation9], %s306
        // Predicated region
        $region49: #{tpu_custom_call.1} parent=35 // pred_check
          %p308 = pneg %p138
        $region50: #{tpu_custom_call.1} parent=35 // pred_check_branch
          %310 = sbr.rel (%p308) target = $region52
        $region51: #{tpu_custom_call.1} parent=35 // pred_region
          %311 = dma.done %s304, 8192
        $region52: #{tpu_custom_call.1} parent=35 // pred_fallthru
          _
        %s312 = sand.u32 %s47, 1
        %s313 = scalar_lea.sflag [#allocation4], %s312
        %s314 = sand.u32 %s47, 1
        %s315 = smul.addr %s314, 128
        %s316 = scalar_lea.vmem [#allocation3], %s315
        %p317 = pneg %p60
        %p318 = pneg %p57
        %s319 = sand.u32 %s27, 1
        %s320 = scalar_lea.sflag [#allocation7], %s319
        %s321 = sand.u32 %s73, 1
        %s322 = smul.addr %s321, 512
        %s323 = scalar_lea.vmem [#allocation6], %s322
        %p324 = pneg %p86
        %p325 = pneg %p83
        %s326 = sand.u32 %s27, 1
        %s327 = scalar_lea.sflag [#allocation7], %s326
        %s328 = sand.u32 %s99, 1
        %s329 = smul.addr %s328, 512
        %s330 = scalar_lea.vmem [#allocation8], %s329
        %p331 = pneg %p112
        %p332 = pneg %p109
        %s333 = sand.u32 %s125, 1
        %s334 = scalar_lea.sflag [#allocation10], %s333
        %s335 = sand.u32 %s125, 1
        %s336 = smul.addr %s335, 512
        %s337 = scalar_lea.vmem [#allocation9], %s336
        %p338 = pneg %p138
        %p339 = pneg %p135
        %p340 = pneg %p164
        %p341 = pneg %p161
        %s342 = sand.u32 %s151, 1
        %s343 = scalar_lea.sflag [#allocation5], %s342
        %s344 = sand.u32 %s151, 1
        %s345 = smul.addr %s344, 128
        %s346 = scalar_lea.vmem [#allocation11], %s345
        %s347 = smul.u32 8, %s31
        %s348 = smul.u32 2, %s32
        %s349 = smul.u32 2, %s32
        %s350 = smul.u32 32, %s32
        %s351 = smul.u32 8, %s31
        %p352 = scmp.eq.s32.totalorder %s32, 0
        // Predicated region
        $region53: #{tpu_custom_call.1} parent=35 // pred_check
          %p353 = pneg %p352
        $region54: #{tpu_custom_call.1} parent=35 // pred_check_branch
          %355 = sbr.rel (%p353) target = $region56
        $region55: #{tpu_custom_call.1} parent=35 // pred_region
          %356 = vst [vmem:[#allocation2] sm:$0xff] 0.0
          %357 = vst [vmem:[#allocation2 + $0x8] sm:$0xff] 0.0
          %358 = vst [vmem:[#allocation2 + $0x10] sm:$0xff] 0.0
          %359 = vst [vmem:[#allocation2 + $0x18] sm:$0xff] 0.0
          %360 = vst [vmem:[#allocation2 + $0x20] sm:$0xff] 0.0
          %361 = vst [vmem:[#allocation2 + $0x28] sm:$0xff] 0.0
          %362 = vst [vmem:[#allocation2 + $0x30] sm:$0xff] 0.0
          %363 = vst [vmem:[#allocation2 + $0x38] sm:$0xff] 0.0
          %364 = vst [vmem:[#allocation2 + $0x40] sm:$0xff] 0.0
          %365 = vst [vmem:[#allocation2 + $0x48] sm:$0xff] 0.0
          %366 = vst [vmem:[#allocation2 + $0x50] sm:$0xff] 0.0
          %367 = vst [vmem:[#allocation2 + $0x58] sm:$0xff] 0.0
          %368 = vst [vmem:[#allocation2 + $0x60] sm:$0xff] 0.0
          %369 = vst [vmem:[#allocation2 + $0x68] sm:$0xff] 0.0
          %370 = vst [vmem:[#allocation2 + $0x70] sm:$0xff] 0.0
          %371 = vst [vmem:[#allocation2 + $0x78] sm:$0xff] 0.0
        $region56: #{tpu_custom_call.1} parent=35 // pred_fallthru
          _
        %v372 = vld [vmem:[%s280] sm:$0xff]
        %v373 = vld [vmem:[%s280 + $0x8] sm:$0xff]
        %v374 = vld [vmem:[%s280 + $0x10] sm:$0xff]
        %v375 = vld [vmem:[%s280 + $0x18] sm:$0xff]
        %v376 = vld [vmem:[%s280 + $0x20] sm:$0xff]
        %v377 = vld [vmem:[%s280 + $0x28] sm:$0xff]
        %v378 = vld [vmem:[%s280 + $0x30] sm:$0xff]
        %v379 = vld [vmem:[%s280 + $0x38] sm:$0xff]
        %v380 = vld [vmem:[%s280 + $0x40] sm:$0xff]
        %v381 = vld [vmem:[%s280 + $0x48] sm:$0xff]
        %v382 = vld [vmem:[%s280 + $0x50] sm:$0xff]
        %v383 = vld [vmem:[%s280 + $0x58] sm:$0xff]
        %v384 = vld [vmem:[%s280 + $0x60] sm:$0xff]
        %v385 = vld [vmem:[%s280 + $0x68] sm:$0xff]
        %v386 = vld [vmem:[%s280 + $0x70] sm:$0xff]
        %v387 = vld [vmem:[%s280 + $0x78] sm:$0xff]
        %v388 = vld [vmem:[%s289] sm:$0xff]
        %v389 = vld [vmem:[%s289 + $0x8] sm:$0xff]
        %v390 = vld [vmem:[%s289 + $0x10] sm:$0xff]
        %v391 = vld [vmem:[%s289 + $0x18] sm:$0xff]
        %v392 = vld [vmem:[%s289 + $0x20] sm:$0xff]
        %v393 = vld [vmem:[%s289 + $0x28] sm:$0xff]
        %v394 = vld [vmem:[%s289 + $0x30] sm:$0xff]
        %v395 = vld [vmem:[%s289 + $0x38] sm:$0xff]
        %v396 = vld [vmem:[%s289 + $0x40] sm:$0xff]
        %v397 = vld [vmem:[%s289 + $0x48] sm:$0xff]
        %v398 = vld [vmem:[%s289 + $0x50] sm:$0xff]
        %v399 = vld [vmem:[%s289 + $0x58] sm:$0xff]
        %v400 = vld [vmem:[%s289 + $0x60] sm:$0xff]
        %v401 = vld [vmem:[%s289 + $0x68] sm:$0xff]
        %v402 = vld [vmem:[%s289 + $0x70] sm:$0xff]
        %v403 = vld [vmem:[%s289 + $0x78] sm:$0xff]
        %v404 = vld [vmem:[%s289 + $0x80] sm:$0xff]
        %v405 = vld [vmem:[%s289 + $0x88] sm:$0xff]
        %v406 = vld [vmem:[%s289 + $0x90] sm:$0xff]
        %v407 = vld [vmem:[%s289 + $0x98] sm:$0xff]
        %v408 = vld [vmem:[%s289 + $0xa0] sm:$0xff]
        %v409 = vld [vmem:[%s289 + $0xa8] sm:$0xff]
        %v410 = vld [vmem:[%s289 + $0xb0] sm:$0xff]
        %v411 = vld [vmem:[%s289 + $0xb8] sm:$0xff]
        %v412 = vld [vmem:[%s289 + $0xc0] sm:$0xff]
        %v413 = vld [vmem:[%s289 + $0xc8] sm:$0xff]
        %v414 = vld [vmem:[%s289 + $0xd0] sm:$0xff]
        %v415 = vld [vmem:[%s289 + $0xd8] sm:$0xff]
        %v416 = vld [vmem:[%s289 + $0xe0] sm:$0xff]
        %v417 = vld [vmem:[%s289 + $0xe8] sm:$0xff]
        %v418 = vld [vmem:[%s289 + $0xf0] sm:$0xff]
        %v419 = vld [vmem:[%s289 + $0xf8] sm:$0xff]
        %v420 = vld [vmem:[%s289 + $0x100] sm:$0xff]
        %v421 = vld [vmem:[%s289 + $0x108] sm:$0xff]
        %v422 = vld [vmem:[%s289 + $0x110] sm:$0xff]
        %v423 = vld [vmem:[%s289 + $0x118] sm:$0xff]
        %v424 = vld [vmem:[%s289 + $0x120] sm:$0xff]
        %v425 = vld [vmem:[%s289 + $0x128] sm:$0xff]
        %v426 = vld [vmem:[%s289 + $0x130] sm:$0xff]
        %v427 = vld [vmem:[%s289 + $0x138] sm:$0xff]
        %v428 = vld [vmem:[%s289 + $0x140] sm:$0xff]
        %v429 = vld [vmem:[%s289 + $0x148] sm:$0xff]
        %v430 = vld [vmem:[%s289 + $0x150] sm:$0xff]
        %v431 = vld [vmem:[%s289 + $0x158] sm:$0xff]
        %v432 = vld [vmem:[%s289 + $0x160] sm:$0xff]
        %v433 = vld [vmem:[%s289 + $0x168] sm:$0xff]
        %v434 = vld [vmem:[%s289 + $0x170] sm:$0xff]
        %v435 = vld [vmem:[%s289 + $0x178] sm:$0xff]
        %v436 = vld [vmem:[%s289 + $0x180] sm:$0xff]
        %v437 = vld [vmem:[%s289 + $0x188] sm:$0xff]
        %v438 = vld [vmem:[%s289 + $0x190] sm:$0xff]
        %v439 = vld [vmem:[%s289 + $0x198] sm:$0xff]
        %v440 = vld [vmem:[%s289 + $0x1a0] sm:$0xff]
        %v441 = vld [vmem:[%s289 + $0x1a8] sm:$0xff]
        %v442 = vld [vmem:[%s289 + $0x1b0] sm:$0xff]
        %v443 = vld [vmem:[%s289 + $0x1b8] sm:$0xff]
        %v444 = vld [vmem:[%s289 + $0x1c0] sm:$0xff]
        %v445 = vld [vmem:[%s289 + $0x1c8] sm:$0xff]
        %v446 = vld [vmem:[%s289 + $0x1d0] sm:$0xff]
        %v447 = vld [vmem:[%s289 + $0x1d8] sm:$0xff]
        %v448 = vld [vmem:[%s289 + $0x1e0] sm:$0xff]
        %v449 = vld [vmem:[%s289 + $0x1e8] sm:$0xff]
        %v450 = vld [vmem:[%s289 + $0x1f0] sm:$0xff]
        %v451 = vld [vmem:[%s289 + $0x1f8] sm:$0xff]
        %v452 = vand.u32 %v389, 4294901760
        %453 = vmatprep.subr.mxu0 %v452
        %v454 = vand.u32 %v388, 4294901760
        %455 = vmatpush1.msra.mxu0 %v454
        %v456 = vand.u32 %v391, 4294901760
        %457 = vmatprep.subr.mxu0 %v456
        %v458 = vand.u32 %v390, 4294901760
        %459 = vmatpush1.msra.mxu0 %v458
        %v460 = vand.u32 %v393, 4294901760
        %461 = vmatprep.subr.mxu0 %v460
        %v462 = vand.u32 %v392, 4294901760
        %463 = vmatpush1.msra.mxu0 %v462
        %v464 = vand.u32 %v395, 4294901760
        %465 = vmatprep.subr.mxu0 %v464
        %v466 = vand.u32 %v394, 4294901760
        %467 = vmatpush1.msra.mxu0 %v466
        %v468 = vand.u32 %v397, 4294901760
        %469 = vmatprep.subr.mxu0 %v468
        %v470 = vand.u32 %v396, 4294901760
        %471 = vmatpush1.msra.mxu0 %v470
        %v472 = vand.u32 %v399, 4294901760
        %473 = vmatprep.subr.mxu0 %v472
        %v474 = vand.u32 %v398, 4294901760
        %475 = vmatpush1.msra.mxu0 %v474
        %v476 = vand.u32 %v401, 4294901760
        %477 = vmatprep.subr.mxu0 %v476
        %v478 = vand.u32 %v400, 4294901760
        %479 = vmatpush1.msra.mxu0 %v478
        %v480 = vand.u32 %v403, 4294901760
        %481 = vmatprep.subr.mxu0 %v480
        %v482 = vand.u32 %v402, 4294901760
        %483 = vmatpush1.msra.mxu0 %v482
        %v484 = vand.u32 %v405, 4294901760
        %485 = vmatprep.subr.mxu0 %v484
        %v486 = vand.u32 %v404, 4294901760
        %487 = vmatpush1.msra.mxu0 %v486
        %v488 = vand.u32 %v407, 4294901760
        %489 = vmatprep.subr.mxu0 %v488
        %v490 = vand.u32 %v406, 4294901760
        %491 = vmatpush1.msra.mxu0 %v490
        %v492 = vand.u32 %v409, 4294901760
        %493 = vmatprep.subr.mxu0 %v492
        %v494 = vand.u32 %v408, 4294901760
        %495 = vmatpush1.msra.mxu0 %v494
        %v496 = vand.u32 %v411, 4294901760
        %497 = vmatprep.subr.mxu0 %v496
        %v498 = vand.u32 %v410, 4294901760
        %499 = vmatpush1.msra.mxu0 %v498
        %v500 = vand.u32 %v413, 4294901760
        %501 = vmatprep.subr.mxu0 %v500
        %v502 = vand.u32 %v412, 4294901760
        %503 = vmatpush1.msra.mxu0 %v502
        %v504 = vand.u32 %v415, 4294901760
        %505 = vmatprep.subr.mxu0 %v504
        %v506 = vand.u32 %v414, 4294901760
        %507 = vmatpush1.msra.mxu0 %v506
        %v508 = vand.u32 %v417, 4294901760
        %509 = vmatprep.subr.mxu0 %v508
        %v510 = vand.u32 %v416, 4294901760
        %511 = vmatpush1.msra.mxu0 %v510
        %v512 = vand.u32 %v419, 4294901760
        %513 = vmatprep.subr.mxu0 %v512
        %v514 = vand.u32 %v418, 4294901760
        %515 = vmatpush1.msra.mxu0 %v514
        %v516 = vand.u32 %v421, 4294901760
        %517 = vmatprep.subr.mxu0 %v516
        %v518 = vand.u32 %v420, 4294901760
        %519 = vmatpush1.msra.mxu0 %v518
        %v520 = vand.u32 %v423, 4294901760
        %521 = vmatprep.subr.mxu0 %v520
        %v522 = vand.u32 %v422, 4294901760
        %523 = vmatpush1.msra.mxu0 %v522
        %v524 = vand.u32 %v425, 4294901760
        %525 = vmatprep.subr.mxu0 %v524
        %v526 = vand.u32 %v424, 4294901760
        %527 = vmatpush1.msra.mxu0 %v526
        %v528 = vand.u32 %v427, 4294901760
        %529 = vmatprep.subr.mxu0 %v528
        %v530 = vand.u32 %v426, 4294901760
        %531 = vmatpush1.msra.mxu0 %v530
        %v532 = vand.u32 %v429, 4294901760
        %533 = vmatprep.subr.mxu0 %v532
        %v534 = vand.u32 %v428, 4294901760
        %535 = vmatpush1.msra.mxu0 %v534
        %v536 = vand.u32 %v431, 4294901760
        %537 = vmatprep.subr.mxu0 %v536
        %v538 = vand.u32 %v430, 4294901760
        %539 = vmatpush1.msra.mxu0 %v538
        %v540 = vand.u32 %v433, 4294901760
        %541 = vmatprep.subr.mxu0 %v540
        %v542 = vand.u32 %v432, 4294901760
        %543 = vmatpush1.msra.mxu0 %v542
        %v544 = vand.u32 %v435, 4294901760
        %545 = vmatprep.subr.mxu0 %v544
        %v546 = vand.u32 %v434, 4294901760
        %547 = vmatpush1.msra.mxu0 %v546
        %v548 = vand.u32 %v437, 4294901760
        %549 = vmatprep.subr.mxu0 %v548
        %v550 = vand.u32 %v436, 4294901760
        %551 = vmatpush1.msra.mxu0 %v550
        %v552 = vand.u32 %v439, 4294901760
        %553 = vmatprep.subr.mxu0 %v552
        %v554 = vand.u32 %v438, 4294901760
        %555 = vmatpush1.msra.mxu0 %v554
        %v556 = vand.u32 %v441, 4294901760
        %557 = vmatprep.subr.mxu0 %v556
        %v558 = vand.u32 %v440, 4294901760
        %559 = vmatpush1.msra.mxu0 %v558
        %v560 = vand.u32 %v443, 4294901760
        %561 = vmatprep.subr.mxu0 %v560
        %v562 = vand.u32 %v442, 4294901760
        %563 = vmatpush1.msra.mxu0 %v562
        %v564 = vand.u32 %v445, 4294901760
        %565 = vmatprep.subr.mxu0 %v564
        %v566 = vand.u32 %v444, 4294901760
        %567 = vmatpush1.msra.mxu0 %v566
        %v568 = vand.u32 %v447, 4294901760
        %569 = vmatprep.subr.mxu0 %v568
        %v570 = vand.u32 %v446, 4294901760
        %571 = vmatpush1.msra.mxu0 %v570
        %v572 = vand.u32 %v449, 4294901760
        %573 = vmatprep.subr.mxu0 %v572
        %v574 = vand.u32 %v448, 4294901760
        %575 = vmatpush1.msra.mxu0 %v574
        %v576 = vand.u32 %v451, 4294901760
        %577 = vmatprep.subr.mxu0 %v576
        %v578 = vand.u32 %v450, 4294901760
        %579 = vmatpush1.msra.mxu0 %v578
        %v580 = vand.u32 %v373, 4294901760
        %v581 = vsub.f32 %v373, %v580
        %v582 = vand.u32 %v581, 4294901760
        %v583 = vsub.f32 %v581, %v582
        %v584 = vand.u32 %v583, 4294901760
        %585 = vmatprep.mubr.f32.mxu0 %v584
        %v586 = vand.u32 %v372, 4294901760
        %v587 = vsub.f32 %v372, %v586
        %v588 = vand.u32 %v587, 4294901760
        %v589 = vsub.f32 %v587, %v588
        %v590 = vand.u32 %v589, 4294901760
        %591 = vmatmul.mubr.f32.gmra.mrb[0].mxu0 %v590
        %v592 = vpop.f32.mrb[0].mxu0
        %v593 = vadd.f32 0.0, %v592
        %v594 = vpop.f32.mrb[0].mxu0
        %v595 = vadd.f32 0.0, %v594
        %v596 = vand.u32 %v375, 4294901760
        %v597 = vsub.f32 %v375, %v596
        %v598 = vand.u32 %v597, 4294901760
        %v599 = vsub.f32 %v597, %v598
        %v600 = vand.u32 %v599, 4294901760
        %601 = vmatprep.mubr.f32.mxu0 %v600
        %v602 = vand.u32 %v374, 4294901760
        %v603 = vsub.f32 %v374, %v602
        %v604 = vand.u32 %v603, 4294901760
        %v605 = vsub.f32 %v603, %v604
        %v606 = vand.u32 %v605, 4294901760
        %607 = vmatmul.mubr.f32.gmra.mrb[0].mxu0 %v606
        %v608 = vpop.f32.mrb[0].mxu0
        %v609 = vadd.f32 0.0, %v608
        %v610 = vpop.f32.mrb[0].mxu0
        %v611 = vadd.f32 0.0, %v610
        %v612 = vand.u32 %v377, 4294901760
        %v613 = vsub.f32 %v377, %v612
        %v614 = vand.u32 %v613, 4294901760
        %v615 = vsub.f32 %v613, %v614
        %v616 = vand.u32 %v615, 4294901760
        %617 = vmatprep.mubr.f32.mxu0 %v616
        %v618 = vand.u32 %v376, 4294901760
        %v619 = vsub.f32 %v376, %v618
        %v620 = vand.u32 %v619, 4294901760
        %v621 = vsub.f32 %v619, %v620
        %v622 = vand.u32 %v621, 4294901760
        %623 = vmatmul.mubr.f32.gmra.mrb[0].mxu0 %v622
        %v624 = vpop.f32.mrb[0].mxu0
        %v625 = vadd.f32 0.0, %v624
        %v626 = vpop.f32.mrb[0].mxu0
        %v627 = vadd.f32 0.0, %v626
        %v628 = vand.u32 %v379, 4294901760
        %v629 = vsub.f32 %v379, %v628
        %v630 = vand.u32 %v629, 4294901760
        %v631 = vsub.f32 %v629, %v630
        %v632 = vand.u32 %v631, 4294901760
        %633 = vmatprep.mubr.f32.mxu0 %v632
        %v634 = vand.u32 %v378, 4294901760
        %v635 = vsub.f32 %v378, %v634
        %v636 = vand.u32 %v635, 4294901760
        %v637 = vsub.f32 %v635, %v636
        %v638 = vand.u32 %v637, 4294901760
        %639 = vmatmul.mubr.f32.gmra.mrb[0].mxu0 %v638
        %v640 = vpop.f32.mrb[0].mxu0
        %v641 = vadd.f32 0.0, %v640
        %v642 = vpop.f32.mrb[0].mxu0
        %v643 = vadd.f32 0.0, %v642
        %v644 = vand.u32 %v381, 4294901760
        %v645 = vsub.f32 %v381, %v644
        %v646 = vand.u32 %v645, 4294901760
        %v647 = vsub.f32 %v645, %v646
        %v648 = vand.u32 %v647, 4294901760
        %649 = vmatprep.mubr.f32.mxu0 %v648
        %v650 = vand.u32 %v380, 4294901760
        %v651 = vsub.f32 %v380, %v650
        %v652 = vand.u32 %v651, 4294901760
        %v653 = vsub.f32 %v651, %v652
        %v654 = vand.u32 %v653, 4294901760
        %655 = vmatmul.mubr.f32.gmra.mrb[0].mxu0 %v654
        %v656 = vpop.f32.mrb[0].mxu0
        %v657 = vadd.f32 0.0, %v656
        %v658 = vpop.f32.mrb[0].mxu0
        %v659 = vadd.f32 0.0, %v658
        %v660 = vand.u32 %v383, 4294901760
        %v661 = vsub.f32 %v383, %v660
        %v662 = vand.u32 %v661, 4294901760
        %v663 = vsub.f32 %v661, %v662
        %v664 = vand.u32 %v663, 4294901760
        %665 = vmatprep.mubr.f32.mxu0 %v664
        %v666 = vand.u32 %v382, 4294901760
        %v667 = vsub.f32 %v382, %v666
        %v668 = vand.u32 %v667, 4294901760
        %v669 = vsub.f32 %v667, %v668
        %v670 = vand.u32 %v669, 4294901760
        %671 = vmatmul.mubr.f32.gmra.mrb[0].mxu0 %v670
        %v672 = vpop.f32.mrb[0].mxu0
        %v673 = vadd.f32 0.0, %v672
        %v674 = vpop.f32.mrb[0].mxu0
        %v675 = vadd.f32 0.0, %v674
        %v676 = vand.u32 %v385, 4294901760
        %v677 = vsub.f32 %v385, %v676
        %v678 = vand.u32 %v677, 4294901760
        %v679 = vsub.f32 %v677, %v678
        %v680 = vand.u32 %v679, 4294901760
        %681 = vmatprep.mubr.f32.mxu0 %v680
        %v682 = vand.u32 %v384, 4294901760
        %v683 = vsub.f32 %v384, %v682
        %v684 = vand.u32 %v683, 4294901760
        %v685 = vsub.f32 %v683, %v684
        %v686 = vand.u32 %v685, 4294901760
        %687 = vmatmul.mubr.f32.gmra.mrb[0].mxu0 %v686
        %v688 = vpop.f32.mrb[0].mxu0
        %v689 = vadd.f32 0.0, %v688
        %v690 = vpop.f32.mrb[0].mxu0
        %v691 = vadd.f32 0.0, %v690
        %v692 = vand.u32 %v387, 4294901760
        %v693 = vsub.f32 %v387, %v692
        %v694 = vand.u32 %v693, 4294901760
        %v695 = vsub.f32 %v693, %v694
        %v696 = vand.u32 %v695, 4294901760
        %697 = vmatprep.mubr.f32.mxu0 %v696
        %v698 = vand.u32 %v386, 4294901760
        %v699 = vsub.f32 %v386, %v698
        %v700 = vand.u32 %v699, 4294901760
        %v701 = vsub.f32 %v699, %v700
        %v702 = vand.u32 %v701, 4294901760
        %703 = vmatmul.mubr.f32.gmra.mrb[0].mxu0 %v702
        %v704 = vpop.f32.mrb[0].mxu0
        %v705 = vadd.f32 0.0, %v704
        %v706 = vpop.f32.mrb[0].mxu0
        %v707 = vadd.f32 0.0, %v706
        %708 = vdwg.mxu0
        %v709 = vand.u32 %v389, 4294901760
        %v710 = vsub.f32 %v389, %v709
        %v711 = vand.u32 %v710, 4294901760
        %v712 = vsub.f32 %v710, %v711
        %v713 = vand.u32 %v712, 4294901760
        %714 = vmatprep.subr.mxu0 %v713
        %v715 = vand.u32 %v388, 4294901760
        %v716 = vsub.f32 %v388, %v715
        %v717 = vand.u32 %v716, 4294901760
        %v718 = vsub.f32 %v716, %v717
        %v719 = vand.u32 %v718, 4294901760
        %720 = vmatpush1.msra.mxu0 %v719
        %v721 = vand.u32 %v391, 4294901760
        %v722 = vsub.f32 %v391, %v721
        %v723 = vand.u32 %v722, 4294901760
        %v724 = vsub.f32 %v722, %v723
        %v725 = vand.u32 %v724, 4294901760
        %726 = vmatprep.subr.mxu0 %v725
        %v727 = vand.u32 %v390, 4294901760
        %v728 = vsub.f32 %v390, %v727
        %v729 = vand.u32 %v728, 4294901760
        %v730 = vsub.f32 %v728, %v729
        %v731 = vand.u32 %v730, 4294901760
        %732 = vmatpush1.msra.mxu0 %v731
        %v733 = vand.u32 %v393, 4294901760
        %v734 = vsub.f32 %v393, %v733
        %v735 = vand.u32 %v734, 4294901760
        %v736 = vsub.f32 %v734, %v735
        %v737 = vand.u32 %v736, 4294901760
        %738 = vmatprep.subr.mxu0 %v737
        %v739 = vand.u32 %v392, 4294901760
        %v740 = vsub.f32 %v392, %v739
        %v741 = vand.u32 %v740, 4294901760
        %v742 = vsub.f32 %v740, %v741
        %v743 = vand.u32 %v742, 4294901760
        %744 = vmatpush1.msra.mxu0 %v743
        %v745 = vand.u32 %v395, 4294901760
        %v746 = vsub.f32 %v395, %v745
        %v747 = vand.u32 %v746, 4294901760
        %v748 = vsub.f32 %v746, %v747
        %v749 = vand.u32 %v748, 4294901760
        %750 = vmatprep.subr.mxu0 %v749
        %v751 = vand.u32 %v394, 4294901760
        %v752 = vsub.f32 %v394, %v751
        %v753 = vand.u32 %v752, 4294901760
        %v754 = vsub.f32 %v752, %v753
        %v755 = vand.u32 %v754, 4294901760
        %756 = vmatpush1.msra.mxu0 %v755
        %v757 = vand.u32 %v397, 4294901760
        %v758 = vsub.f32 %v397, %v757
        %v759 = vand.u32 %v758, 4294901760
        %v760 = vsub.f32 %v758, %v759
        %v761 = vand.u32 %v760, 4294901760
        %762 = vmatprep.subr.mxu0 %v761
        %v763 = vand.u32 %v396, 4294901760
        %v764 = vsub.f32 %v396, %v763
        %v765 = vand.u32 %v764, 4294901760
        %v766 = vsub.f32 %v764, %v765
        %v767 = vand.u32 %v766, 4294901760
        %768 = vmatpush1.msra.mxu0 %v767
        %v769 = vand.u32 %v399, 4294901760
        %v770 = vsub.f32 %v399, %v769
        %v771 = vand.u32 %v770, 4294901760
        %v772 = vsub.f32 %v770, %v771
        %v773 = vand.u32 %v772, 4294901760
        %774 = vmatprep.subr.mxu0 %v773
        %v775 = vand.u32 %v398, 4294901760
        %v776 = vsub.f32 %v398, %v775
        %v777 = vand.u32 %v776, 4294901760
        %v778 = vsub.f32 %v776, %v777
        %v779 = vand.u32 %v778, 4294901760
        %780 = vmatpush1.msra.mxu0 %v779
        %v781 = vand.u32 %v401, 4294901760
        %v782 = vsub.f32 %v401, %v781
        %v783 = vand.u32 %v782, 4294901760
        %v784 = vsub.f32 %v782, %v783
        %v785 = vand.u32 %v784, 4294901760
        %786 = vmatprep.subr.mxu0 %v785
        %v787 = vand.u32 %v400, 4294901760
        %v788 = vsub.f32 %v400, %v787
        %v789 = vand.u32 %v788, 4294901760
        %v790 = vsub.f32 %v788, %v789
        %v791 = vand.u32 %v790, 4294901760
        %792 = vmatpush1.msra.mxu0 %v791
        %v793 = vand.u32 %v403, 4294901760
        %v794 = vsub.f32 %v403, %v793
        %v795 = vand.u32 %v794, 4294901760
        %v796 = vsub.f32 %v794, %v795
        %v797 = vand.u32 %v796, 4294901760
        %798 = vmatprep.subr.mxu0 %v797
        %v799 = vand.u32 %v402, 4294901760
        %v800 = vsub.f32 %v402, %v799
        %v801 = vand.u32 %v800, 4294901760
        %v802 = vsub.f32 %v800, %v801
        %v803 = vand.u32 %v802, 4294901760
        %804 = vmatpush1.msra.mxu0 %v803
        %v805 = vand.u32 %v405, 4294901760
        %v806 = vsub.f32 %v405, %v805
        %v807 = vand.u32 %v806, 4294901760
        %v808 = vsub.f32 %v806, %v807
        %v809 = vand.u32 %v808, 4294901760
        %810 = vmatprep.subr.mxu0 %v809
        %v811 = vand.u32 %v404, 4294901760
        %v812 = vsub.f32 %v404, %v811
        %v813 = vand.u32 %v812, 4294901760
        %v814 = vsub.f32 %v812, %v813
        %v815 = vand.u32 %v814, 4294901760
        %816 = vmatpush1.msra.mxu0 %v815
        %v817 = vand.u32 %v407, 4294901760
        %v818 = vsub.f32 %v407, %v817
        %v819 = vand.u32 %v818, 4294901760
        %v820 = vsub.f32 %v818, %v819
        %v821 = vand.u32 %v820, 4294901760
        %822 = vmatprep.subr.mxu0 %v821
        %v823 = vand.u32 %v406, 4294901760
        %v824 = vsub.f32 %v406, %v823
        %v825 = vand.u32 %v824, 4294901760
        %v826 = vsub.f32 %v824, %v825
        %v827 = vand.u32 %v826, 4294901760
        %828 = vmatpush1.msra.mxu0 %v827
        %v829 = vand.u32 %v409, 4294901760
        %v830 = vsub.f32 %v409, %v829
        %v831 = vand.u32 %v830, 4294901760
        %v832 = vsub.f32 %v830, %v831
        %v833 = vand.u32 %v832, 4294901760
        %834 = vmatprep.subr.mxu0 %v833
        %v835 = vand.u32 %v408, 4294901760
        %v836 = vsub.f32 %v408, %v835
        %v837 = vand.u32 %v836, 4294901760
        %v838 = vsub.f32 %v836, %v837
        %v839 = vand.u32 %v838, 4294901760
        %840 = vmatpush1.msra.mxu0 %v839
        %v841 = vand.u32 %v411, 4294901760
        %v842 = vsub.f32 %v411, %v841
        %v843 = vand.u32 %v842, 4294901760
        %v844 = vsub.f32 %v842, %v843
        %v845 = vand.u32 %v844, 4294901760
        %846 = vmatprep.subr.mxu0 %v845
        %v847 = vand.u32 %v410, 4294901760
        %v848 = vsub.f32 %v410, %v847
        %v849 = vand.u32 %v848, 4294901760
        %v850 = vsub.f32 %v848, %v849
        %v851 = vand.u32 %v850, 4294901760
        %852 = vmatpush1.msra.mxu0 %v851
        %v853 = vand.u32 %v413, 4294901760
        %v854 = vsub.f32 %v413, %v853
        %v855 = vand.u32 %v854, 4294901760
        %v856 = vsub.f32 %v854, %v855
        %v857 = vand.u32 %v856, 4294901760
        %858 = vmatprep.subr.mxu0 %v857
        %v859 = vand.u32 %v412, 4294901760
        %v860 = vsub.f32 %v412, %v859
        %v861 = vand.u32 %v860, 4294901760
        %v862 = vsub.f32 %v860, %v861
        %v863 = vand.u32 %v862, 4294901760
        %864 = vmatpush1.msra.mxu0 %v863
        %v865 = vand.u32 %v415, 4294901760
        %v866 = vsub.f32 %v415, %v865
        %v867 = vand.u32 %v866, 4294901760
        %v868 = vsub.f32 %v866, %v867
        %v869 = vand.u32 %v868, 4294901760
        %870 = vmatprep.subr.mxu0 %v869
        %v871 = vand.u32 %v414, 4294901760
        %v872 = vsub.f32 %v414, %v871
        %v873 = vand.u32 %v872, 4294901760
        %v874 = vsub.f32 %v872, %v873
        %v875 = vand.u32 %v874, 4294901760
        %876 = vmatpush1.msra.mxu0 %v875
        %v877 = vand.u32 %v417, 4294901760
        %v878 = vsub.f32 %v417, %v877
        %v879 = vand.u32 %v878, 4294901760
        %v880 = vsub.f32 %v878, %v879
        %v881 = vand.u32 %v880, 4294901760
        %882 = vmatprep.subr.mxu0 %v881
        %v883 = vand.u32 %v416, 4294901760
        %v884 = vsub.f32 %v416, %v883
        %v885 = vand.u32 %v884, 4294901760
        %v886 = vsub.f32 %v884, %v885
        %v887 = vand.u32 %v886, 4294901760
        %888 = vmatpush1.msra.mxu0 %v887
        %v889 = vand.u32 %v419, 4294901760
        %v890 = vsub.f32 %v419, %v889
        %v891 = vand.u32 %v890, 4294901760
        %v892 = vsub.f32 %v890, %v891
        %v893 = vand.u32 %v892, 4294901760
        %894 = vmatprep.subr.mxu0 %v893
        %v895 = vand.u32 %v418, 4294901760
        %v896 = vsub.f32 %v418, %v895
        %v897 = vand.u32 %v896, 4294901760
        %v898 = vsub.f32 %v896, %v897
        %v899 = vand.u32 %v898, 4294901760
        %900 = vmatpush1.msra.mxu0 %v899
        %v901 = vand.u32 %v421, 4294901760
        %v902 = vsub.f32 %v421, %v901
        %v903 = vand.u32 %v902, 4294901760
        %v904 = vsub.f32 %v902, %v903
        %v905 = vand.u32 %v904, 4294901760
        %906 = vmatprep.subr.mxu0 %v905
        %v907 = vand.u32 %v420, 4294901760
        %v908 = vsub.f32 %v420, %v907
        %v909 = vand.u32 %v908, 4294901760
        %v910 = vsub.f32 %v908, %v909
        %v911 = vand.u32 %v910, 4294901760
        %912 = vmatpush1.msra.mxu0 %v911
        %v913 = vand.u32 %v423, 4294901760
        %v914 = vsub.f32 %v423, %v913
        %v915 = vand.u32 %v914, 4294901760
        %v916 = vsub.f32 %v914, %v915
        %v917 = vand.u32 %v916, 4294901760
        %918 = vmatprep.subr.mxu0 %v917
        %v919 = vand.u32 %v422, 4294901760
        %v920 = vsub.f32 %v422, %v919
        %v921 = vand.u32 %v920, 4294901760
        %v922 = vsub.f32 %v920, %v921
        %v923 = vand.u32 %v922, 4294901760
        %924 = vmatpush1.msra.mxu0 %v923
        %v925 = vand.u32 %v425, 4294901760
        %v926 = vsub.f32 %v425, %v925
        %v927 = vand.u32 %v926, 4294901760
        %v928 = vsub.f32 %v926, %v927
        %v929 = vand.u32 %v928, 4294901760
        %930 = vmatprep.subr.mxu0 %v929
        %v931 = vand.u32 %v424, 4294901760
        %v932 = vsub.f32 %v424, %v931
        %v933 = vand.u32 %v932, 4294901760
        %v934 = vsub.f32 %v932, %v933
        %v935 = vand.u32 %v934, 4294901760
        %936 = vmatpush1.msra.mxu0 %v935
        %v937 = vand.u32 %v427, 4294901760
        %v938 = vsub.f32 %v427, %v937
        %v939 = vand.u32 %v938, 4294901760
        %v940 = vsub.f32 %v938, %v939
        %v941 = vand.u32 %v940, 4294901760
        %942 = vmatprep.subr.mxu0 %v941
        %v943 = vand.u32 %v426, 4294901760
        %v944 = vsub.f32 %v426, %v943
        %v945 = vand.u32 %v944, 4294901760
        %v946 = vsub.f32 %v944, %v945
        %v947 = vand.u32 %v946, 4294901760
        %948 = vmatpush1.msra.mxu0 %v947
        %v949 = vand.u32 %v429, 4294901760
        %v950 = vsub.f32 %v429, %v949
        %v951 = vand.u32 %v950, 4294901760
        %v952 = vsub.f32 %v950, %v951
        %v953 = vand.u32 %v952, 4294901760
        %954 = vmatprep.subr.mxu0 %v953
        %v955 = vand.u32 %v428, 4294901760
        %v956 = vsub.f32 %v428, %v955
        %v957 = vand.u32 %v956, 4294901760
        %v958 = vsub.f32 %v956, %v957
        %v959 = vand.u32 %v958, 4294901760
        %960 = vmatpush1.msra.mxu0 %v959
        %v961 = vand.u32 %v431, 4294901760
        %v962 = vsub.f32 %v431, %v961
        %v963 = vand.u32 %v962, 4294901760
        %v964 = vsub.f32 %v962, %v963
        %v965 = vand.u32 %v964, 4294901760
        %966 = vmatprep.subr.mxu0 %v965
        %v967 = vand.u32 %v430, 4294901760
        %v968 = vsub.f32 %v430, %v967
        %v969 = vand.u32 %v968, 4294901760
        %v970 = vsub.f32 %v968, %v969
        %v971 = vand.u32 %v970, 4294901760
        %972 = vmatpush1.msra.mxu0 %v971
        %v973 = vand.u32 %v433, 4294901760
        %v974 = vsub.f32 %v433, %v973
        %v975 = vand.u32 %v974, 4294901760
        %v976 = vsub.f32 %v974, %v975
        %v977 = vand.u32 %v976, 4294901760
        %978 = vmatprep.subr.mxu0 %v977
        %v979 = vand.u32 %v432, 4294901760
        %v980 = vsub.f32 %v432, %v979
        %v981 = vand.u32 %v980, 4294901760
        %v982 = vsub.f32 %v980, %v981
        %v983 = vand.u32 %v982, 4294901760
        %984 = vmatpush1.msra.mxu0 %v983
        %v985 = vand.u32 %v435, 4294901760
        %v986 = vsub.f32 %v435, %v985
        %v987 = vand.u32 %v986, 4294901760
        %v988 = vsub.f32 %v986, %v987
        %v989 = vand.u32 %v988, 4294901760
        %990 = vmatprep.subr.mxu0 %v989
        %v991 = vand.u32 %v434, 4294901760
        %v992 = vsub.f32 %v434, %v991
        %v993 = vand.u32 %v992, 4294901760
        %v994 = vsub.f32 %v992, %v993
        %v995 = vand.u32 %v994, 4294901760
        %996 = vmatpush1.msra.mxu0 %v995
        %v997 = vand.u32 %v437, 4294901760
        %v998 = vsub.f32 %v437, %v997
        %v999 = vand.u32 %v998, 4294901760
        %v1000 = vsub.f32 %v998, %v999
        %v1001 = vand.u32 %v1000, 4294901760
        %1002 = vmatprep.subr.mxu0 %v1001
        %v1003 = vand.u32 %v436, 4294901760
        %v1004 = vsub.f32 %v436, %v1003
        %v1005 = vand.u32 %v1004, 4294901760
        %v1006 = vsub.f32 %v1004, %v1005
        %v1007 = vand.u32 %v1006, 4294901760
        %1008 = vmatpush1.msra.mxu0 %v1007
        %v1009 = vand.u32 %v439, 4294901760
        %v1010 = vsub.f32 %v439, %v1009
        %v1011 = vand.u32 %v1010, 4294901760
        %v1012 = vsub.f32 %v1010, %v1011
        %v1013 = vand.u32 %v1012, 4294901760
        %1014 = vmatprep.subr.mxu0 %v1013
        %v1015 = vand.u32 %v438, 4294901760
        %v1016 = vsub.f32 %v438, %v1015
        %v1017 = vand.u32 %v1016, 4294901760
        %v1018 = vsub.f32 %v1016, %v1017
        %v1019 = vand.u32 %v1018, 4294901760
        %1020 = vmatpush1.msra.mxu0 %v1019
        %v1021 = vand.u32 %v441, 4294901760
        %v1022 = vsub.f32 %v441, %v1021
        %v1023 = vand.u32 %v1022, 4294901760
        %v1024 = vsub.f32 %v1022, %v1023
        %v1025 = vand.u32 %v1024, 4294901760
        %1026 = vmatprep.subr.mxu0 %v1025
        %v1027 = vand.u32 %v440, 4294901760
        %v1028 = vsub.f32 %v440, %v1027
        %v1029 = vand.u32 %v1028, 4294901760
        %v1030 = vsub.f32 %v1028, %v1029
        %v1031 = vand.u32 %v1030, 4294901760
        %1032 = vmatpush1.msra.mxu0 %v1031
        %v1033 = vand.u32 %v443, 4294901760
        %v1034 = vsub.f32 %v443, %v1033
        %v1035 = vand.u32 %v1034, 4294901760
        %v1036 = vsub.f32 %v1034, %v1035
        %v1037 = vand.u32 %v1036, 4294901760
        %1038 = vmatprep.subr.mxu0 %v1037
        %v1039 = vand.u32 %v442, 4294901760
        %v1040 = vsub.f32 %v442, %v1039
        %v1041 = vand.u32 %v1040, 4294901760
        %v1042 = vsub.f32 %v1040, %v1041
        %v1043 = vand.u32 %v1042, 4294901760
        %1044 = vmatpush1.msra.mxu0 %v1043
        %v1045 = vand.u32 %v445, 4294901760
        %v1046 = vsub.f32 %v445, %v1045
        %v1047 = vand.u32 %v1046, 4294901760
        %v1048 = vsub.f32 %v1046, %v1047
        %v1049 = vand.u32 %v1048, 4294901760
        %1050 = vmatprep.subr.mxu0 %v1049
        %v1051 = vand.u32 %v444, 4294901760
        %v1052 = vsub.f32 %v444, %v1051
        %v1053 = vand.u32 %v1052, 4294901760
        %v1054 = vsub.f32 %v1052, %v1053
        %v1055 = vand.u32 %v1054, 4294901760
        %1056 = vmatpush1.msra.mxu0 %v1055
        %v1057 = vand.u32 %v447, 4294901760
        %v1058 = vsub.f32 %v447, %v1057
        %v1059 = vand.u32 %v1058, 4294901760
        %v1060 = vsub.f32 %v1058, %v1059
        %v1061 = vand.u32 %v1060, 4294901760
        %1062 = vmatprep.subr.mxu0 %v1061
        %v1063 = vand.u32 %v446, 4294901760
        %v1064 = vsub.f32 %v446, %v1063
        %v1065 = vand.u32 %v1064, 4294901760
        %v1066 = vsub.f32 %v1064, %v1065
        %v1067 = vand.u32 %v1066, 4294901760
        %1068 = vmatpush1.msra.mxu0 %v1067
        %v1069 = vand.u32 %v449, 4294901760
        %v1070 = vsub.f32 %v449, %v1069
        %v1071 = vand.u32 %v1070, 4294901760
        %v1072 = vsub.f32 %v1070, %v1071
        %v1073 = vand.u32 %v1072, 4294901760
        %1074 = vmatprep.subr.mxu0 %v1073
        %v1075 = vand.u32 %v448, 4294901760
        %v1076 = vsub.f32 %v448, %v1075
        %v1077 = vand.u32 %v1076, 4294901760
        %v1078 = vsub.f32 %v1076, %v1077
        %v1079 = vand.u32 %v1078, 4294901760
        %1080 = vmatpush1.msra.mxu0 %v1079
        %v1081 = vand.u32 %v451, 4294901760
        %v1082 = vsub.f32 %v451, %v1081
        %v1083 = vand.u32 %v1082, 4294901760
        %v1084 = vsub.f32 %v1082, %v1083
        %v1085 = vand.u32 %v1084, 4294901760
        %1086 = vmatprep.subr.mxu0 %v1085
        %v1087 = vand.u32 %v450, 4294901760
        %v1088 = vsub.f32 %v450, %v1087
        %v1089 = vand.u32 %v1088, 4294901760
        %v1090 = vsub.f32 %v1088, %v1089
        %v1091 = vand.u32 %v1090, 4294901760
        %1092 = vmatpush1.msra.mxu0 %v1091
        %v1093 = vand.u32 %v373, 4294901760
        %1094 = vmatprep.mubr.f32.mxu0 %v1093
        %v1095 = vand.u32 %v372, 4294901760
        %1096 = vmatmul.mubr.f32.gmra.mrb[0].mxu0 %v1095
        %v1097 = vpop.f32.mrb[0].mxu0
        %v1098 = vadd.f32 %v593, %v1097
        %v1099 = vpop.f32.mrb[0].mxu0
        %v1100 = vadd.f32 %v595, %v1099
        %v1101 = vand.u32 %v375, 4294901760
        %1102 = vmatprep.mubr.f32.mxu0 %v1101
        %v1103 = vand.u32 %v374, 4294901760
        %1104 = vmatmul.mubr.f32.gmra.mrb[0].mxu0 %v1103
        %v1105 = vpop.f32.mrb[0].mxu0
        %v1106 = vadd.f32 %v609, %v1105
        %v1107 = vpop.f32.mrb[0].mxu0
        %v1108 = vadd.f32 %v611, %v1107
        %v1109 = vand.u32 %v377, 4294901760
        %1110 = vmatprep.mubr.f32.mxu0 %v1109
        %v1111 = vand.u32 %v376, 4294901760
        %1112 = vmatmul.mubr.f32.gmra.mrb[0].mxu0 %v1111
        %v1113 = vpop.f32.mrb[0].mxu0
        %v1114 = vadd.f32 %v625, %v1113
        %v1115 = vpop.f32.mrb[0].mxu0
        %v1116 = vadd.f32 %v627, %v1115
        %v1117 = vand.u32 %v379, 4294901760
        %1118 = vmatprep.mubr.f32.mxu0 %v1117
        %v1119 = vand.u32 %v378, 4294901760
        %1120 = vmatmul.mubr.f32.gmra.mrb[0].mxu0 %v1119
        %v1121 = vpop.f32.mrb[0].mxu0
        %v1122 = vadd.f32 %v641, %v1121
        %v1123 = vpop.f32.mrb[0].mxu0
        %v1124 = vadd.f32 %v643, %v1123
        %v1125 = vand.u32 %v381, 4294901760
        %1126 = vmatprep.mubr.f32.mxu0 %v1125
        %v1127 = vand.u32 %v380, 4294901760
        %1128 = vmatmul.mubr.f32.gmra.mrb[0].mxu0 %v1127
        %v1129 = vpop.f32.mrb[0].mxu0
        %v1130 = vadd.f32 %v657, %v1129
        %v1131 = vpop.f32.mrb[0].mxu0
        %v1132 = vadd.f32 %v659, %v1131
        %v1133 = vand.u32 %v383, 4294901760
        %1134 = vmatprep.mubr.f32.mxu0 %v1133
        %v1135 = vand.u32 %v382, 4294901760
        %1136 = vmatmul.mubr.f32.gmra.mrb[0].mxu0 %v1135
        %v1137 = vpop.f32.mrb[0].mxu0
        %v1138 = vadd.f32 %v673, %v1137
        %v1139 = vpop.f32.mrb[0].mxu0
        %v1140 = vadd.f32 %v675, %v1139
        %v1141 = vand.u32 %v385, 4294901760
        %1142 = vmatprep.mubr.f32.mxu0 %v1141
        %v1143 = vand.u32 %v384, 4294901760
        %1144 = vmatmul.mubr.f32.gmra.mrb[0].mxu0 %v1143
        %v1145 = vpop.f32.mrb[0].mxu0
        %v1146 = vadd.f32 %v689, %v1145
        %v1147 = vpop.f32.mrb[0].mxu0
        %v1148 = vadd.f32 %v691, %v1147
        %v1149 = vand.u32 %v387, 4294901760
        %1150 = vmatprep.mubr.f32.mxu0 %v1149
        %v1151 = vand.u32 %v386, 4294901760
        %1152 = vmatmul.mubr.f32.gmra.mrb[0].mxu0 %v1151
        %v1153 = vpop.f32.mrb[0].mxu0
        %v1154 = vadd.f32 %v705, %v1153
        %v1155 = vpop.f32.mrb[0].mxu0
        %v1156 = vadd.f32 %v707, %v1155
        %1157 = vdwg.mxu0
        %v1158 = vand.u32 %v389, 4294901760
        %v1159 = vsub.f32 %v389, %v1158
        %1160 = vmatprep.subr.mxu0 %v1159
        %v1161 = vand.u32 %v388, 4294901760
        %v1162 = vsub.f32 %v388, %v1161
        %1163 = vmatpush1.msra.mxu0 %v1162
        %v1164 = vand.u32 %v391, 4294901760
        %v1165 = vsub.f32 %v391, %v1164
        %1166 = vmatprep.subr.mxu0 %v1165
        %v1167 = vand.u32 %v390, 4294901760
        %v1168 = vsub.f32 %v390, %v1167
        %1169 = vmatpush1.msra.mxu0 %v1168
        %v1170 = vand.u32 %v393, 4294901760
        %v1171 = vsub.f32 %v393, %v1170
        %1172 = vmatprep.subr.mxu0 %v1171
        %v1173 = vand.u32 %v392, 4294901760
        %v1174 = vsub.f32 %v392, %v1173
        %1175 = vmatpush1.msra.mxu0 %v1174
        %v1176 = vand.u32 %v395, 4294901760
        %v1177 = vsub.f32 %v395, %v1176
        %1178 = vmatprep.subr.mxu0 %v1177
        %v1179 = vand.u32 %v394, 4294901760
        %v1180 = vsub.f32 %v394, %v1179
        %1181 = vmatpush1.msra.mxu0 %v1180
        %v1182 = vand.u32 %v397, 4294901760
        %v1183 = vsub.f32 %v397, %v1182
        %1184 = vmatprep.subr.mxu0 %v1183
        %v1185 = vand.u32 %v396, 4294901760
        %v1186 = vsub.f32 %v396, %v1185
        %1187 = vmatpush1.msra.mxu0 %v1186
        %v1188 = vand.u32 %v399, 4294901760
        %v1189 = vsub.f32 %v399, %v1188
        %1190 = vmatprep.subr.mxu0 %v1189
        %v1191 = vand.u32 %v398, 4294901760
        %v1192 = vsub.f32 %v398, %v1191
        %1193 = vmatpush1.msra.mxu0 %v1192
        %v1194 = vand.u32 %v401, 4294901760
        %v1195 = vsub.f32 %v401, %v1194
        %1196 = vmatprep.subr.mxu0 %v1195
        %v1197 = vand.u32 %v400, 4294901760
        %v1198 = vsub.f32 %v400, %v1197
        %1199 = vmatpush1.msra.mxu0 %v1198
        %v1200 = vand.u32 %v403, 4294901760
        %v1201 = vsub.f32 %v403, %v1200
        %1202 = vmatprep.subr.mxu0 %v1201
        %v1203 = vand.u32 %v402, 4294901760
        %v1204 = vsub.f32 %v402, %v1203
        %1205 = vmatpush1.msra.mxu0 %v1204
        %v1206 = vand.u32 %v405, 4294901760
        %v1207 = vsub.f32 %v405, %v1206
        %1208 = vmatprep.subr.mxu0 %v1207
        %v1209 = vand.u32 %v404, 4294901760
        %v1210 = vsub.f32 %v404, %v1209
        %1211 = vmatpush1.msra.mxu0 %v1210
        %v1212 = vand.u32 %v407, 4294901760
        %v1213 = vsub.f32 %v407, %v1212
        %1214 = vmatprep.subr.mxu0 %v1213
        %v1215 = vand.u32 %v406, 4294901760
        %v1216 = vsub.f32 %v406, %v1215
        %1217 = vmatpush1.msra.mxu0 %v1216
        %v1218 = vand.u32 %v409, 4294901760
        %v1219 = vsub.f32 %v409, %v1218
        %1220 = vmatprep.subr.mxu0 %v1219
        %v1221 = vand.u32 %v408, 4294901760
        %v1222 = vsub.f32 %v408, %v1221
        %1223 = vmatpush1.msra.mxu0 %v1222
        %v1224 = vand.u32 %v411, 4294901760
        %v1225 = vsub.f32 %v411, %v1224
        %1226 = vmatprep.subr.mxu0 %v1225
        %v1227 = vand.u32 %v410, 4294901760
        %v1228 = vsub.f32 %v410, %v1227
        %1229 = vmatpush1.msra.mxu0 %v1228
        %v1230 = vand.u32 %v413, 4294901760
        %v1231 = vsub.f32 %v413, %v1230
        %1232 = vmatprep.subr.mxu0 %v1231
        %v1233 = vand.u32 %v412, 4294901760
        %v1234 = vsub.f32 %v412, %v1233
        %1235 = vmatpush1.msra.mxu0 %v1234
        %v1236 = vand.u32 %v415, 4294901760
        %v1237 = vsub.f32 %v415, %v1236
        %1238 = vmatprep.subr.mxu0 %v1237
        %v1239 = vand.u32 %v414, 4294901760
        %v1240 = vsub.f32 %v414, %v1239
        %1241 = vmatpush1.msra.mxu0 %v1240
        %v1242 = vand.u32 %v417, 4294901760
        %v1243 = vsub.f32 %v417, %v1242
        %1244 = vmatprep.subr.mxu0 %v1243
        %v1245 = vand.u32 %v416, 4294901760
        %v1246 = vsub.f32 %v416, %v1245
        %1247 = vmatpush1.msra.mxu0 %v1246
        %v1248 = vand.u32 %v419, 4294901760
        %v1249 = vsub.f32 %v419, %v1248
        %1250 = vmatprep.subr.mxu0 %v1249
        %v1251 = vand.u32 %v418, 4294901760
        %v1252 = vsub.f32 %v418, %v1251
        %1253 = vmatpush1.msra.mxu0 %v1252
        %v1254 = vand.u32 %v421, 4294901760
        %v1255 = vsub.f32 %v421, %v1254
        %1256 = vmatprep.subr.mxu0 %v1255
        %v1257 = vand.u32 %v420, 4294901760
        %v1258 = vsub.f32 %v420, %v1257
        %1259 = vmatpush1.msra.mxu0 %v1258
        %v1260 = vand.u32 %v423, 4294901760
        %v1261 = vsub.f32 %v423, %v1260
        %1262 = vmatprep.subr.mxu0 %v1261
        %v1263 = vand.u32 %v422, 4294901760
        %v1264 = vsub.f32 %v422, %v1263
        %1265 = vmatpush1.msra.mxu0 %v1264
        %v1266 = vand.u32 %v425, 4294901760
        %v1267 = vsub.f32 %v425, %v1266
        %1268 = vmatprep.subr.mxu0 %v1267
        %v1269 = vand.u32 %v424, 4294901760
        %v1270 = vsub.f32 %v424, %v1269
        %1271 = vmatpush1.msra.mxu0 %v1270
        %v1272 = vand.u32 %v427, 4294901760
        %v1273 = vsub.f32 %v427, %v1272
        %1274 = vmatprep.subr.mxu0 %v1273
        %v1275 = vand.u32 %v426, 4294901760
        %v1276 = vsub.f32 %v426, %v1275
        %1277 = vmatpush1.msra.mxu0 %v1276
        %v1278 = vand.u32 %v429, 4294901760
        %v1279 = vsub.f32 %v429, %v1278
        %1280 = vmatprep.subr.mxu0 %v1279
        %v1281 = vand.u32 %v428, 4294901760
        %v1282 = vsub.f32 %v428, %v1281
        %1283 = vmatpush1.msra.mxu0 %v1282
        %v1284 = vand.u32 %v431, 4294901760
        %v1285 = vsub.f32 %v431, %v1284
        %1286 = vmatprep.subr.mxu0 %v1285
        %v1287 = vand.u32 %v430, 4294901760
        %v1288 = vsub.f32 %v430, %v1287
        %1289 = vmatpush1.msra.mxu0 %v1288
        %v1290 = vand.u32 %v433, 4294901760
        %v1291 = vsub.f32 %v433, %v1290
        %1292 = vmatprep.subr.mxu0 %v1291
        %v1293 = vand.u32 %v432, 4294901760
        %v1294 = vsub.f32 %v432, %v1293
        %1295 = vmatpush1.msra.mxu0 %v1294
        %v1296 = vand.u32 %v435, 4294901760
        %v1297 = vsub.f32 %v435, %v1296
        %1298 = vmatprep.subr.mxu0 %v1297
        %v1299 = vand.u32 %v434, 4294901760
        %v1300 = vsub.f32 %v434, %v1299
        %1301 = vmatpush1.msra.mxu0 %v1300
        %v1302 = vand.u32 %v437, 4294901760
        %v1303 = vsub.f32 %v437, %v1302
        %1304 = vmatprep.subr.mxu0 %v1303
        %v1305 = vand.u32 %v436, 4294901760
        %v1306 = vsub.f32 %v436, %v1305
        %1307 = vmatpush1.msra.mxu0 %v1306
        %v1308 = vand.u32 %v439, 4294901760
        %v1309 = vsub.f32 %v439, %v1308
        %1310 = vmatprep.subr.mxu0 %v1309
        %v1311 = vand.u32 %v438, 4294901760
        %v1312 = vsub.f32 %v438, %v1311
        %1313 = vmatpush1.msra.mxu0 %v1312
        %v1314 = vand.u32 %v441, 4294901760
        %v1315 = vsub.f32 %v441, %v1314
        %1316 = vmatprep.subr.mxu0 %v1315
        %v1317 = vand.u32 %v440, 4294901760
        %v1318 = vsub.f32 %v440, %v1317
        %1319 = vmatpush1.msra.mxu0 %v1318
        %v1320 = vand.u32 %v443, 4294901760
        %v1321 = vsub.f32 %v443, %v1320
        %1322 = vmatprep.subr.mxu0 %v1321
        %v1323 = vand.u32 %v442, 4294901760
        %v1324 = vsub.f32 %v442, %v1323
        %1325 = vmatpush1.msra.mxu0 %v1324
        %v1326 = vand.u32 %v445, 4294901760
        %v1327 = vsub.f32 %v445, %v1326
        %1328 = vmatprep.subr.mxu0 %v1327
        %v1329 = vand.u32 %v444, 4294901760
        %v1330 = vsub.f32 %v444, %v1329
        %1331 = vmatpush1.msra.mxu0 %v1330
        %v1332 = vand.u32 %v447, 4294901760
        %v1333 = vsub.f32 %v447, %v1332
        %1334 = vmatprep.subr.mxu0 %v1333
        %v1335 = vand.u32 %v446, 4294901760
        %v1336 = vsub.f32 %v446, %v1335
        %1337 = vmatpush1.msra.mxu0 %v1336
        %v1338 = vand.u32 %v449, 4294901760
        %v1339 = vsub.f32 %v449, %v1338
        %1340 = vmatprep.subr.mxu0 %v1339
        %v1341 = vand.u32 %v448, 4294901760
        %v1342 = vsub.f32 %v448, %v1341
        %1343 = vmatpush1.msra.mxu0 %v1342
        %v1344 = vand.u32 %v451, 4294901760
        %v1345 = vsub.f32 %v451, %v1344
        %1346 = vmatprep.subr.mxu0 %v1345
        %v1347 = vand.u32 %v450, 4294901760
        %v1348 = vsub.f32 %v450, %v1347
        %1349 = vmatpush1.msra.mxu0 %v1348
        %v1350 = vand.u32 %v373, 4294901760
        %v1351 = vsub.f32 %v373, %v1350
        %1352 = vmatprep.mubr.f32.mxu0 %v1351
        %v1353 = vand.u32 %v372, 4294901760
        %v1354 = vsub.f32 %v372, %v1353
        %1355 = vmatmul.mubr.f32.gmra.mrb[0].mxu0 %v1354
        %v1356 = vpop.f32.mrb[0].mxu0
        %v1357 = vadd.f32 %v1098, %v1356
        %v1358 = vpop.f32.mrb[0].mxu0
        %v1359 = vadd.f32 %v1100, %v1358
        %v1360 = vand.u32 %v375, 4294901760
        %v1361 = vsub.f32 %v375, %v1360
        %1362 = vmatprep.mubr.f32.mxu0 %v1361
        %v1363 = vand.u32 %v374, 4294901760
        %v1364 = vsub.f32 %v374, %v1363
        %1365 = vmatmul.mubr.f32.gmra.mrb[0].mxu0 %v1364
        %v1366 = vpop.f32.mrb[0].mxu0
        %v1367 = vadd.f32 %v1106, %v1366
        %v1368 = vpop.f32.mrb[0].mxu0
        %v1369 = vadd.f32 %v1108, %v1368
        %v1370 = vand.u32 %v377, 4294901760
        %v1371 = vsub.f32 %v377, %v1370
        %1372 = vmatprep.mubr.f32.mxu0 %v1371
        %v1373 = vand.u32 %v376, 4294901760
        %v1374 = vsub.f32 %v376, %v1373
        %1375 = vmatmul.mubr.f32.gmra.mrb[0].mxu0 %v1374
        %v1376 = vpop.f32.mrb[0].mxu0
        %v1377 = vadd.f32 %v1114, %v1376
        %v1378 = vpop.f32.mrb[0].mxu0
        %v1379 = vadd.f32 %v1116, %v1378
        %v1380 = vand.u32 %v379, 4294901760
        %v1381 = vsub.f32 %v379, %v1380
        %1382 = vmatprep.mubr.f32.mxu0 %v1381
        %v1383 = vand.u32 %v378, 4294901760
        %v1384 = vsub.f32 %v378, %v1383
        %1385 = vmatmul.mubr.f32.gmra.mrb[0].mxu0 %v1384
        %v1386 = vpop.f32.mrb[0].mxu0
        %v1387 = vadd.f32 %v1122, %v1386
        %v1388 = vpop.f32.mrb[0].mxu0
        %v1389 = vadd.f32 %v1124, %v1388
        %v1390 = vand.u32 %v381, 4294901760
        %v1391 = vsub.f32 %v381, %v1390
        %1392 = vmatprep.mubr.f32.mxu0 %v1391
        %v1393 = vand.u32 %v380, 4294901760
        %v1394 = vsub.f32 %v380, %v1393
        %1395 = vmatmul.mubr.f32.gmra.mrb[0].mxu0 %v1394
        %v1396 = vpop.f32.mrb[0].mxu0
        %v1397 = vadd.f32 %v1130, %v1396
        %v1398 = vpop.f32.mrb[0].mxu0
        %v1399 = vadd.f32 %v1132, %v1398
        %v1400 = vand.u32 %v383, 4294901760
        %v1401 = vsub.f32 %v383, %v1400
        %1402 = vmatprep.mubr.f32.mxu0 %v1401
        %v1403 = vand.u32 %v382, 4294901760
        %v1404 = vsub.f32 %v382, %v1403
        %1405 = vmatmul.mubr.f32.gmra.mrb[0].mxu0 %v1404
        %v1406 = vpop.f32.mrb[0].mxu0
        %v1407 = vadd.f32 %v1138, %v1406
        %v1408 = vpop.f32.mrb[0].mxu0
        %v1409 = vadd.f32 %v1140, %v1408
        %v1410 = vand.u32 %v385, 4294901760
        %v1411 = vsub.f32 %v385, %v1410
        %1412 = vmatprep.mubr.f32.mxu0 %v1411
        %v1413 = vand.u32 %v384, 4294901760
        %v1414 = vsub.f32 %v384, %v1413
        %1415 = vmatmul.mubr.f32.gmra.mrb[0].mxu0 %v1414
        %v1416 = vpop.f32.mrb[0].mxu0
        %v1417 = vadd.f32 %v1146, %v1416
        %v1418 = vpop.f32.mrb[0].mxu0
        %v1419 = vadd.f32 %v1148, %v1418
        %v1420 = vand.u32 %v387, 4294901760
        %v1421 = vsub.f32 %v387, %v1420
        %1422 = vmatprep.mubr.f32.mxu0 %v1421
        %v1423 = vand.u32 %v386, 4294901760
        %v1424 = vsub.f32 %v386, %v1423
        %1425 = vmatmul.mubr.f32.gmra.mrb[0].mxu0 %v1424
        %v1426 = vpop.f32.mrb[0].mxu0
        %v1427 = vadd.f32 %v1154, %v1426
        %v1428 = vpop.f32.mrb[0].mxu0
        %v1429 = vadd.f32 %v1156, %v1428
        %1430 = vdwg.mxu0
        %v1431 = vand.u32 %v389, 4294901760
        %1432 = vmatprep.subr.mxu0 %v1431
        %v1433 = vand.u32 %v388, 4294901760
        %1434 = vmatpush1.msra.mxu0 %v1433
        %v1435 = vand.u32 %v391, 4294901760
        %1436 = vmatprep.subr.mxu0 %v1435
        %v1437 = vand.u32 %v390, 4294901760
        %1438 = vmatpush1.msra.mxu0 %v1437
        %v1439 = vand.u32 %v393, 4294901760
        %1440 = vmatprep.subr.mxu0 %v1439
        %v1441 = vand.u32 %v392, 4294901760
        %1442 = vmatpush1.msra.mxu0 %v1441
        %v1443 = vand.u32 %v395, 4294901760
        %1444 = vmatprep.subr.mxu0 %v1443
        %v1445 = vand.u32 %v394, 4294901760
        %1446 = vmatpush1.msra.mxu0 %v1445
        %v1447 = vand.u32 %v397, 4294901760
        %1448 = vmatprep.subr.mxu0 %v1447
        %v1449 = vand.u32 %v396, 4294901760
        %1450 = vmatpush1.msra.mxu0 %v1449
        %v1451 = vand.u32 %v399, 4294901760
        %1452 = vmatprep.subr.mxu0 %v1451
        %v1453 = vand.u32 %v398, 4294901760
        %1454 = vmatpush1.msra.mxu0 %v1453
        %v1455 = vand.u32 %v401, 4294901760
        %1456 = vmatprep.subr.mxu0 %v1455
        %v1457 = vand.u32 %v400, 4294901760
        %1458 = vmatpush1.msra.mxu0 %v1457
        %v1459 = vand.u32 %v403, 4294901760
        %1460 = vmatprep.subr.mxu0 %v1459
        %v1461 = vand.u32 %v402, 4294901760
        %1462 = vmatpush1.msra.mxu0 %v1461
        %v1463 = vand.u32 %v405, 4294901760
        %1464 = vmatprep.subr.mxu0 %v1463
        %v1465 = vand.u32 %v404, 4294901760
        %1466 = vmatpush1.msra.mxu0 %v1465
        %v1467 = vand.u32 %v407, 4294901760
        %1468 = vmatprep.subr.mxu0 %v1467
        %v1469 = vand.u32 %v406, 4294901760
        %1470 = vmatpush1.msra.mxu0 %v1469
        %v1471 = vand.u32 %v409, 4294901760
        %1472 = vmatprep.subr.mxu0 %v1471
        %v1473 = vand.u32 %v408, 4294901760
        %1474 = vmatpush1.msra.mxu0 %v1473
        %v1475 = vand.u32 %v411, 4294901760
        %1476 = vmatprep.subr.mxu0 %v1475
        %v1477 = vand.u32 %v410, 4294901760
        %1478 = vmatpush1.msra.mxu0 %v1477
        %v1479 = vand.u32 %v413, 4294901760
        %1480 = vmatprep.subr.mxu0 %v1479
        %v1481 = vand.u32 %v412, 4294901760
        %1482 = vmatpush1.msra.mxu0 %v1481
        %v1483 = vand.u32 %v415, 4294901760
        %1484 = vmatprep.subr.mxu0 %v1483
        %v1485 = vand.u32 %v414, 4294901760
        %1486 = vmatpush1.msra.mxu0 %v1485
        %v1487 = vand.u32 %v417, 4294901760
        %1488 = vmatprep.subr.mxu0 %v1487
        %v1489 = vand.u32 %v416, 4294901760
        %1490 = vmatpush1.msra.mxu0 %v1489
        %v1491 = vand.u32 %v419, 4294901760
        %1492 = vmatprep.subr.mxu0 %v1491
        %v1493 = vand.u32 %v418, 4294901760
        %1494 = vmatpush1.msra.mxu0 %v1493
        %v1495 = vand.u32 %v421, 4294901760
        %1496 = vmatprep.subr.mxu0 %v1495
        %v1497 = vand.u32 %v420, 4294901760
        %1498 = vmatpush1.msra.mxu0 %v1497
        %v1499 = vand.u32 %v423, 4294901760
        %1500 = vmatprep.subr.mxu0 %v1499
        %v1501 = vand.u32 %v422, 4294901760
        %1502 = vmatpush1.msra.mxu0 %v1501
        %v1503 = vand.u32 %v425, 4294901760
        %1504 = vmatprep.subr.mxu0 %v1503
        %v1505 = vand.u32 %v424, 4294901760
        %1506 = vmatpush1.msra.mxu0 %v1505
        %v1507 = vand.u32 %v427, 4294901760
        %1508 = vmatprep.subr.mxu0 %v1507
        %v1509 = vand.u32 %v426, 4294901760
        %1510 = vmatpush1.msra.mxu0 %v1509
        %v1511 = vand.u32 %v429, 4294901760
        %1512 = vmatprep.subr.mxu0 %v1511
        %v1513 = vand.u32 %v428, 4294901760
        %1514 = vmatpush1.msra.mxu0 %v1513
        %v1515 = vand.u32 %v431, 4294901760
        %1516 = vmatprep.subr.mxu0 %v1515
        %v1517 = vand.u32 %v430, 4294901760
        %1518 = vmatpush1.msra.mxu0 %v1517
        %v1519 = vand.u32 %v433, 4294901760
        %1520 = vmatprep.subr.mxu0 %v1519
        %v1521 = vand.u32 %v432, 4294901760
        %1522 = vmatpush1.msra.mxu0 %v1521
        %v1523 = vand.u32 %v435, 4294901760
        %1524 = vmatprep.subr.mxu0 %v1523
        %v1525 = vand.u32 %v434, 4294901760
        %1526 = vmatpush1.msra.mxu0 %v1525
        %v1527 = vand.u32 %v437, 4294901760
        %1528 = vmatprep.subr.mxu0 %v1527
        %v1529 = vand.u32 %v436, 4294901760
        %1530 = vmatpush1.msra.mxu0 %v1529
        %v1531 = vand.u32 %v439, 4294901760
        %1532 = vmatprep.subr.mxu0 %v1531
        %v1533 = vand.u32 %v438, 4294901760
        %1534 = vmatpush1.msra.mxu0 %v1533
        %v1535 = vand.u32 %v441, 4294901760
        %1536 = vmatprep.subr.mxu0 %v1535
        %v1537 = vand.u32 %v440, 4294901760
        %1538 = vmatpush1.msra.mxu0 %v1537
        %v1539 = vand.u32 %v443, 4294901760
        %1540 = vmatprep.subr.mxu0 %v1539
        %v1541 = vand.u32 %v442, 4294901760
        %1542 = vmatpush1.msra.mxu0 %v1541
        %v1543 = vand.u32 %v445, 4294901760
        %1544 = vmatprep.subr.mxu0 %v1543
        %v1545 = vand.u32 %v444, 4294901760
        %1546 = vmatpush1.msra.mxu0 %v1545
        %v1547 = vand.u32 %v447, 4294901760
        %1548 = vmatprep.subr.mxu0 %v1547
        %v1549 = vand.u32 %v446, 4294901760
        %1550 = vmatpush1.msra.mxu0 %v1549
        %v1551 = vand.u32 %v449, 4294901760
        %1552 = vmatprep.subr.mxu0 %v1551
        %v1553 = vand.u32 %v448, 4294901760
        %1554 = vmatpush1.msra.mxu0 %v1553
        %v1555 = vand.u32 %v451, 4294901760
        %1556 = vmatprep.subr.mxu0 %v1555
        %v1557 = vand.u32 %v450, 4294901760
        %1558 = vmatpush1.msra.mxu0 %v1557
        %v1559 = vand.u32 %v373, 4294901760
        %v1560 = vsub.f32 %v373, %v1559
        %v1561 = vand.u32 %v1560, 4294901760
        %1562 = vmatprep.mubr.f32.mxu0 %v1561
        %v1563 = vand.u32 %v372, 4294901760
        %v1564 = vsub.f32 %v372, %v1563
        %v1565 = vand.u32 %v1564, 4294901760
        %1566 = vmatmul.mubr.f32.gmra.mrb[0].mxu0 %v1565
        %v1567 = vpop.f32.mrb[0].mxu0
        %v1568 = vadd.f32 %v1357, %v1567
        %v1569 = vpop.f32.mrb[0].mxu0
        %v1570 = vadd.f32 %v1359, %v1569
        %v1571 = vand.u32 %v375, 4294901760
        %v1572 = vsub.f32 %v375, %v1571
        %v1573 = vand.u32 %v1572, 4294901760
        %1574 = vmatprep.mubr.f32.mxu0 %v1573
        %v1575 = vand.u32 %v374, 4294901760
        %v1576 = vsub.f32 %v374, %v1575
        %v1577 = vand.u32 %v1576, 4294901760
        %1578 = vmatmul.mubr.f32.gmra.mrb[0].mxu0 %v1577
        %v1579 = vpop.f32.mrb[0].mxu0
        %v1580 = vadd.f32 %v1367, %v1579
        %v1581 = vpop.f32.mrb[0].mxu0
        %v1582 = vadd.f32 %v1369, %v1581
        %v1583 = vand.u32 %v377, 4294901760
        %v1584 = vsub.f32 %v377, %v1583
        %v1585 = vand.u32 %v1584, 4294901760
        %1586 = vmatprep.mubr.f32.mxu0 %v1585
        %v1587 = vand.u32 %v376, 4294901760
        %v1588 = vsub.f32 %v376, %v1587
        %v1589 = vand.u32 %v1588, 4294901760
        %1590 = vmatmul.mubr.f32.gmra.mrb[0].mxu0 %v1589
        %v1591 = vpop.f32.mrb[0].mxu0
        %v1592 = vadd.f32 %v1377, %v1591
        %v1593 = vpop.f32.mrb[0].mxu0
        %v1594 = vadd.f32 %v1379, %v1593
        %v1595 = vand.u32 %v379, 4294901760
        %v1596 = vsub.f32 %v379, %v1595
        %v1597 = vand.u32 %v1596, 4294901760
        %1598 = vmatprep.mubr.f32.mxu0 %v1597
        %v1599 = vand.u32 %v378, 4294901760
        %v1600 = vsub.f32 %v378, %v1599
        %v1601 = vand.u32 %v1600, 4294901760
        %1602 = vmatmul.mubr.f32.gmra.mrb[0].mxu0 %v1601
        %v1603 = vpop.f32.mrb[0].mxu0
        %v1604 = vadd.f32 %v1387, %v1603
        %v1605 = vpop.f32.mrb[0].mxu0
        %v1606 = vadd.f32 %v1389, %v1605
        %v1607 = vand.u32 %v381, 4294901760
        %v1608 = vsub.f32 %v381, %v1607
        %v1609 = vand.u32 %v1608, 4294901760
        %1610 = vmatprep.mubr.f32.mxu0 %v1609
        %v1611 = vand.u32 %v380, 4294901760
        %v1612 = vsub.f32 %v380, %v1611
        %v1613 = vand.u32 %v1612, 4294901760
        %1614 = vmatmul.mubr.f32.gmra.mrb[0].mxu0 %v1613
        %v1615 = vpop.f32.mrb[0].mxu0
        %v1616 = vadd.f32 %v1397, %v1615
        %v1617 = vpop.f32.mrb[0].mxu0
        %v1618 = vadd.f32 %v1399, %v1617
        %v1619 = vand.u32 %v383, 4294901760
        %v1620 = vsub.f32 %v383, %v1619
        %v1621 = vand.u32 %v1620, 4294901760
        %1622 = vmatprep.mubr.f32.mxu0 %v1621
        %v1623 = vand.u32 %v382, 4294901760
        %v1624 = vsub.f32 %v382, %v1623
        %v1625 = vand.u32 %v1624, 4294901760
        %1626 = vmatmul.mubr.f32.gmra.mrb[0].mxu0 %v1625
        %v1627 = vpop.f32.mrb[0].mxu0
        %v1628 = vadd.f32 %v1407, %v1627
        %v1629 = vpop.f32.mrb[0].mxu0
        %v1630 = vadd.f32 %v1409, %v1629
        %v1631 = vand.u32 %v385, 4294901760
        %v1632 = vsub.f32 %v385, %v1631
        %v1633 = vand.u32 %v1632, 4294901760
        %1634 = vmatprep.mubr.f32.mxu0 %v1633
        %v1635 = vand.u32 %v384, 4294901760
        %v1636 = vsub.f32 %v384, %v1635
        %v1637 = vand.u32 %v1636, 4294901760
        %1638 = vmatmul.mubr.f32.gmra.mrb[0].mxu0 %v1637
        %v1639 = vpop.f32.mrb[0].mxu0
        %v1640 = vadd.f32 %v1417, %v1639
        %v1641 = vpop.f32.mrb[0].mxu0
        %v1642 = vadd.f32 %v1419, %v1641
        %v1643 = vand.u32 %v387, 4294901760
        %v1644 = vsub.f32 %v387, %v1643
        %v1645 = vand.u32 %v1644, 4294901760
        %1646 = vmatprep.mubr.f32.mxu0 %v1645
        %v1647 = vand.u32 %v386, 4294901760
        %v1648 = vsub.f32 %v386, %v1647
        %v1649 = vand.u32 %v1648, 4294901760
        %1650 = vmatmul.mubr.f32.gmra.mrb[0].mxu0 %v1649
        %v1651 = vpop.f32.mrb[0].mxu0
        %v1652 = vadd.f32 %v1427, %v1651
        %v1653 = vpop.f32.mrb[0].mxu0
        %v1654 = vadd.f32 %v1429, %v1653
        %1655 = vdwg.mxu0
        %v1656 = vand.u32 %v389, 4294901760
        %v1657 = vsub.f32 %v389, %v1656
        %v1658 = vand.u32 %v1657, 4294901760
        %1659 = vmatprep.subr.mxu0 %v1658
        %v1660 = vand.u32 %v388, 4294901760
        %v1661 = vsub.f32 %v388, %v1660
        %v1662 = vand.u32 %v1661, 4294901760
        %1663 = vmatpush1.msra.mxu0 %v1662
        %v1664 = vand.u32 %v391, 4294901760
        %v1665 = vsub.f32 %v391, %v1664
        %v1666 = vand.u32 %v1665, 4294901760
        %1667 = vmatprep.subr.mxu0 %v1666
        %v1668 = vand.u32 %v390, 4294901760
        %v1669 = vsub.f32 %v390, %v1668
        %v1670 = vand.u32 %v1669, 4294901760
        %1671 = vmatpush1.msra.mxu0 %v1670
        %v1672 = vand.u32 %v393, 4294901760
        %v1673 = vsub.f32 %v393, %v1672
        %v1674 = vand.u32 %v1673, 4294901760
        %1675 = vmatprep.subr.mxu0 %v1674
        %v1676 = vand.u32 %v392, 4294901760
        %v1677 = vsub.f32 %v392, %v1676
        %v1678 = vand.u32 %v1677, 4294901760
        %1679 = vmatpush1.msra.mxu0 %v1678
        %v1680 = vand.u32 %v395, 4294901760
        %v1681 = vsub.f32 %v395, %v1680
        %v1682 = vand.u32 %v1681, 4294901760
        %1683 = vmatprep.subr.mxu0 %v1682
        %v1684 = vand.u32 %v394, 4294901760
        %v1685 = vsub.f32 %v394, %v1684
        %v1686 = vand.u32 %v1685, 4294901760
        %1687 = vmatpush1.msra.mxu0 %v1686
        %v1688 = vand.u32 %v397, 4294901760
        %v1689 = vsub.f32 %v397, %v1688
        %v1690 = vand.u32 %v1689, 4294901760
        %1691 = vmatprep.subr.mxu0 %v1690
        %v1692 = vand.u32 %v396, 4294901760
        %v1693 = vsub.f32 %v396, %v1692
        %v1694 = vand.u32 %v1693, 4294901760
        %1695 = vmatpush1.msra.mxu0 %v1694
        %v1696 = vand.u32 %v399, 4294901760
        %v1697 = vsub.f32 %v399, %v1696
        %v1698 = vand.u32 %v1697, 4294901760
        %1699 = vmatprep.subr.mxu0 %v1698
        %v1700 = vand.u32 %v398, 4294901760
        %v1701 = vsub.f32 %v398, %v1700
        %v1702 = vand.u32 %v1701, 4294901760
        %1703 = vmatpush1.msra.mxu0 %v1702
        %v1704 = vand.u32 %v401, 4294901760
        %v1705 = vsub.f32 %v401, %v1704
        %v1706 = vand.u32 %v1705, 4294901760
        %1707 = vmatprep.subr.mxu0 %v1706
        %v1708 = vand.u32 %v400, 4294901760
        %v1709 = vsub.f32 %v400, %v1708
        %v1710 = vand.u32 %v1709, 4294901760
        %1711 = vmatpush1.msra.mxu0 %v1710
        %v1712 = vand.u32 %v403, 4294901760
        %v1713 = vsub.f32 %v403, %v1712
        %v1714 = vand.u32 %v1713, 4294901760
        %1715 = vmatprep.subr.mxu0 %v1714
        %v1716 = vand.u32 %v402, 4294901760
        %v1717 = vsub.f32 %v402, %v1716
        %v1718 = vand.u32 %v1717, 4294901760
        %1719 = vmatpush1.msra.mxu0 %v1718
        %v1720 = vand.u32 %v405, 4294901760
        %v1721 = vsub.f32 %v405, %v1720
        %v1722 = vand.u32 %v1721, 4294901760
        %1723 = vmatprep.subr.mxu0 %v1722
        %v1724 = vand.u32 %v404, 4294901760
        %v1725 = vsub.f32 %v404, %v1724
        %v1726 = vand.u32 %v1725, 4294901760
        %1727 = vmatpush1.msra.mxu0 %v1726
        %v1728 = vand.u32 %v407, 4294901760
        %v1729 = vsub.f32 %v407, %v1728
        %v1730 = vand.u32 %v1729, 4294901760
        %1731 = vmatprep.subr.mxu0 %v1730
        %v1732 = vand.u32 %v406, 4294901760
        %v1733 = vsub.f32 %v406, %v1732
        %v1734 = vand.u32 %v1733, 4294901760
        %1735 = vmatpush1.msra.mxu0 %v1734
        %v1736 = vand.u32 %v409, 4294901760
        %v1737 = vsub.f32 %v409, %v1736
        %v1738 = vand.u32 %v1737, 4294901760
        %1739 = vmatprep.subr.mxu0 %v1738
        %v1740 = vand.u32 %v408, 4294901760
        %v1741 = vsub.f32 %v408, %v1740
        %v1742 = vand.u32 %v1741, 4294901760
        %1743 = vmatpush1.msra.mxu0 %v1742
        %v1744 = vand.u32 %v411, 4294901760
        %v1745 = vsub.f32 %v411, %v1744
        %v1746 = vand.u32 %v1745, 4294901760
        %1747 = vmatprep.subr.mxu0 %v1746
        %v1748 = vand.u32 %v410, 4294901760
        %v1749 = vsub.f32 %v410, %v1748
        %v1750 = vand.u32 %v1749, 4294901760
        %1751 = vmatpush1.msra.mxu0 %v1750
        %v1752 = vand.u32 %v413, 4294901760
        %v1753 = vsub.f32 %v413, %v1752
        %v1754 = vand.u32 %v1753, 4294901760
        %1755 = vmatprep.subr.mxu0 %v1754
        %v1756 = vand.u32 %v412, 4294901760
        %v1757 = vsub.f32 %v412, %v1756
        %v1758 = vand.u32 %v1757, 4294901760
        %1759 = vmatpush1.msra.mxu0 %v1758
        %v1760 = vand.u32 %v415, 4294901760
        %v1761 = vsub.f32 %v415, %v1760
        %v1762 = vand.u32 %v1761, 4294901760
        %1763 = vmatprep.subr.mxu0 %v1762
        %v1764 = vand.u32 %v414, 4294901760
        %v1765 = vsub.f32 %v414, %v1764
        %v1766 = vand.u32 %v1765, 4294901760
        %1767 = vmatpush1.msra.mxu0 %v1766
        %v1768 = vand.u32 %v417, 4294901760
        %v1769 = vsub.f32 %v417, %v1768
        %v1770 = vand.u32 %v1769, 4294901760
        %1771 = vmatprep.subr.mxu0 %v1770
        %v1772 = vand.u32 %v416, 4294901760
        %v1773 = vsub.f32 %v416, %v1772
        %v1774 = vand.u32 %v1773, 4294901760
        %1775 = vmatpush1.msra.mxu0 %v1774
        %v1776 = vand.u32 %v419, 4294901760
        %v1777 = vsub.f32 %v419, %v1776
        %v1778 = vand.u32 %v1777, 4294901760
        %1779 = vmatprep.subr.mxu0 %v1778
        %v1780 = vand.u32 %v418, 4294901760
        %v1781 = vsub.f32 %v418, %v1780
        %v1782 = vand.u32 %v1781, 4294901760
        %1783 = vmatpush1.msra.mxu0 %v1782
        %v1784 = vand.u32 %v421, 4294901760
        %v1785 = vsub.f32 %v421, %v1784
        %v1786 = vand.u32 %v1785, 4294901760
        %1787 = vmatprep.subr.mxu0 %v1786
        %v1788 = vand.u32 %v420, 4294901760
        %v1789 = vsub.f32 %v420, %v1788
        %v1790 = vand.u32 %v1789, 4294901760
        %1791 = vmatpush1.msra.mxu0 %v1790
        %v1792 = vand.u32 %v423, 4294901760
        %v1793 = vsub.f32 %v423, %v1792
        %v1794 = vand.u32 %v1793, 4294901760
        %1795 = vmatprep.subr.mxu0 %v1794
        %v1796 = vand.u32 %v422, 4294901760
        %v1797 = vsub.f32 %v422, %v1796
        %v1798 = vand.u32 %v1797, 4294901760
        %1799 = vmatpush1.msra.mxu0 %v1798
        %v1800 = vand.u32 %v425, 4294901760
        %v1801 = vsub.f32 %v425, %v1800
        %v1802 = vand.u32 %v1801, 4294901760
        %1803 = vmatprep.subr.mxu0 %v1802
        %v1804 = vand.u32 %v424, 4294901760
        %v1805 = vsub.f32 %v424, %v1804
        %v1806 = vand.u32 %v1805, 4294901760
        %1807 = vmatpush1.msra.mxu0 %v1806
        %v1808 = vand.u32 %v427, 4294901760
        %v1809 = vsub.f32 %v427, %v1808
        %v1810 = vand.u32 %v1809, 4294901760
        %1811 = vmatprep.subr.mxu0 %v1810
        %v1812 = vand.u32 %v426, 4294901760
        %v1813 = vsub.f32 %v426, %v1812
        %v1814 = vand.u32 %v1813, 4294901760
        %1815 = vmatpush1.msra.mxu0 %v1814
        %v1816 = vand.u32 %v429, 4294901760
        %v1817 = vsub.f32 %v429, %v1816
        %v1818 = vand.u32 %v1817, 4294901760
        %1819 = vmatprep.subr.mxu0 %v1818
        %v1820 = vand.u32 %v428, 4294901760
        %v1821 = vsub.f32 %v428, %v1820
        %v1822 = vand.u32 %v1821, 4294901760
        %1823 = vmatpush1.msra.mxu0 %v1822
        %v1824 = vand.u32 %v431, 4294901760
        %v1825 = vsub.f32 %v431, %v1824
        %v1826 = vand.u32 %v1825, 4294901760
        %1827 = vmatprep.subr.mxu0 %v1826
        %v1828 = vand.u32 %v430, 4294901760
        %v1829 = vsub.f32 %v430, %v1828
        %v1830 = vand.u32 %v1829, 4294901760
        %1831 = vmatpush1.msra.mxu0 %v1830
        %v1832 = vand.u32 %v433, 4294901760
        %v1833 = vsub.f32 %v433, %v1832
        %v1834 = vand.u32 %v1833, 4294901760
        %1835 = vmatprep.subr.mxu0 %v1834
        %v1836 = vand.u32 %v432, 4294901760
        %v1837 = vsub.f32 %v432, %v1836
        %v1838 = vand.u32 %v1837, 4294901760
        %1839 = vmatpush1.msra.mxu0 %v1838
        %v1840 = vand.u32 %v435, 4294901760
        %v1841 = vsub.f32 %v435, %v1840
        %v1842 = vand.u32 %v1841, 4294901760
        %1843 = vmatprep.subr.mxu0 %v1842
        %v1844 = vand.u32 %v434, 4294901760
        %v1845 = vsub.f32 %v434, %v1844
        %v1846 = vand.u32 %v1845, 4294901760
        %1847 = vmatpush1.msra.mxu0 %v1846
        %v1848 = vand.u32 %v437, 4294901760
        %v1849 = vsub.f32 %v437, %v1848
        %v1850 = vand.u32 %v1849, 4294901760
        %1851 = vmatprep.subr.mxu0 %v1850
        %v1852 = vand.u32 %v436, 4294901760
        %v1853 = vsub.f32 %v436, %v1852
        %v1854 = vand.u32 %v1853, 4294901760
        %1855 = vmatpush1.msra.mxu0 %v1854
        %v1856 = vand.u32 %v439, 4294901760
        %v1857 = vsub.f32 %v439, %v1856
        %v1858 = vand.u32 %v1857, 4294901760
        %1859 = vmatprep.subr.mxu0 %v1858
        %v1860 = vand.u32 %v438, 4294901760
        %v1861 = vsub.f32 %v438, %v1860
        %v1862 = vand.u32 %v1861, 4294901760
        %1863 = vmatpush1.msra.mxu0 %v1862
        %v1864 = vand.u32 %v441, 4294901760
        %v1865 = vsub.f32 %v441, %v1864
        %v1866 = vand.u32 %v1865, 4294901760
        %1867 = vmatprep.subr.mxu0 %v1866
        %v1868 = vand.u32 %v440, 4294901760
        %v1869 = vsub.f32 %v440, %v1868
        %v1870 = vand.u32 %v1869, 4294901760
        %1871 = vmatpush1.msra.mxu0 %v1870
        %v1872 = vand.u32 %v443, 4294901760
        %v1873 = vsub.f32 %v443, %v1872
        %v1874 = vand.u32 %v1873, 4294901760
        %1875 = vmatprep.subr.mxu0 %v1874
        %v1876 = vand.u32 %v442, 4294901760
        %v1877 = vsub.f32 %v442, %v1876
        %v1878 = vand.u32 %v1877, 4294901760
        %1879 = vmatpush1.msra.mxu0 %v1878
        %v1880 = vand.u32 %v445, 4294901760
        %v1881 = vsub.f32 %v445, %v1880
        %v1882 = vand.u32 %v1881, 4294901760
        %1883 = vmatprep.subr.mxu0 %v1882
        %v1884 = vand.u32 %v444, 4294901760
        %v1885 = vsub.f32 %v444, %v1884
        %v1886 = vand.u32 %v1885, 4294901760
        %1887 = vmatpush1.msra.mxu0 %v1886
        %v1888 = vand.u32 %v447, 4294901760
        %v1889 = vsub.f32 %v447, %v1888
        %v1890 = vand.u32 %v1889, 4294901760
        %1891 = vmatprep.subr.mxu0 %v1890
        %v1892 = vand.u32 %v446, 4294901760
        %v1893 = vsub.f32 %v446, %v1892
        %v1894 = vand.u32 %v1893, 4294901760
        %1895 = vmatpush1.msra.mxu0 %v1894
        %v1896 = vand.u32 %v449, 4294901760
        %v1897 = vsub.f32 %v449, %v1896
        %v1898 = vand.u32 %v1897, 4294901760
        %1899 = vmatprep.subr.mxu0 %v1898
        %v1900 = vand.u32 %v448, 4294901760
        %v1901 = vsub.f32 %v448, %v1900
        %v1902 = vand.u32 %v1901, 4294901760
        %1903 = vmatpush1.msra.mxu0 %v1902
        %v1904 = vand.u32 %v451, 4294901760
        %v1905 = vsub.f32 %v451, %v1904
        %v1906 = vand.u32 %v1905, 4294901760
        %1907 = vmatprep.subr.mxu0 %v1906
        %v1908 = vand.u32 %v450, 4294901760
        %v1909 = vsub.f32 %v450, %v1908
        %v1910 = vand.u32 %v1909, 4294901760
        %1911 = vmatpush1.msra.mxu0 %v1910
        %v1912 = vand.u32 %v373, 4294901760
        %1913 = vmatprep.mubr.f32.mxu0 %v1912
        %v1914 = vand.u32 %v372, 4294901760
        %1915 = vmatmul.mubr.f32.gmra.mrb[0].mxu0 %v1914
        %v1916 = vpop.f32.mrb[0].mxu0
        %v1917 = vadd.f32 %v1568, %v1916
        %v1918 = vpop.f32.mrb[0].mxu0
        %v1919 = vadd.f32 %v1570, %v1918
        %v1920 = vand.u32 %v375, 4294901760
        %1921 = vmatprep.mubr.f32.mxu0 %v1920
        %v1922 = vand.u32 %v374, 4294901760
        %1923 = vmatmul.mubr.f32.gmra.mrb[0].mxu0 %v1922
        %v1924 = vpop.f32.mrb[0].mxu0
        %v1925 = vadd.f32 %v1580, %v1924
        %v1926 = vpop.f32.mrb[0].mxu0
        %v1927 = vadd.f32 %v1582, %v1926
        %v1928 = vand.u32 %v377, 4294901760
        %1929 = vmatprep.mubr.f32.mxu0 %v1928
        %v1930 = vand.u32 %v376, 4294901760
        %1931 = vmatmul.mubr.f32.gmra.mrb[0].mxu0 %v1930
        %v1932 = vpop.f32.mrb[0].mxu0
        %v1933 = vadd.f32 %v1592, %v1932
        %v1934 = vpop.f32.mrb[0].mxu0
        %v1935 = vadd.f32 %v1594, %v1934
        %v1936 = vand.u32 %v379, 4294901760
        %1937 = vmatprep.mubr.f32.mxu0 %v1936
        %v1938 = vand.u32 %v378, 4294901760
        %1939 = vmatmul.mubr.f32.gmra.mrb[0].mxu0 %v1938
        %v1940 = vpop.f32.mrb[0].mxu0
        %v1941 = vadd.f32 %v1604, %v1940
        %v1942 = vpop.f32.mrb[0].mxu0
        %v1943 = vadd.f32 %v1606, %v1942
        %v1944 = vand.u32 %v381, 4294901760
        %1945 = vmatprep.mubr.f32.mxu0 %v1944
        %v1946 = vand.u32 %v380, 4294901760
        %1947 = vmatmul.mubr.f32.gmra.mrb[0].mxu0 %v1946
        %v1948 = vpop.f32.mrb[0].mxu0
        %v1949 = vadd.f32 %v1616, %v1948
        %v1950 = vpop.f32.mrb[0].mxu0
        %v1951 = vadd.f32 %v1618, %v1950
        %v1952 = vand.u32 %v383, 4294901760
        %1953 = vmatprep.mubr.f32.mxu0 %v1952
        %v1954 = vand.u32 %v382, 4294901760
        %1955 = vmatmul.mubr.f32.gmra.mrb[0].mxu0 %v1954
        %v1956 = vpop.f32.mrb[0].mxu0
        %v1957 = vadd.f32 %v1628, %v1956
        %v1958 = vpop.f32.mrb[0].mxu0
        %v1959 = vadd.f32 %v1630, %v1958
        %v1960 = vand.u32 %v385, 4294901760
        %1961 = vmatprep.mubr.f32.mxu0 %v1960
        %v1962 = vand.u32 %v384, 4294901760
        %1963 = vmatmul.mubr.f32.gmra.mrb[0].mxu0 %v1962
        %v1964 = vpop.f32.mrb[0].mxu0
        %v1965 = vadd.f32 %v1640, %v1964
        %v1966 = vpop.f32.mrb[0].mxu0
        %v1967 = vadd.f32 %v1642, %v1966
        %v1968 = vand.u32 %v387, 4294901760
        %1969 = vmatprep.mubr.f32.mxu0 %v1968
        %v1970 = vand.u32 %v386, 4294901760
        %1971 = vmatmul.mubr.f32.gmra.mrb[0].mxu0 %v1970
        %v1972 = vpop.f32.mrb[0].mxu0
        %v1973 = vadd.f32 %v1652, %v1972
        %v1974 = vpop.f32.mrb[0].mxu0
        %v1975 = vadd.f32 %v1654, %v1974
        %1976 = vdwg.mxu0
        %v1977 = vand.u32 %v389, 4294901760
        %1978 = vmatprep.subr.mxu0 %v1977
        %v1979 = vand.u32 %v388, 4294901760
        %1980 = vmatpush1.msra.mxu0 %v1979
        %v1981 = vand.u32 %v391, 4294901760
        %1982 = vmatprep.subr.mxu0 %v1981
        %v1983 = vand.u32 %v390, 4294901760
        %1984 = vmatpush1.msra.mxu0 %v1983
        %v1985 = vand.u32 %v393, 4294901760
        %1986 = vmatprep.subr.mxu0 %v1985
        %v1987 = vand.u32 %v392, 4294901760
        %1988 = vmatpush1.msra.mxu0 %v1987
        %v1989 = vand.u32 %v395, 4294901760
        %1990 = vmatprep.subr.mxu0 %v1989
        %v1991 = vand.u32 %v394, 4294901760
        %1992 = vmatpush1.msra.mxu0 %v1991
        %v1993 = vand.u32 %v397, 4294901760
        %1994 = vmatprep.subr.mxu0 %v1993
        %v1995 = vand.u32 %v396, 4294901760
        %1996 = vmatpush1.msra.mxu0 %v1995
        %v1997 = vand.u32 %v399, 4294901760
        %1998 = vmatprep.subr.mxu0 %v1997
        %v1999 = vand.u32 %v398, 4294901760
        %2000 = vmatpush1.msra.mxu0 %v1999
        %v2001 = vand.u32 %v401, 4294901760
        %2002 = vmatprep.subr.mxu0 %v2001
        %v2003 = vand.u32 %v400, 4294901760
        %2004 = vmatpush1.msra.mxu0 %v2003
        %v2005 = vand.u32 %v403, 4294901760
        %2006 = vmatprep.subr.mxu0 %v2005
        %v2007 = vand.u32 %v402, 4294901760
        %2008 = vmatpush1.msra.mxu0 %v2007
        %v2009 = vand.u32 %v405, 4294901760
        %2010 = vmatprep.subr.mxu0 %v2009
        %v2011 = vand.u32 %v404, 4294901760
        %2012 = vmatpush1.msra.mxu0 %v2011
        %v2013 = vand.u32 %v407, 4294901760
        %2014 = vmatprep.subr.mxu0 %v2013
        %v2015 = vand.u32 %v406, 4294901760
        %2016 = vmatpush1.msra.mxu0 %v2015
        %v2017 = vand.u32 %v409, 4294901760
        %2018 = vmatprep.subr.mxu0 %v2017
        %v2019 = vand.u32 %v408, 4294901760
        %2020 = vmatpush1.msra.mxu0 %v2019
        %v2021 = vand.u32 %v411, 4294901760
        %2022 = vmatprep.subr.mxu0 %v2021
        %v2023 = vand.u32 %v410, 4294901760
        %2024 = vmatpush1.msra.mxu0 %v2023
        %v2025 = vand.u32 %v413, 4294901760
        %2026 = vmatprep.subr.mxu0 %v2025
        %v2027 = vand.u32 %v412, 4294901760
        %2028 = vmatpush1.msra.mxu0 %v2027
        %v2029 = vand.u32 %v415, 4294901760
        %2030 = vmatprep.subr.mxu0 %v2029
        %v2031 = vand.u32 %v414, 4294901760
        %2032 = vmatpush1.msra.mxu0 %v2031
        %v2033 = vand.u32 %v417, 4294901760
        %2034 = vmatprep.subr.mxu0 %v2033
        %v2035 = vand.u32 %v416, 4294901760
        %2036 = vmatpush1.msra.mxu0 %v2035
        %v2037 = vand.u32 %v419, 4294901760
        %2038 = vmatprep.subr.mxu0 %v2037
        %v2039 = vand.u32 %v418, 4294901760
        %2040 = vmatpush1.msra.mxu0 %v2039
        %v2041 = vand.u32 %v421, 4294901760
        %2042 = vmatprep.subr.mxu0 %v2041
        %v2043 = vand.u32 %v420, 4294901760
        %2044 = vmatpush1.msra.mxu0 %v2043
        %v2045 = vand.u32 %v423, 4294901760
        %2046 = vmatprep.subr.mxu0 %v2045
        %v2047 = vand.u32 %v422, 4294901760
        %2048 = vmatpush1.msra.mxu0 %v2047
        %v2049 = vand.u32 %v425, 4294901760
        %2050 = vmatprep.subr.mxu0 %v2049
        %v2051 = vand.u32 %v424, 4294901760
        %2052 = vmatpush1.msra.mxu0 %v2051
        %v2053 = vand.u32 %v427, 4294901760
        %2054 = vmatprep.subr.mxu0 %v2053
        %v2055 = vand.u32 %v426, 4294901760
        %2056 = vmatpush1.msra.mxu0 %v2055
        %v2057 = vand.u32 %v429, 4294901760
        %2058 = vmatprep.subr.mxu0 %v2057
        %v2059 = vand.u32 %v428, 4294901760
        %2060 = vmatpush1.msra.mxu0 %v2059
        %v2061 = vand.u32 %v431, 4294901760
        %2062 = vmatprep.subr.mxu0 %v2061
        %v2063 = vand.u32 %v430, 4294901760
        %2064 = vmatpush1.msra.mxu0 %v2063
        %v2065 = vand.u32 %v433, 4294901760
        %2066 = vmatprep.subr.mxu0 %v2065
        %v2067 = vand.u32 %v432, 4294901760
        %2068 = vmatpush1.msra.mxu0 %v2067
        %v2069 = vand.u32 %v435, 4294901760
        %2070 = vmatprep.subr.mxu0 %v2069
        %v2071 = vand.u32 %v434, 4294901760
        %2072 = vmatpush1.msra.mxu0 %v2071
        %v2073 = vand.u32 %v437, 4294901760
        %2074 = vmatprep.subr.mxu0 %v2073
        %v2075 = vand.u32 %v436, 4294901760
        %2076 = vmatpush1.msra.mxu0 %v2075
        %v2077 = vand.u32 %v439, 4294901760
        %2078 = vmatprep.subr.mxu0 %v2077
        %v2079 = vand.u32 %v438, 4294901760
        %2080 = vmatpush1.msra.mxu0 %v2079
        %v2081 = vand.u32 %v441, 4294901760
        %2082 = vmatprep.subr.mxu0 %v2081
        %v2083 = vand.u32 %v440, 4294901760
        %2084 = vmatpush1.msra.mxu0 %v2083
        %v2085 = vand.u32 %v443, 4294901760
        %2086 = vmatprep.subr.mxu0 %v2085
        %v2087 = vand.u32 %v442, 4294901760
        %2088 = vmatpush1.msra.mxu0 %v2087
        %v2089 = vand.u32 %v445, 4294901760
        %2090 = vmatprep.subr.mxu0 %v2089
        %v2091 = vand.u32 %v444, 4294901760
        %2092 = vmatpush1.msra.mxu0 %v2091
        %v2093 = vand.u32 %v447, 4294901760
        %2094 = vmatprep.subr.mxu0 %v2093
        %v2095 = vand.u32 %v446, 4294901760
        %2096 = vmatpush1.msra.mxu0 %v2095
        %v2097 = vand.u32 %v449, 4294901760
        %2098 = vmatprep.subr.mxu0 %v2097
        %v2099 = vand.u32 %v448, 4294901760
        %2100 = vmatpush1.msra.mxu0 %v2099
        %v2101 = vand.u32 %v451, 4294901760
        %2102 = vmatprep.subr.mxu0 %v2101
        %v2103 = vand.u32 %v450, 4294901760
        %2104 = vmatpush1.msra.mxu0 %v2103
        %v2105 = vand.u32 %v373, 4294901760
        %2106 = vmatprep.mubr.f32.mxu0 %v2105
        %v2107 = vand.u32 %v372, 4294901760
        %2108 = vmatmul.mubr.f32.gmra.mrb[0].mxu0 %v2107
        %v2109 = vpop.f32.mrb[0].mxu0
        %v2110 = vadd.f32 %v1917, %v2109
        %v2111 = vpop.f32.mrb[0].mxu0
        %v2112 = vadd.f32 %v1919, %v2111
        %v2113 = vand.u32 %v375, 4294901760
        %2114 = vmatprep.mubr.f32.mxu0 %v2113
        %v2115 = vand.u32 %v374, 4294901760
        %2116 = vmatmul.mubr.f32.gmra.mrb[0].mxu0 %v2115
        %v2117 = vpop.f32.mrb[0].mxu0
        %v2118 = vadd.f32 %v1925, %v2117
        %v2119 = vpop.f32.mrb[0].mxu0
        %v2120 = vadd.f32 %v1927, %v2119
        %v2121 = vand.u32 %v377, 4294901760
        %2122 = vmatprep.mubr.f32.mxu0 %v2121
        %v2123 = vand.u32 %v376, 4294901760
        %2124 = vmatmul.mubr.f32.gmra.mrb[0].mxu0 %v2123
        %v2125 = vpop.f32.mrb[0].mxu0
        %v2126 = vadd.f32 %v1933, %v2125
        %v2127 = vpop.f32.mrb[0].mxu0
        %v2128 = vadd.f32 %v1935, %v2127
        %v2129 = vand.u32 %v379, 4294901760
        %2130 = vmatprep.mubr.f32.mxu0 %v2129
        %v2131 = vand.u32 %v378, 4294901760
        %2132 = vmatmul.mubr.f32.gmra.mrb[0].mxu0 %v2131
        %v2133 = vpop.f32.mrb[0].mxu0
        %v2134 = vadd.f32 %v1941, %v2133
        %v2135 = vpop.f32.mrb[0].mxu0
        %v2136 = vadd.f32 %v1943, %v2135
        %v2137 = vand.u32 %v381, 4294901760
        %2138 = vmatprep.mubr.f32.mxu0 %v2137
        %v2139 = vand.u32 %v380, 4294901760
        %2140 = vmatmul.mubr.f32.gmra.mrb[0].mxu0 %v2139
        %v2141 = vpop.f32.mrb[0].mxu0
        %v2142 = vadd.f32 %v1949, %v2141
        %v2143 = vpop.f32.mrb[0].mxu0
        %v2144 = vadd.f32 %v1951, %v2143
        %v2145 = vand.u32 %v383, 4294901760
        %2146 = vmatprep.mubr.f32.mxu0 %v2145
        %v2147 = vand.u32 %v382, 4294901760
        %2148 = vmatmul.mubr.f32.gmra.mrb[0].mxu0 %v2147
        %v2149 = vpop.f32.mrb[0].mxu0
        %v2150 = vadd.f32 %v1957, %v2149
        %v2151 = vpop.f32.mrb[0].mxu0
        %v2152 = vadd.f32 %v1959, %v2151
        %v2153 = vand.u32 %v385, 4294901760
        %2154 = vmatprep.mubr.f32.mxu0 %v2153
        %v2155 = vand.u32 %v384, 4294901760
        %2156 = vmatmul.mubr.f32.gmra.mrb[0].mxu0 %v2155
        %v2157 = vpop.f32.mrb[0].mxu0
        %v2158 = vadd.f32 %v1965, %v2157
        %v2159 = vpop.f32.mrb[0].mxu0
        %v2160 = vadd.f32 %v1967, %v2159
        %v2161 = vand.u32 %v387, 4294901760
        %2162 = vmatprep.mubr.f32.mxu0 %v2161
        %v2163 = vand.u32 %v386, 4294901760
        %2164 = vmatmul.mubr.f32.gmra.mrb[0].mxu0 %v2163
        %v2165 = vpop.f32.mrb[0].mxu0
        %v2166 = vadd.f32 %v1973, %v2165
        %v2167 = vpop.f32.mrb[0].mxu0
        %v2168 = vadd.f32 %v1975, %v2167
        %2169 = vdwg.mxu0
        %v2170 = vld [vmem:[%s298] sm:$0xff]
        %v2171 = vld [vmem:[%s298 + $0x8] sm:$0xff]
        %v2172 = vld [vmem:[%s298 + $0x10] sm:$0xff]
        %v2173 = vld [vmem:[%s298 + $0x18] sm:$0xff]
        %v2174 = vld [vmem:[%s298 + $0x20] sm:$0xff]
        %v2175 = vld [vmem:[%s298 + $0x28] sm:$0xff]
        %v2176 = vld [vmem:[%s298 + $0x30] sm:$0xff]
        %v2177 = vld [vmem:[%s298 + $0x38] sm:$0xff]
        %v2178 = vld [vmem:[%s298 + $0x40] sm:$0xff]
        %v2179 = vld [vmem:[%s298 + $0x48] sm:$0xff]
        %v2180 = vld [vmem:[%s298 + $0x50] sm:$0xff]
        %v2181 = vld [vmem:[%s298 + $0x58] sm:$0xff]
        %v2182 = vld [vmem:[%s298 + $0x60] sm:$0xff]
        %v2183 = vld [vmem:[%s298 + $0x68] sm:$0xff]
        %v2184 = vld [vmem:[%s298 + $0x70] sm:$0xff]
        %v2185 = vld [vmem:[%s298 + $0x78] sm:$0xff]
        %v2186 = vld [vmem:[%s298 + $0x80] sm:$0xff]
        %v2187 = vld [vmem:[%s298 + $0x88] sm:$0xff]
        %v2188 = vld [vmem:[%s298 + $0x90] sm:$0xff]
        %v2189 = vld [vmem:[%s298 + $0x98] sm:$0xff]
        %v2190 = vld [vmem:[%s298 + $0xa0] sm:$0xff]
        %v2191 = vld [vmem:[%s298 + $0xa8] sm:$0xff]
        %v2192 = vld [vmem:[%s298 + $0xb0] sm:$0xff]
        %v2193 = vld [vmem:[%s298 + $0xb8] sm:$0xff]
        %v2194 = vld [vmem:[%s298 + $0xc0] sm:$0xff]
        %v2195 = vld [vmem:[%s298 + $0xc8] sm:$0xff]
        %v2196 = vld [vmem:[%s298 + $0xd0] sm:$0xff]
        %v2197 = vld [vmem:[%s298 + $0xd8] sm:$0xff]
        %v2198 = vld [vmem:[%s298 + $0xe0] sm:$0xff]
        %v2199 = vld [vmem:[%s298 + $0xe8] sm:$0xff]
        %v2200 = vld [vmem:[%s298 + $0xf0] sm:$0xff]
        %v2201 = vld [vmem:[%s298 + $0xf8] sm:$0xff]
        %v2202 = vld [vmem:[%s298 + $0x100] sm:$0xff]
        %v2203 = vld [vmem:[%s298 + $0x108] sm:$0xff]
        %v2204 = vld [vmem:[%s298 + $0x110] sm:$0xff]
        %v2205 = vld [vmem:[%s298 + $0x118] sm:$0xff]
        %v2206 = vld [vmem:[%s298 + $0x120] sm:$0xff]
        %v2207 = vld [vmem:[%s298 + $0x128] sm:$0xff]
        %v2208 = vld [vmem:[%s298 + $0x130] sm:$0xff]
        %v2209 = vld [vmem:[%s298 + $0x138] sm:$0xff]
        %v2210 = vld [vmem:[%s298 + $0x140] sm:$0xff]
        %v2211 = vld [vmem:[%s298 + $0x148] sm:$0xff]
        %v2212 = vld [vmem:[%s298 + $0x150] sm:$0xff]
        %v2213 = vld [vmem:[%s298 + $0x158] sm:$0xff]
        %v2214 = vld [vmem:[%s298 + $0x160] sm:$0xff]
        %v2215 = vld [vmem:[%s298 + $0x168] sm:$0xff]
        %v2216 = vld [vmem:[%s298 + $0x170] sm:$0xff]
        %v2217 = vld [vmem:[%s298 + $0x178] sm:$0xff]
        %v2218 = vld [vmem:[%s298 + $0x180] sm:$0xff]
        %v2219 = vld [vmem:[%s298 + $0x188] sm:$0xff]
        %v2220 = vld [vmem:[%s298 + $0x190] sm:$0xff]
        %v2221 = vld [vmem:[%s298 + $0x198] sm:$0xff]
        %v2222 = vld [vmem:[%s298 + $0x1a0] sm:$0xff]
        %v2223 = vld [vmem:[%s298 + $0x1a8] sm:$0xff]
        %v2224 = vld [vmem:[%s298 + $0x1b0] sm:$0xff]
        %v2225 = vld [vmem:[%s298 + $0x1b8] sm:$0xff]
        %v2226 = vld [vmem:[%s298 + $0x1c0] sm:$0xff]
        %v2227 = vld [vmem:[%s298 + $0x1c8] sm:$0xff]
        %v2228 = vld [vmem:[%s298 + $0x1d0] sm:$0xff]
        %v2229 = vld [vmem:[%s298 + $0x1d8] sm:$0xff]
        %v2230 = vld [vmem:[%s298 + $0x1e0] sm:$0xff]
        %v2231 = vld [vmem:[%s298 + $0x1e8] sm:$0xff]
        %v2232 = vld [vmem:[%s298 + $0x1f0] sm:$0xff]
        %v2233 = vld [vmem:[%s298 + $0x1f8] sm:$0xff]
        %v2234 = vand.u32 %v2171, 4294901760
        %2235 = vmatprep.subr.mxu0 %v2234
        %v2236 = vand.u32 %v2170, 4294901760
        %2237 = vmatpush1.msra.mxu0 %v2236
        %v2238 = vand.u32 %v2173, 4294901760
        %2239 = vmatprep.subr.mxu0 %v2238
        %v2240 = vand.u32 %v2172, 4294901760
        %2241 = vmatpush1.msra.mxu0 %v2240
        %v2242 = vand.u32 %v2175, 4294901760
        %2243 = vmatprep.subr.mxu0 %v2242
        %v2244 = vand.u32 %v2174, 4294901760
        %2245 = vmatpush1.msra.mxu0 %v2244
        %v2246 = vand.u32 %v2177, 4294901760
        %2247 = vmatprep.subr.mxu0 %v2246
        %v2248 = vand.u32 %v2176, 4294901760
        %2249 = vmatpush1.msra.mxu0 %v2248
        %v2250 = vand.u32 %v2179, 4294901760
        %2251 = vmatprep.subr.mxu0 %v2250
        %v2252 = vand.u32 %v2178, 4294901760
        %2253 = vmatpush1.msra.mxu0 %v2252
        %v2254 = vand.u32 %v2181, 4294901760
        %2255 = vmatprep.subr.mxu0 %v2254
        %v2256 = vand.u32 %v2180, 4294901760
        %2257 = vmatpush1.msra.mxu0 %v2256
        %v2258 = vand.u32 %v2183, 4294901760
        %2259 = vmatprep.subr.mxu0 %v2258
        %v2260 = vand.u32 %v2182, 4294901760
        %2261 = vmatpush1.msra.mxu0 %v2260
        %v2262 = vand.u32 %v2185, 4294901760
        %2263 = vmatprep.subr.mxu0 %v2262
        %v2264 = vand.u32 %v2184, 4294901760
        %2265 = vmatpush1.msra.mxu0 %v2264
        %v2266 = vand.u32 %v2187, 4294901760
        %2267 = vmatprep.subr.mxu0 %v2266
        %v2268 = vand.u32 %v2186, 4294901760
        %2269 = vmatpush1.msra.mxu0 %v2268
        %v2270 = vand.u32 %v2189, 4294901760
        %2271 = vmatprep.subr.mxu0 %v2270
        %v2272 = vand.u32 %v2188, 4294901760
        %2273 = vmatpush1.msra.mxu0 %v2272
        %v2274 = vand.u32 %v2191, 4294901760
        %2275 = vmatprep.subr.mxu0 %v2274
        %v2276 = vand.u32 %v2190, 4294901760
        %2277 = vmatpush1.msra.mxu0 %v2276
        %v2278 = vand.u32 %v2193, 4294901760
        %2279 = vmatprep.subr.mxu0 %v2278
        %v2280 = vand.u32 %v2192, 4294901760
        %2281 = vmatpush1.msra.mxu0 %v2280
        %v2282 = vand.u32 %v2195, 4294901760
        %2283 = vmatprep.subr.mxu0 %v2282
        %v2284 = vand.u32 %v2194, 4294901760
        %2285 = vmatpush1.msra.mxu0 %v2284
        %v2286 = vand.u32 %v2197, 4294901760
        %2287 = vmatprep.subr.mxu0 %v2286
        %v2288 = vand.u32 %v2196, 4294901760
        %2289 = vmatpush1.msra.mxu0 %v2288
        %v2290 = vand.u32 %v2199, 4294901760
        %2291 = vmatprep.subr.mxu0 %v2290
        %v2292 = vand.u32 %v2198, 4294901760
        %2293 = vmatpush1.msra.mxu0 %v2292
        %v2294 = vand.u32 %v2201, 4294901760
        %2295 = vmatprep.subr.mxu0 %v2294
        %v2296 = vand.u32 %v2200, 4294901760
        %2297 = vmatpush1.msra.mxu0 %v2296
        %v2298 = vand.u32 %v2203, 4294901760
        %2299 = vmatprep.subr.mxu0 %v2298
        %v2300 = vand.u32 %v2202, 4294901760
        %2301 = vmatpush1.msra.mxu0 %v2300
        %v2302 = vand.u32 %v2205, 4294901760
        %2303 = vmatprep.subr.mxu0 %v2302
        %v2304 = vand.u32 %v2204, 4294901760
        %2305 = vmatpush1.msra.mxu0 %v2304
        %v2306 = vand.u32 %v2207, 4294901760
        %2307 = vmatprep.subr.mxu0 %v2306
        %v2308 = vand.u32 %v2206, 4294901760
        %2309 = vmatpush1.msra.mxu0 %v2308
        %v2310 = vand.u32 %v2209, 4294901760
        %2311 = vmatprep.subr.mxu0 %v2310
        %v2312 = vand.u32 %v2208, 4294901760
        %2313 = vmatpush1.msra.mxu0 %v2312
        %v2314 = vand.u32 %v2211, 4294901760
        %2315 = vmatprep.subr.mxu0 %v2314
        %v2316 = vand.u32 %v2210, 4294901760
        %2317 = vmatpush1.msra.mxu0 %v2316
        %v2318 = vand.u32 %v2213, 4294901760
        %2319 = vmatprep.subr.mxu0 %v2318
        %v2320 = vand.u32 %v2212, 4294901760
        %2321 = vmatpush1.msra.mxu0 %v2320
        %v2322 = vand.u32 %v2215, 4294901760
        %2323 = vmatprep.subr.mxu0 %v2322
        %v2324 = vand.u32 %v2214, 4294901760
        %2325 = vmatpush1.msra.mxu0 %v2324
        %v2326 = vand.u32 %v2217, 4294901760
        %2327 = vmatprep.subr.mxu0 %v2326
        %v2328 = vand.u32 %v2216, 4294901760
        %2329 = vmatpush1.msra.mxu0 %v2328
        %v2330 = vand.u32 %v2219, 4294901760
        %2331 = vmatprep.subr.mxu0 %v2330
        %v2332 = vand.u32 %v2218, 4294901760
        %2333 = vmatpush1.msra.mxu0 %v2332
        %v2334 = vand.u32 %v2221, 4294901760
        %2335 = vmatprep.subr.mxu0 %v2334
        %v2336 = vand.u32 %v2220, 4294901760
        %2337 = vmatpush1.msra.mxu0 %v2336
        %v2338 = vand.u32 %v2223, 4294901760
        %2339 = vmatprep.subr.mxu0 %v2338
        %v2340 = vand.u32 %v2222, 4294901760
        %2341 = vmatpush1.msra.mxu0 %v2340
        %v2342 = vand.u32 %v2225, 4294901760
        %2343 = vmatprep.subr.mxu0 %v2342
        %v2344 = vand.u32 %v2224, 4294901760
        %2345 = vmatpush1.msra.mxu0 %v2344
        %v2346 = vand.u32 %v2227, 4294901760
        %2347 = vmatprep.subr.mxu0 %v2346
        %v2348 = vand.u32 %v2226, 4294901760
        %2349 = vmatpush1.msra.mxu0 %v2348
        %v2350 = vand.u32 %v2229, 4294901760
        %2351 = vmatprep.subr.mxu0 %v2350
        %v2352 = vand.u32 %v2228, 4294901760
        %2353 = vmatpush1.msra.mxu0 %v2352
        %v2354 = vand.u32 %v2231, 4294901760
        %2355 = vmatprep.subr.mxu0 %v2354
        %v2356 = vand.u32 %v2230, 4294901760
        %2357 = vmatpush1.msra.mxu0 %v2356
        %v2358 = vand.u32 %v2233, 4294901760
        %2359 = vmatprep.subr.mxu0 %v2358
        %v2360 = vand.u32 %v2232, 4294901760
        %2361 = vmatpush1.msra.mxu0 %v2360
        %v2362 = vand.u32 %v373, 4294901760
        %v2363 = vsub.f32 %v373, %v2362
        %v2364 = vand.u32 %v2363, 4294901760
        %v2365 = vsub.f32 %v2363, %v2364
        %v2366 = vand.u32 %v2365, 4294901760
        %2367 = vmatprep.mubr.f32.mxu0 %v2366
        %v2368 = vand.u32 %v372, 4294901760
        %v2369 = vsub.f32 %v372, %v2368
        %v2370 = vand.u32 %v2369, 4294901760
        %v2371 = vsub.f32 %v2369, %v2370
        %v2372 = vand.u32 %v2371, 4294901760
        %2373 = vmatmul.mubr.f32.gmra.mrb[0].mxu0 %v2372
        %v2374 = vpop.f32.mrb[0].mxu0
        %v2375 = vadd.f32 0.0, %v2374
        %v2376 = vpop.f32.mrb[0].mxu0
        %v2377 = vadd.f32 0.0, %v2376
        %v2378 = vand.u32 %v375, 4294901760
        %v2379 = vsub.f32 %v375, %v2378
        %v2380 = vand.u32 %v2379, 4294901760
        %v2381 = vsub.f32 %v2379, %v2380
        %v2382 = vand.u32 %v2381, 4294901760
        %2383 = vmatprep.mubr.f32.mxu0 %v2382
        %v2384 = vand.u32 %v374, 4294901760
        %v2385 = vsub.f32 %v374, %v2384
        %v2386 = vand.u32 %v2385, 4294901760
        %v2387 = vsub.f32 %v2385, %v2386
        %v2388 = vand.u32 %v2387, 4294901760
        %2389 = vmatmul.mubr.f32.gmra.mrb[0].mxu0 %v2388
        %v2390 = vpop.f32.mrb[0].mxu0
        %v2391 = vadd.f32 0.0, %v2390
        %v2392 = vpop.f32.mrb[0].mxu0
        %v2393 = vadd.f32 0.0, %v2392
        %v2394 = vand.u32 %v377, 4294901760
        %v2395 = vsub.f32 %v377, %v2394
        %v2396 = vand.u32 %v2395, 4294901760
        %v2397 = vsub.f32 %v2395, %v2396
        %v2398 = vand.u32 %v2397, 4294901760
        %2399 = vmatprep.mubr.f32.mxu0 %v2398
        %v2400 = vand.u32 %v376, 4294901760
        %v2401 = vsub.f32 %v376, %v2400
        %v2402 = vand.u32 %v2401, 4294901760
        %v2403 = vsub.f32 %v2401, %v2402
        %v2404 = vand.u32 %v2403, 4294901760
        %2405 = vmatmul.mubr.f32.gmra.mrb[0].mxu0 %v2404
        %v2406 = vpop.f32.mrb[0].mxu0
        %v2407 = vadd.f32 0.0, %v2406
        %v2408 = vpop.f32.mrb[0].mxu0
        %v2409 = vadd.f32 0.0, %v2408
        %v2410 = vand.u32 %v379, 4294901760
        %v2411 = vsub.f32 %v379, %v2410
        %v2412 = vand.u32 %v2411, 4294901760
        %v2413 = vsub.f32 %v2411, %v2412
        %v2414 = vand.u32 %v2413, 4294901760
        %2415 = vmatprep.mubr.f32.mxu0 %v2414
        %v2416 = vand.u32 %v378, 4294901760
        %v2417 = vsub.f32 %v378, %v2416
        %v2418 = vand.u32 %v2417, 4294901760
        %v2419 = vsub.f32 %v2417, %v2418
        %v2420 = vand.u32 %v2419, 4294901760
        %2421 = vmatmul.mubr.f32.gmra.mrb[0].mxu0 %v2420
        %v2422 = vpop.f32.mrb[0].mxu0
        %v2423 = vadd.f32 0.0, %v2422
        %v2424 = vpop.f32.mrb[0].mxu0
        %v2425 = vadd.f32 0.0, %v2424
        %v2426 = vand.u32 %v381, 4294901760
        %v2427 = vsub.f32 %v381, %v2426
        %v2428 = vand.u32 %v2427, 4294901760
        %v2429 = vsub.f32 %v2427, %v2428
        %v2430 = vand.u32 %v2429, 4294901760
        %2431 = vmatprep.mubr.f32.mxu0 %v2430
        %v2432 = vand.u32 %v380, 4294901760
        %v2433 = vsub.f32 %v380, %v2432
        %v2434 = vand.u32 %v2433, 4294901760
        %v2435 = vsub.f32 %v2433, %v2434
        %v2436 = vand.u32 %v2435, 4294901760
        %2437 = vmatmul.mubr.f32.gmra.mrb[0].mxu0 %v2436
        %v2438 = vpop.f32.mrb[0].mxu0
        %v2439 = vadd.f32 0.0, %v2438
        %v2440 = vpop.f32.mrb[0].mxu0
        %v2441 = vadd.f32 0.0, %v2440
        %v2442 = vand.u32 %v383, 4294901760
        %v2443 = vsub.f32 %v383, %v2442
        %v2444 = vand.u32 %v2443, 4294901760
        %v2445 = vsub.f32 %v2443, %v2444
        %v2446 = vand.u32 %v2445, 4294901760
        %2447 = vmatprep.mubr.f32.mxu0 %v2446
        %v2448 = vand.u32 %v382, 4294901760
        %v2449 = vsub.f32 %v382, %v2448
        %v2450 = vand.u32 %v2449, 4294901760
        %v2451 = vsub.f32 %v2449, %v2450
        %v2452 = vand.u32 %v2451, 4294901760
        %2453 = vmatmul.mubr.f32.gmra.mrb[0].mxu0 %v2452
        %v2454 = vpop.f32.mrb[0].mxu0
        %v2455 = vadd.f32 0.0, %v2454
        %v2456 = vpop.f32.mrb[0].mxu0
        %v2457 = vadd.f32 0.0, %v2456
        %v2458 = vand.u32 %v385, 4294901760
        %v2459 = vsub.f32 %v385, %v2458
        %v2460 = vand.u32 %v2459, 4294901760
        %v2461 = vsub.f32 %v2459, %v2460
        %v2462 = vand.u32 %v2461, 4294901760
        %2463 = vmatprep.mubr.f32.mxu0 %v2462
        %v2464 = vand.u32 %v384, 4294901760
        %v2465 = vsub.f32 %v384, %v2464
        %v2466 = vand.u32 %v2465, 4294901760
        %v2467 = vsub.f32 %v2465, %v2466
        %v2468 = vand.u32 %v2467, 4294901760
        %2469 = vmatmul.mubr.f32.gmra.mrb[0].mxu0 %v2468
        %v2470 = vpop.f32.mrb[0].mxu0
        %v2471 = vadd.f32 0.0, %v2470
        %v2472 = vpop.f32.mrb[0].mxu0
        %v2473 = vadd.f32 0.0, %v2472
        %v2474 = vand.u32 %v387, 4294901760
        %v2475 = vsub.f32 %v387, %v2474
        %v2476 = vand.u32 %v2475, 4294901760
        %v2477 = vsub.f32 %v2475, %v2476
        %v2478 = vand.u32 %v2477, 4294901760
        %2479 = vmatprep.mubr.f32.mxu0 %v2478
        %v2480 = vand.u32 %v386, 4294901760
        %v2481 = vsub.f32 %v386, %v2480
        %v2482 = vand.u32 %v2481, 4294901760
        %v2483 = vsub.f32 %v2481, %v2482
        %v2484 = vand.u32 %v2483, 4294901760
        %2485 = vmatmul.mubr.f32.gmra.mrb[0].mxu0 %v2484
        %v2486 = vpop.f32.mrb[0].mxu0
        %v2487 = vadd.f32 0.0, %v2486
        %v2488 = vpop.f32.mrb[0].mxu0
        %v2489 = vadd.f32 0.0, %v2488
        %2490 = vdwg.mxu0
        %v2491 = vand.u32 %v2171, 4294901760
        %v2492 = vsub.f32 %v2171, %v2491
        %v2493 = vand.u32 %v2492, 4294901760
        %v2494 = vsub.f32 %v2492, %v2493
        %v2495 = vand.u32 %v2494, 4294901760
        %2496 = vmatprep.subr.mxu0 %v2495
        %v2497 = vand.u32 %v2170, 4294901760
        %v2498 = vsub.f32 %v2170, %v2497
        %v2499 = vand.u32 %v2498, 4294901760
        %v2500 = vsub.f32 %v2498, %v2499
        %v2501 = vand.u32 %v2500, 4294901760
        %2502 = vmatpush1.msra.mxu0 %v2501
        %v2503 = vand.u32 %v2173, 4294901760
        %v2504 = vsub.f32 %v2173, %v2503
        %v2505 = vand.u32 %v2504, 4294901760
        %v2506 = vsub.f32 %v2504, %v2505
        %v2507 = vand.u32 %v2506, 4294901760
        %2508 = vmatprep.subr.mxu0 %v2507
        %v2509 = vand.u32 %v2172, 4294901760
        %v2510 = vsub.f32 %v2172, %v2509
        %v2511 = vand.u32 %v2510, 4294901760
        %v2512 = vsub.f32 %v2510, %v2511
        %v2513 = vand.u32 %v2512, 4294901760
        %2514 = vmatpush1.msra.mxu0 %v2513
        %v2515 = vand.u32 %v2175, 4294901760
        %v2516 = vsub.f32 %v2175, %v2515
        %v2517 = vand.u32 %v2516, 4294901760
        %v2518 = vsub.f32 %v2516, %v2517
        %v2519 = vand.u32 %v2518, 4294901760
        %2520 = vmatprep.subr.mxu0 %v2519
        %v2521 = vand.u32 %v2174, 4294901760
        %v2522 = vsub.f32 %v2174, %v2521
        %v2523 = vand.u32 %v2522, 4294901760
        %v2524 = vsub.f32 %v2522, %v2523
        %v2525 = vand.u32 %v2524, 4294901760
        %2526 = vmatpush1.msra.mxu0 %v2525
        %v2527 = vand.u32 %v2177, 4294901760
        %v2528 = vsub.f32 %v2177, %v2527
        %v2529 = vand.u32 %v2528, 4294901760
        %v2530 = vsub.f32 %v2528, %v2529
        %v2531 = vand.u32 %v2530, 4294901760
        %2532 = vmatprep.subr.mxu0 %v2531
        %v2533 = vand.u32 %v2176, 4294901760
        %v2534 = vsub.f32 %v2176, %v2533
        %v2535 = vand.u32 %v2534, 4294901760
        %v2536 = vsub.f32 %v2534, %v2535
        %v2537 = vand.u32 %v2536, 4294901760
        %2538 = vmatpush1.msra.mxu0 %v2537
        %v2539 = vand.u32 %v2179, 4294901760
        %v2540 = vsub.f32 %v2179, %v2539
        %v2541 = vand.u32 %v2540, 4294901760
        %v2542 = vsub.f32 %v2540, %v2541
        %v2543 = vand.u32 %v2542, 4294901760
        %2544 = vmatprep.subr.mxu0 %v2543
        %v2545 = vand.u32 %v2178, 4294901760
        %v2546 = vsub.f32 %v2178, %v2545
        %v2547 = vand.u32 %v2546, 4294901760
        %v2548 = vsub.f32 %v2546, %v2547
        %v2549 = vand.u32 %v2548, 4294901760
        %2550 = vmatpush1.msra.mxu0 %v2549
        %v2551 = vand.u32 %v2181, 4294901760
        %v2552 = vsub.f32 %v2181, %v2551
        %v2553 = vand.u32 %v2552, 4294901760
        %v2554 = vsub.f32 %v2552, %v2553
        %v2555 = vand.u32 %v2554, 4294901760
        %2556 = vmatprep.subr.mxu0 %v2555
        %v2557 = vand.u32 %v2180, 4294901760
        %v2558 = vsub.f32 %v2180, %v2557
        %v2559 = vand.u32 %v2558, 4294901760
        %v2560 = vsub.f32 %v2558, %v2559
        %v2561 = vand.u32 %v2560, 4294901760
        %2562 = vmatpush1.msra.mxu0 %v2561
        %v2563 = vand.u32 %v2183, 4294901760
        %v2564 = vsub.f32 %v2183, %v2563
        %v2565 = vand.u32 %v2564, 4294901760
        %v2566 = vsub.f32 %v2564, %v2565
        %v2567 = vand.u32 %v2566, 4294901760
        %2568 = vmatprep.subr.mxu0 %v2567
        %v2569 = vand.u32 %v2182, 4294901760
        %v2570 = vsub.f32 %v2182, %v2569
        %v2571 = vand.u32 %v2570, 4294901760
        %v2572 = vsub.f32 %v2570, %v2571
        %v2573 = vand.u32 %v2572, 4294901760
        %2574 = vmatpush1.msra.mxu0 %v2573
        %v2575 = vand.u32 %v2185, 4294901760
        %v2576 = vsub.f32 %v2185, %v2575
        %v2577 = vand.u32 %v2576, 4294901760
        %v2578 = vsub.f32 %v2576, %v2577
        %v2579 = vand.u32 %v2578, 4294901760
        %2580 = vmatprep.subr.mxu0 %v2579
        %v2581 = vand.u32 %v2184, 4294901760
        %v2582 = vsub.f32 %v2184, %v2581
        %v2583 = vand.u32 %v2582, 4294901760
        %v2584 = vsub.f32 %v2582, %v2583
        %v2585 = vand.u32 %v2584, 4294901760
        %2586 = vmatpush1.msra.mxu0 %v2585
        %v2587 = vand.u32 %v2187, 4294901760
        %v2588 = vsub.f32 %v2187, %v2587
        %v2589 = vand.u32 %v2588, 4294901760
        %v2590 = vsub.f32 %v2588, %v2589
        %v2591 = vand.u32 %v2590, 4294901760
        %2592 = vmatprep.subr.mxu0 %v2591
        %v2593 = vand.u32 %v2186, 4294901760
        %v2594 = vsub.f32 %v2186, %v2593
        %v2595 = vand.u32 %v2594, 4294901760
        %v2596 = vsub.f32 %v2594, %v2595
        %v2597 = vand.u32 %v2596, 4294901760
        %2598 = vmatpush1.msra.mxu0 %v2597
        %v2599 = vand.u32 %v2189, 4294901760
        %v2600 = vsub.f32 %v2189, %v2599
        %v2601 = vand.u32 %v2600, 4294901760
        %v2602 = vsub.f32 %v2600, %v2601
        %v2603 = vand.u32 %v2602, 4294901760
        %2604 = vmatprep.subr.mxu0 %v2603
        %v2605 = vand.u32 %v2188, 4294901760
        %v2606 = vsub.f32 %v2188, %v2605
        %v2607 = vand.u32 %v2606, 4294901760
        %v2608 = vsub.f32 %v2606, %v2607
        %v2609 = vand.u32 %v2608, 4294901760
        %2610 = vmatpush1.msra.mxu0 %v2609
        %v2611 = vand.u32 %v2191, 4294901760
        %v2612 = vsub.f32 %v2191, %v2611
        %v2613 = vand.u32 %v2612, 4294901760
        %v2614 = vsub.f32 %v2612, %v2613
        %v2615 = vand.u32 %v2614, 4294901760
        %2616 = vmatprep.subr.mxu0 %v2615
        %v2617 = vand.u32 %v2190, 4294901760
        %v2618 = vsub.f32 %v2190, %v2617
        %v2619 = vand.u32 %v2618, 4294901760
        %v2620 = vsub.f32 %v2618, %v2619
        %v2621 = vand.u32 %v2620, 4294901760
        %2622 = vmatpush1.msra.mxu0 %v2621
        %v2623 = vand.u32 %v2193, 4294901760
        %v2624 = vsub.f32 %v2193, %v2623
        %v2625 = vand.u32 %v2624, 4294901760
        %v2626 = vsub.f32 %v2624, %v2625
        %v2627 = vand.u32 %v2626, 4294901760
        %2628 = vmatprep.subr.mxu0 %v2627
        %v2629 = vand.u32 %v2192, 4294901760
        %v2630 = vsub.f32 %v2192, %v2629
        %v2631 = vand.u32 %v2630, 4294901760
        %v2632 = vsub.f32 %v2630, %v2631
        %v2633 = vand.u32 %v2632, 4294901760
        %2634 = vmatpush1.msra.mxu0 %v2633
        %v2635 = vand.u32 %v2195, 4294901760
        %v2636 = vsub.f32 %v2195, %v2635
        %v2637 = vand.u32 %v2636, 4294901760
        %v2638 = vsub.f32 %v2636, %v2637
        %v2639 = vand.u32 %v2638, 4294901760
        %2640 = vmatprep.subr.mxu0 %v2639
        %v2641 = vand.u32 %v2194, 4294901760
        %v2642 = vsub.f32 %v2194, %v2641
        %v2643 = vand.u32 %v2642, 4294901760
        %v2644 = vsub.f32 %v2642, %v2643
        %v2645 = vand.u32 %v2644, 4294901760
        %2646 = vmatpush1.msra.mxu0 %v2645
        %v2647 = vand.u32 %v2197, 4294901760
        %v2648 = vsub.f32 %v2197, %v2647
        %v2649 = vand.u32 %v2648, 4294901760
        %v2650 = vsub.f32 %v2648, %v2649
        %v2651 = vand.u32 %v2650, 4294901760
        %2652 = vmatprep.subr.mxu0 %v2651
        %v2653 = vand.u32 %v2196, 4294901760
        %v2654 = vsub.f32 %v2196, %v2653
        %v2655 = vand.u32 %v2654, 4294901760
        %v2656 = vsub.f32 %v2654, %v2655
        %v2657 = vand.u32 %v2656, 4294901760
        %2658 = vmatpush1.msra.mxu0 %v2657
        %v2659 = vand.u32 %v2199, 4294901760
        %v2660 = vsub.f32 %v2199, %v2659
        %v2661 = vand.u32 %v2660, 4294901760
        %v2662 = vsub.f32 %v2660, %v2661
        %v2663 = vand.u32 %v2662, 4294901760
        %2664 = vmatprep.subr.mxu0 %v2663
        %v2665 = vand.u32 %v2198, 4294901760
        %v2666 = vsub.f32 %v2198, %v2665
        %v2667 = vand.u32 %v2666, 4294901760
        %v2668 = vsub.f32 %v2666, %v2667
        %v2669 = vand.u32 %v2668, 4294901760
        %2670 = vmatpush1.msra.mxu0 %v2669
        %v2671 = vand.u32 %v2201, 4294901760
        %v2672 = vsub.f32 %v2201, %v2671
        %v2673 = vand.u32 %v2672, 4294901760
        %v2674 = vsub.f32 %v2672, %v2673
        %v2675 = vand.u32 %v2674, 4294901760
        %2676 = vmatprep.subr.mxu0 %v2675
        %v2677 = vand.u32 %v2200, 4294901760
        %v2678 = vsub.f32 %v2200, %v2677
        %v2679 = vand.u32 %v2678, 4294901760
        %v2680 = vsub.f32 %v2678, %v2679
        %v2681 = vand.u32 %v2680, 4294901760
        %2682 = vmatpush1.msra.mxu0 %v2681
        %v2683 = vand.u32 %v2203, 4294901760
        %v2684 = vsub.f32 %v2203, %v2683
        %v2685 = vand.u32 %v2684, 4294901760
        %v2686 = vsub.f32 %v2684, %v2685
        %v2687 = vand.u32 %v2686, 4294901760
        %2688 = vmatprep.subr.mxu0 %v2687
        %v2689 = vand.u32 %v2202, 4294901760
        %v2690 = vsub.f32 %v2202, %v2689
        %v2691 = vand.u32 %v2690, 4294901760
        %v2692 = vsub.f32 %v2690, %v2691
        %v2693 = vand.u32 %v2692, 4294901760
        %2694 = vmatpush1.msra.mxu0 %v2693
        %v2695 = vand.u32 %v2205, 4294901760
        %v2696 = vsub.f32 %v2205, %v2695
        %v2697 = vand.u32 %v2696, 4294901760
        %v2698 = vsub.f32 %v2696, %v2697
        %v2699 = vand.u32 %v2698, 4294901760
        %2700 = vmatprep.subr.mxu0 %v2699
        %v2701 = vand.u32 %v2204, 4294901760
        %v2702 = vsub.f32 %v2204, %v2701
        %v2703 = vand.u32 %v2702, 4294901760
        %v2704 = vsub.f32 %v2702, %v2703
        %v2705 = vand.u32 %v2704, 4294901760
        %2706 = vmatpush1.msra.mxu0 %v2705
        %v2707 = vand.u32 %v2207, 4294901760
        %v2708 = vsub.f32 %v2207, %v2707
        %v2709 = vand.u32 %v2708, 4294901760
        %v2710 = vsub.f32 %v2708, %v2709
        %v2711 = vand.u32 %v2710, 4294901760
        %2712 = vmatprep.subr.mxu0 %v2711
        %v2713 = vand.u32 %v2206, 4294901760
        %v2714 = vsub.f32 %v2206, %v2713
        %v2715 = vand.u32 %v2714, 4294901760
        %v2716 = vsub.f32 %v2714, %v2715
        %v2717 = vand.u32 %v2716, 4294901760
        %2718 = vmatpush1.msra.mxu0 %v2717
        %v2719 = vand.u32 %v2209, 4294901760
        %v2720 = vsub.f32 %v2209, %v2719
        %v2721 = vand.u32 %v2720, 4294901760
        %v2722 = vsub.f32 %v2720, %v2721
        %v2723 = vand.u32 %v2722, 4294901760
        %2724 = vmatprep.subr.mxu0 %v2723
        %v2725 = vand.u32 %v2208, 4294901760
        %v2726 = vsub.f32 %v2208, %v2725
        %v2727 = vand.u32 %v2726, 4294901760
        %v2728 = vsub.f32 %v2726, %v2727
        %v2729 = vand.u32 %v2728, 4294901760
        %2730 = vmatpush1.msra.mxu0 %v2729
        %v2731 = vand.u32 %v2211, 4294901760
        %v2732 = vsub.f32 %v2211, %v2731
        %v2733 = vand.u32 %v2732, 4294901760
        %v2734 = vsub.f32 %v2732, %v2733
        %v2735 = vand.u32 %v2734, 4294901760
        %2736 = vmatprep.subr.mxu0 %v2735
        %v2737 = vand.u32 %v2210, 4294901760
        %v2738 = vsub.f32 %v2210, %v2737
        %v2739 = vand.u32 %v2738, 4294901760
        %v2740 = vsub.f32 %v2738, %v2739
        %v2741 = vand.u32 %v2740, 4294901760
        %2742 = vmatpush1.msra.mxu0 %v2741
        %v2743 = vand.u32 %v2213, 4294901760
        %v2744 = vsub.f32 %v2213, %v2743
        %v2745 = vand.u32 %v2744, 4294901760
        %v2746 = vsub.f32 %v2744, %v2745
        %v2747 = vand.u32 %v2746, 4294901760
        %2748 = vmatprep.subr.mxu0 %v2747
        %v2749 = vand.u32 %v2212, 4294901760
        %v2750 = vsub.f32 %v2212, %v2749
        %v2751 = vand.u32 %v2750, 4294901760
        %v2752 = vsub.f32 %v2750, %v2751
        %v2753 = vand.u32 %v2752, 4294901760
        %2754 = vmatpush1.msra.mxu0 %v2753
        %v2755 = vand.u32 %v2215, 4294901760
        %v2756 = vsub.f32 %v2215, %v2755
        %v2757 = vand.u32 %v2756, 4294901760
        %v2758 = vsub.f32 %v2756, %v2757
        %v2759 = vand.u32 %v2758, 4294901760
        %2760 = vmatprep.subr.mxu0 %v2759
        %v2761 = vand.u32 %v2214, 4294901760
        %v2762 = vsub.f32 %v2214, %v2761
        %v2763 = vand.u32 %v2762, 4294901760
        %v2764 = vsub.f32 %v2762, %v2763
        %v2765 = vand.u32 %v2764, 4294901760
        %2766 = vmatpush1.msra.mxu0 %v2765
        %v2767 = vand.u32 %v2217, 4294901760
        %v2768 = vsub.f32 %v2217, %v2767
        %v2769 = vand.u32 %v2768, 4294901760
        %v2770 = vsub.f32 %v2768, %v2769
        %v2771 = vand.u32 %v2770, 4294901760
        %2772 = vmatprep.subr.mxu0 %v2771
        %v2773 = vand.u32 %v2216, 4294901760
        %v2774 = vsub.f32 %v2216, %v2773
        %v2775 = vand.u32 %v2774, 4294901760
        %v2776 = vsub.f32 %v2774, %v2775
        %v2777 = vand.u32 %v2776, 4294901760
        %2778 = vmatpush1.msra.mxu0 %v2777
        %v2779 = vand.u32 %v2219, 4294901760
        %v2780 = vsub.f32 %v2219, %v2779
        %v2781 = vand.u32 %v2780, 4294901760
        %v2782 = vsub.f32 %v2780, %v2781
        %v2783 = vand.u32 %v2782, 4294901760
        %2784 = vmatprep.subr.mxu0 %v2783
        %v2785 = vand.u32 %v2218, 4294901760
        %v2786 = vsub.f32 %v2218, %v2785
        %v2787 = vand.u32 %v2786, 4294901760
        %v2788 = vsub.f32 %v2786, %v2787
        %v2789 = vand.u32 %v2788, 4294901760
        %2790 = vmatpush1.msra.mxu0 %v2789
        %v2791 = vand.u32 %v2221, 4294901760
        %v2792 = vsub.f32 %v2221, %v2791
        %v2793 = vand.u32 %v2792, 4294901760
        %v2794 = vsub.f32 %v2792, %v2793
        %v2795 = vand.u32 %v2794, 4294901760
        %2796 = vmatprep.subr.mxu0 %v2795
        %v2797 = vand.u32 %v2220, 4294901760
        %v2798 = vsub.f32 %v2220, %v2797
        %v2799 = vand.u32 %v2798, 4294901760
        %v2800 = vsub.f32 %v2798, %v2799
        %v2801 = vand.u32 %v2800, 4294901760
        %2802 = vmatpush1.msra.mxu0 %v2801
        %v2803 = vand.u32 %v2223, 4294901760
        %v2804 = vsub.f32 %v2223, %v2803
        %v2805 = vand.u32 %v2804, 4294901760
        %v2806 = vsub.f32 %v2804, %v2805
        %v2807 = vand.u32 %v2806, 4294901760
        %2808 = vmatprep.subr.mxu0 %v2807
        %v2809 = vand.u32 %v2222, 4294901760
        %v2810 = vsub.f32 %v2222, %v2809
        %v2811 = vand.u32 %v2810, 4294901760
        %v2812 = vsub.f32 %v2810, %v2811
        %v2813 = vand.u32 %v2812, 4294901760
        %2814 = vmatpush1.msra.mxu0 %v2813
        %v2815 = vand.u32 %v2225, 4294901760
        %v2816 = vsub.f32 %v2225, %v2815
        %v2817 = vand.u32 %v2816, 4294901760
        %v2818 = vsub.f32 %v2816, %v2817
        %v2819 = vand.u32 %v2818, 4294901760
        %2820 = vmatprep.subr.mxu0 %v2819
        %v2821 = vand.u32 %v2224, 4294901760
        %v2822 = vsub.f32 %v2224, %v2821
        %v2823 = vand.u32 %v2822, 4294901760
        %v2824 = vsub.f32 %v2822, %v2823
        %v2825 = vand.u32 %v2824, 4294901760
        %2826 = vmatpush1.msra.mxu0 %v2825
        %v2827 = vand.u32 %v2227, 4294901760
        %v2828 = vsub.f32 %v2227, %v2827
        %v2829 = vand.u32 %v2828, 4294901760
        %v2830 = vsub.f32 %v2828, %v2829
        %v2831 = vand.u32 %v2830, 4294901760
        %2832 = vmatprep.subr.mxu0 %v2831
        %v2833 = vand.u32 %v2226, 4294901760
        %v2834 = vsub.f32 %v2226, %v2833
        %v2835 = vand.u32 %v2834, 4294901760
        %v2836 = vsub.f32 %v2834, %v2835
        %v2837 = vand.u32 %v2836, 4294901760
        %2838 = vmatpush1.msra.mxu0 %v2837
        %v2839 = vand.u32 %v2229, 4294901760
        %v2840 = vsub.f32 %v2229, %v2839
        %v2841 = vand.u32 %v2840, 4294901760
        %v2842 = vsub.f32 %v2840, %v2841
        %v2843 = vand.u32 %v2842, 4294901760
        %2844 = vmatprep.subr.mxu0 %v2843
        %v2845 = vand.u32 %v2228, 4294901760
        %v2846 = vsub.f32 %v2228, %v2845
        %v2847 = vand.u32 %v2846, 4294901760
        %v2848 = vsub.f32 %v2846, %v2847
        %v2849 = vand.u32 %v2848, 4294901760
        %2850 = vmatpush1.msra.mxu0 %v2849
        %v2851 = vand.u32 %v2231, 4294901760
        %v2852 = vsub.f32 %v2231, %v2851
        %v2853 = vand.u32 %v2852, 4294901760
        %v2854 = vsub.f32 %v2852, %v2853
        %v2855 = vand.u32 %v2854, 4294901760
        %2856 = vmatprep.subr.mxu0 %v2855
        %v2857 = vand.u32 %v2230, 4294901760
        %v2858 = vsub.f32 %v2230, %v2857
        %v2859 = vand.u32 %v2858, 4294901760
        %v2860 = vsub.f32 %v2858, %v2859
        %v2861 = vand.u32 %v2860, 4294901760
        %2862 = vmatpush1.msra.mxu0 %v2861
        %v2863 = vand.u32 %v2233, 4294901760
        %v2864 = vsub.f32 %v2233, %v2863
        %v2865 = vand.u32 %v2864, 4294901760
        %v2866 = vsub.f32 %v2864, %v2865
        %v2867 = vand.u32 %v2866, 4294901760
        %2868 = vmatprep.subr.mxu0 %v2867
        %v2869 = vand.u32 %v2232, 4294901760
        %v2870 = vsub.f32 %v2232, %v2869
        %v2871 = vand.u32 %v2870, 4294901760
        %v2872 = vsub.f32 %v2870, %v2871
        %v2873 = vand.u32 %v2872, 4294901760
        %2874 = vmatpush1.msra.mxu0 %v2873
        %v2875 = vand.u32 %v373, 4294901760
        %2876 = vmatprep.mubr.f32.mxu0 %v2875
        %v2877 = vand.u32 %v372, 4294901760
        %2878 = vmatmul.mubr.f32.gmra.mrb[0].mxu0 %v2877
        %v2879 = vpop.f32.mrb[0].mxu0
        %v2880 = vadd.f32 %v2375, %v2879
        %v2881 = vpop.f32.mrb[0].mxu0
        %v2882 = vadd.f32 %v2377, %v2881
        %v2883 = vand.u32 %v375, 4294901760
        %2884 = vmatprep.mubr.f32.mxu0 %v2883
        %v2885 = vand.u32 %v374, 4294901760
        %2886 = vmatmul.mubr.f32.gmra.mrb[0].mxu0 %v2885
        %v2887 = vpop.f32.mrb[0].mxu0
        %v2888 = vadd.f32 %v2391, %v2887
        %v2889 = vpop.f32.mrb[0].mxu0
        %v2890 = vadd.f32 %v2393, %v2889
        %v2891 = vand.u32 %v377, 4294901760
        %2892 = vmatprep.mubr.f32.mxu0 %v2891
        %v2893 = vand.u32 %v376, 4294901760
        %2894 = vmatmul.mubr.f32.gmra.mrb[0].mxu0 %v2893
        %v2895 = vpop.f32.mrb[0].mxu0
        %v2896 = vadd.f32 %v2407, %v2895
        %v2897 = vpop.f32.mrb[0].mxu0
        %v2898 = vadd.f32 %v2409, %v2897
        %v2899 = vand.u32 %v379, 4294901760
        %2900 = vmatprep.mubr.f32.mxu0 %v2899
        %v2901 = vand.u32 %v378, 4294901760
        %2902 = vmatmul.mubr.f32.gmra.mrb[0].mxu0 %v2901
        %v2903 = vpop.f32.mrb[0].mxu0
        %v2904 = vadd.f32 %v2423, %v2903
        %v2905 = vpop.f32.mrb[0].mxu0
        %v2906 = vadd.f32 %v2425, %v2905
        %v2907 = vand.u32 %v381, 4294901760
        %2908 = vmatprep.mubr.f32.mxu0 %v2907
        %v2909 = vand.u32 %v380, 4294901760
        %2910 = vmatmul.mubr.f32.gmra.mrb[0].mxu0 %v2909
        %v2911 = vpop.f32.mrb[0].mxu0
        %v2912 = vadd.f32 %v2439, %v2911
        %v2913 = vpop.f32.mrb[0].mxu0
        %v2914 = vadd.f32 %v2441, %v2913
        %v2915 = vand.u32 %v383, 4294901760
        %2916 = vmatprep.mubr.f32.mxu0 %v2915
        %v2917 = vand.u32 %v382, 4294901760
        %2918 = vmatmul.mubr.f32.gmra.mrb[0].mxu0 %v2917
        %v2919 = vpop.f32.mrb[0].mxu0
        %v2920 = vadd.f32 %v2455, %v2919
        %v2921 = vpop.f32.mrb[0].mxu0
        %v2922 = vadd.f32 %v2457, %v2921
        %v2923 = vand.u32 %v385, 4294901760
        %2924 = vmatprep.mubr.f32.mxu0 %v2923
        %v2925 = vand.u32 %v384, 4294901760
        %2926 = vmatmul.mubr.f32.gmra.mrb[0].mxu0 %v2925
        %v2927 = vpop.f32.mrb[0].mxu0
        %v2928 = vadd.f32 %v2471, %v2927
        %v2929 = vpop.f32.mrb[0].mxu0
        %v2930 = vadd.f32 %v2473, %v2929
        %v2931 = vand.u32 %v387, 4294901760
        %2932 = vmatprep.mubr.f32.mxu0 %v2931
        %v2933 = vand.u32 %v386, 4294901760
        %2934 = vmatmul.mubr.f32.gmra.mrb[0].mxu0 %v2933
        %v2935 = vpop.f32.mrb[0].mxu0
        %v2936 = vadd.f32 %v2487, %v2935
        %v2937 = vpop.f32.mrb[0].mxu0
        %v2938 = vadd.f32 %v2489, %v2937
        %2939 = vdwg.mxu0
        %v2940 = vand.u32 %v2171, 4294901760
        %v2941 = vsub.f32 %v2171, %v2940
        %2942 = vmatprep.subr.mxu0 %v2941
        %v2943 = vand.u32 %v2170, 4294901760
        %v2944 = vsub.f32 %v2170, %v2943
        %2945 = vmatpush1.msra.mxu0 %v2944
        %v2946 = vand.u32 %v2173, 4294901760
        %v2947 = vsub.f32 %v2173, %v2946
        %2948 = vmatprep.subr.mxu0 %v2947
        %v2949 = vand.u32 %v2172, 4294901760
        %v2950 = vsub.f32 %v2172, %v2949
        %2951 = vmatpush1.msra.mxu0 %v2950
        %v2952 = vand.u32 %v2175, 4294901760
        %v2953 = vsub.f32 %v2175, %v2952
        %2954 = vmatprep.subr.mxu0 %v2953
        %v2955 = vand.u32 %v2174, 4294901760
        %v2956 = vsub.f32 %v2174, %v2955
        %2957 = vmatpush1.msra.mxu0 %v2956
        %v2958 = vand.u32 %v2177, 4294901760
        %v2959 = vsub.f32 %v2177, %v2958
        %2960 = vmatprep.subr.mxu0 %v2959
        %v2961 = vand.u32 %v2176, 4294901760
        %v2962 = vsub.f32 %v2176, %v2961
        %2963 = vmatpush1.msra.mxu0 %v2962
        %v2964 = vand.u32 %v2179, 4294901760
        %v2965 = vsub.f32 %v2179, %v2964
        %2966 = vmatprep.subr.mxu0 %v2965
        %v2967 = vand.u32 %v2178, 4294901760
        %v2968 = vsub.f32 %v2178, %v2967
        %2969 = vmatpush1.msra.mxu0 %v2968
        %v2970 = vand.u32 %v2181, 4294901760
        %v2971 = vsub.f32 %v2181, %v2970
        %2972 = vmatprep.subr.mxu0 %v2971
        %v2973 = vand.u32 %v2180, 4294901760
        %v2974 = vsub.f32 %v2180, %v2973
        %2975 = vmatpush1.msra.mxu0 %v2974
        %v2976 = vand.u32 %v2183, 4294901760
        %v2977 = vsub.f32 %v2183, %v2976
        %2978 = vmatprep.subr.mxu0 %v2977
        %v2979 = vand.u32 %v2182, 4294901760
        %v2980 = vsub.f32 %v2182, %v2979
        %2981 = vmatpush1.msra.mxu0 %v2980
        %v2982 = vand.u32 %v2185, 4294901760
        %v2983 = vsub.f32 %v2185, %v2982
        %2984 = vmatprep.subr.mxu0 %v2983
        %v2985 = vand.u32 %v2184, 4294901760
        %v2986 = vsub.f32 %v2184, %v2985
        %2987 = vmatpush1.msra.mxu0 %v2986
        %v2988 = vand.u32 %v2187, 4294901760
        %v2989 = vsub.f32 %v2187, %v2988
        %2990 = vmatprep.subr.mxu0 %v2989
        %v2991 = vand.u32 %v2186, 4294901760
        %v2992 = vsub.f32 %v2186, %v2991
        %2993 = vmatpush1.msra.mxu0 %v2992
        %v2994 = vand.u32 %v2189, 4294901760
        %v2995 = vsub.f32 %v2189, %v2994
        %2996 = vmatprep.subr.mxu0 %v2995
        %v2997 = vand.u32 %v2188, 4294901760
        %v2998 = vsub.f32 %v2188, %v2997
        %2999 = vmatpush1.msra.mxu0 %v2998
        %v3000 = vand.u32 %v2191, 4294901760
        %v3001 = vsub.f32 %v2191, %v3000
        %3002 = vmatprep.subr.mxu0 %v3001
        %v3003 = vand.u32 %v2190, 4294901760
        %v3004 = vsub.f32 %v2190, %v3003
        %3005 = vmatpush1.msra.mxu0 %v3004
        %v3006 = vand.u32 %v2193, 4294901760
        %v3007 = vsub.f32 %v2193, %v3006
        %3008 = vmatprep.subr.mxu0 %v3007
        %v3009 = vand.u32 %v2192, 4294901760
        %v3010 = vsub.f32 %v2192, %v3009
        %3011 = vmatpush1.msra.mxu0 %v3010
        %v3012 = vand.u32 %v2195, 4294901760
        %v3013 = vsub.f32 %v2195, %v3012
        %3014 = vmatprep.subr.mxu0 %v3013
        %v3015 = vand.u32 %v2194, 4294901760
        %v3016 = vsub.f32 %v2194, %v3015
        %3017 = vmatpush1.msra.mxu0 %v3016
        %v3018 = vand.u32 %v2197, 4294901760
        %v3019 = vsub.f32 %v2197, %v3018
        %3020 = vmatprep.subr.mxu0 %v3019
        %v3021 = vand.u32 %v2196, 4294901760
        %v3022 = vsub.f32 %v2196, %v3021
        %3023 = vmatpush1.msra.mxu0 %v3022
        %v3024 = vand.u32 %v2199, 4294901760
        %v3025 = vsub.f32 %v2199, %v3024
        %3026 = vmatprep.subr.mxu0 %v3025
        %v3027 = vand.u32 %v2198, 4294901760
        %v3028 = vsub.f32 %v2198, %v3027
        %3029 = vmatpush1.msra.mxu0 %v3028
        %v3030 = vand.u32 %v2201, 4294901760
        %v3031 = vsub.f32 %v2201, %v3030
        %3032 = vmatprep.subr.mxu0 %v3031
        %v3033 = vand.u32 %v2200, 4294901760
        %v3034 = vsub.f32 %v2200, %v3033
        %3035 = vmatpush1.msra.mxu0 %v3034
        %v3036 = vand.u32 %v2203, 4294901760
        %v3037 = vsub.f32 %v2203, %v3036
        %3038 = vmatprep.subr.mxu0 %v3037
        %v3039 = vand.u32 %v2202, 4294901760
        %v3040 = vsub.f32 %v2202, %v3039
        %3041 = vmatpush1.msra.mxu0 %v3040
        %v3042 = vand.u32 %v2205, 4294901760
        %v3043 = vsub.f32 %v2205, %v3042
        %3044 = vmatprep.subr.mxu0 %v3043
        %v3045 = vand.u32 %v2204, 4294901760
        %v3046 = vsub.f32 %v2204, %v3045
        %3047 = vmatpush1.msra.mxu0 %v3046
        %v3048 = vand.u32 %v2207, 4294901760
        %v3049 = vsub.f32 %v2207, %v3048
        %3050 = vmatprep.subr.mxu0 %v3049
        %v3051 = vand.u32 %v2206, 4294901760
        %v3052 = vsub.f32 %v2206, %v3051
        %3053 = vmatpush1.msra.mxu0 %v3052
        %v3054 = vand.u32 %v2209, 4294901760
        %v3055 = vsub.f32 %v2209, %v3054
        %3056 = vmatprep.subr.mxu0 %v3055
        %v3057 = vand.u32 %v2208, 4294901760
        %v3058 = vsub.f32 %v2208, %v3057
        %3059 = vmatpush1.msra.mxu0 %v3058
        %v3060 = vand.u32 %v2211, 4294901760
        %v3061 = vsub.f32 %v2211, %v3060
        %3062 = vmatprep.subr.mxu0 %v3061
        %v3063 = vand.u32 %v2210, 4294901760
        %v3064 = vsub.f32 %v2210, %v3063
        %3065 = vmatpush1.msra.mxu0 %v3064
        %v3066 = vand.u32 %v2213, 4294901760
        %v3067 = vsub.f32 %v2213, %v3066
        %3068 = vmatprep.subr.mxu0 %v3067
        %v3069 = vand.u32 %v2212, 4294901760
        %v3070 = vsub.f32 %v2212, %v3069
        %3071 = vmatpush1.msra.mxu0 %v3070
        %v3072 = vand.u32 %v2215, 4294901760
        %v3073 = vsub.f32 %v2215, %v3072
        %3074 = vmatprep.subr.mxu0 %v3073
        %v3075 = vand.u32 %v2214, 4294901760
        %v3076 = vsub.f32 %v2214, %v3075
        %3077 = vmatpush1.msra.mxu0 %v3076
        %v3078 = vand.u32 %v2217, 4294901760
        %v3079 = vsub.f32 %v2217, %v3078
        %3080 = vmatprep.subr.mxu0 %v3079
        %v3081 = vand.u32 %v2216, 4294901760
        %v3082 = vsub.f32 %v2216, %v3081
        %3083 = vmatpush1.msra.mxu0 %v3082
        %v3084 = vand.u32 %v2219, 4294901760
        %v3085 = vsub.f32 %v2219, %v3084
        %3086 = vmatprep.subr.mxu0 %v3085
        %v3087 = vand.u32 %v2218, 4294901760
        %v3088 = vsub.f32 %v2218, %v3087
        %3089 = vmatpush1.msra.mxu0 %v3088
        %v3090 = vand.u32 %v2221, 4294901760
        %v3091 = vsub.f32 %v2221, %v3090
        %3092 = vmatprep.subr.mxu0 %v3091
        %v3093 = vand.u32 %v2220, 4294901760
        %v3094 = vsub.f32 %v2220, %v3093
        %3095 = vmatpush1.msra.mxu0 %v3094
        %v3096 = vand.u32 %v2223, 4294901760
        %v3097 = vsub.f32 %v2223, %v3096
        %3098 = vmatprep.subr.mxu0 %v3097
        %v3099 = vand.u32 %v2222, 4294901760
        %v3100 = vsub.f32 %v2222, %v3099
        %3101 = vmatpush1.msra.mxu0 %v3100
        %v3102 = vand.u32 %v2225, 4294901760
        %v3103 = vsub.f32 %v2225, %v3102
        %3104 = vmatprep.subr.mxu0 %v3103
        %v3105 = vand.u32 %v2224, 4294901760
        %v3106 = vsub.f32 %v2224, %v3105
        %3107 = vmatpush1.msra.mxu0 %v3106
        %v3108 = vand.u32 %v2227, 4294901760
        %v3109 = vsub.f32 %v2227, %v3108
        %3110 = vmatprep.subr.mxu0 %v3109
        %v3111 = vand.u32 %v2226, 4294901760
        %v3112 = vsub.f32 %v2226, %v3111
        %3113 = vmatpush1.msra.mxu0 %v3112
        %v3114 = vand.u32 %v2229, 4294901760
        %v3115 = vsub.f32 %v2229, %v3114
        %3116 = vmatprep.subr.mxu0 %v3115
        %v3117 = vand.u32 %v2228, 4294901760
        %v3118 = vsub.f32 %v2228, %v3117
        %3119 = vmatpush1.msra.mxu0 %v3118
        %v3120 = vand.u32 %v2231, 4294901760
        %v3121 = vsub.f32 %v2231, %v3120
        %3122 = vmatprep.subr.mxu0 %v3121
        %v3123 = vand.u32 %v2230, 4294901760
        %v3124 = vsub.f32 %v2230, %v3123
        %3125 = vmatpush1.msra.mxu0 %v3124
        %v3126 = vand.u32 %v2233, 4294901760
        %v3127 = vsub.f32 %v2233, %v3126
        %3128 = vmatprep.subr.mxu0 %v3127
        %v3129 = vand.u32 %v2232, 4294901760
        %v3130 = vsub.f32 %v2232, %v3129
        %3131 = vmatpush1.msra.mxu0 %v3130
        %v3132 = vand.u32 %v373, 4294901760
        %v3133 = vsub.f32 %v373, %v3132
        %3134 = vmatprep.mubr.f32.mxu0 %v3133
        %v3135 = vand.u32 %v372, 4294901760
        %v3136 = vsub.f32 %v372, %v3135
        %3137 = vmatmul.mubr.f32.gmra.mrb[0].mxu0 %v3136
        %v3138 = vpop.f32.mrb[0].mxu0
        %v3139 = vadd.f32 %v2880, %v3138
        %v3140 = vpop.f32.mrb[0].mxu0
        %v3141 = vadd.f32 %v2882, %v3140
        %v3142 = vand.u32 %v375, 4294901760
        %v3143 = vsub.f32 %v375, %v3142
        %3144 = vmatprep.mubr.f32.mxu0 %v3143
        %v3145 = vand.u32 %v374, 4294901760
        %v3146 = vsub.f32 %v374, %v3145
        %3147 = vmatmul.mubr.f32.gmra.mrb[0].mxu0 %v3146
        %v3148 = vpop.f32.mrb[0].mxu0
        %v3149 = vadd.f32 %v2888, %v3148
        %v3150 = vpop.f32.mrb[0].mxu0
        %v3151 = vadd.f32 %v2890, %v3150
        %v3152 = vand.u32 %v377, 4294901760
        %v3153 = vsub.f32 %v377, %v3152
        %3154 = vmatprep.mubr.f32.mxu0 %v3153
        %v3155 = vand.u32 %v376, 4294901760
        %v3156 = vsub.f32 %v376, %v3155
        %3157 = vmatmul.mubr.f32.gmra.mrb[0].mxu0 %v3156
        %v3158 = vpop.f32.mrb[0].mxu0
        %v3159 = vadd.f32 %v2896, %v3158
        %v3160 = vpop.f32.mrb[0].mxu0
        %v3161 = vadd.f32 %v2898, %v3160
        %v3162 = vand.u32 %v379, 4294901760
        %v3163 = vsub.f32 %v379, %v3162
        %3164 = vmatprep.mubr.f32.mxu0 %v3163
        %v3165 = vand.u32 %v378, 4294901760
        %v3166 = vsub.f32 %v378, %v3165
        %3167 = vmatmul.mubr.f32.gmra.mrb[0].mxu0 %v3166
        %v3168 = vpop.f32.mrb[0].mxu0
        %v3169 = vadd.f32 %v2904, %v3168
        %v3170 = vpop.f32.mrb[0].mxu0
        %v3171 = vadd.f32 %v2906, %v3170
        %v3172 = vand.u32 %v381, 4294901760
        %v3173 = vsub.f32 %v381, %v3172
        %3174 = vmatprep.mubr.f32.mxu0 %v3173
        %v3175 = vand.u32 %v380, 4294901760
        %v3176 = vsub.f32 %v380, %v3175
        %3177 = vmatmul.mubr.f32.gmra.mrb[0].mxu0 %v3176
        %v3178 = vpop.f32.mrb[0].mxu0
        %v3179 = vadd.f32 %v2912, %v3178
        %v3180 = vpop.f32.mrb[0].mxu0
        %v3181 = vadd.f32 %v2914, %v3180
        %v3182 = vand.u32 %v383, 4294901760
        %v3183 = vsub.f32 %v383, %v3182
        %3184 = vmatprep.mubr.f32.mxu0 %v3183
        %v3185 = vand.u32 %v382, 4294901760
        %v3186 = vsub.f32 %v382, %v3185
        %3187 = vmatmul.mubr.f32.gmra.mrb[0].mxu0 %v3186
        %v3188 = vpop.f32.mrb[0].mxu0
        %v3189 = vadd.f32 %v2920, %v3188
        %v3190 = vpop.f32.mrb[0].mxu0
        %v3191 = vadd.f32 %v2922, %v3190
        %v3192 = vand.u32 %v385, 4294901760
        %v3193 = vsub.f32 %v385, %v3192
        %3194 = vmatprep.mubr.f32.mxu0 %v3193
        %v3195 = vand.u32 %v384, 4294901760
        %v3196 = vsub.f32 %v384, %v3195
        %3197 = vmatmul.mubr.f32.gmra.mrb[0].mxu0 %v3196
        %v3198 = vpop.f32.mrb[0].mxu0
        %v3199 = vadd.f32 %v2928, %v3198
        %v3200 = vpop.f32.mrb[0].mxu0
        %v3201 = vadd.f32 %v2930, %v3200
        %v3202 = vand.u32 %v387, 4294901760
        %v3203 = vsub.f32 %v387, %v3202
        %3204 = vmatprep.mubr.f32.mxu0 %v3203
        %v3205 = vand.u32 %v386, 4294901760
        %v3206 = vsub.f32 %v386, %v3205
        %3207 = vmatmul.mubr.f32.gmra.mrb[0].mxu0 %v3206
        %v3208 = vpop.f32.mrb[0].mxu0
        %v3209 = vadd.f32 %v2936, %v3208
        %v3210 = vpop.f32.mrb[0].mxu0
        %v3211 = vadd.f32 %v2938, %v3210
        %3212 = vdwg.mxu0
        %v3213 = vand.u32 %v2171, 4294901760
        %3214 = vmatprep.subr.mxu0 %v3213
        %v3215 = vand.u32 %v2170, 4294901760
        %3216 = vmatpush1.msra.mxu0 %v3215
        %v3217 = vand.u32 %v2173, 4294901760
        %3218 = vmatprep.subr.mxu0 %v3217
        %v3219 = vand.u32 %v2172, 4294901760
        %3220 = vmatpush1.msra.mxu0 %v3219
        %v3221 = vand.u32 %v2175, 4294901760
        %3222 = vmatprep.subr.mxu0 %v3221
        %v3223 = vand.u32 %v2174, 4294901760
        %3224 = vmatpush1.msra.mxu0 %v3223
        %v3225 = vand.u32 %v2177, 4294901760
        %3226 = vmatprep.subr.mxu0 %v3225
        %v3227 = vand.u32 %v2176, 4294901760
        %3228 = vmatpush1.msra.mxu0 %v3227
        %v3229 = vand.u32 %v2179, 4294901760
        %3230 = vmatprep.subr.mxu0 %v3229
        %v3231 = vand.u32 %v2178, 4294901760
        %3232 = vmatpush1.msra.mxu0 %v3231
        %v3233 = vand.u32 %v2181, 4294901760
        %3234 = vmatprep.subr.mxu0 %v3233
        %v3235 = vand.u32 %v2180, 4294901760
        %3236 = vmatpush1.msra.mxu0 %v3235
        %v3237 = vand.u32 %v2183, 4294901760
        %3238 = vmatprep.subr.mxu0 %v3237
        %v3239 = vand.u32 %v2182, 4294901760
        %3240 = vmatpush1.msra.mxu0 %v3239
        %v3241 = vand.u32 %v2185, 4294901760
        %3242 = vmatprep.subr.mxu0 %v3241
        %v3243 = vand.u32 %v2184, 4294901760
        %3244 = vmatpush1.msra.mxu0 %v3243
        %v3245 = vand.u32 %v2187, 4294901760
        %3246 = vmatprep.subr.mxu0 %v3245
        %v3247 = vand.u32 %v2186, 4294901760
        %3248 = vmatpush1.msra.mxu0 %v3247
        %v3249 = vand.u32 %v2189, 4294901760
        %3250 = vmatprep.subr.mxu0 %v3249
        %v3251 = vand.u32 %v2188, 4294901760
        %3252 = vmatpush1.msra.mxu0 %v3251
        %v3253 = vand.u32 %v2191, 4294901760
        %3254 = vmatprep.subr.mxu0 %v3253
        %v3255 = vand.u32 %v2190, 4294901760
        %3256 = vmatpush1.msra.mxu0 %v3255
        %v3257 = vand.u32 %v2193, 4294901760
        %3258 = vmatprep.subr.mxu0 %v3257
        %v3259 = vand.u32 %v2192, 4294901760
        %3260 = vmatpush1.msra.mxu0 %v3259
        %v3261 = vand.u32 %v2195, 4294901760
        %3262 = vmatprep.subr.mxu0 %v3261
        %v3263 = vand.u32 %v2194, 4294901760
        %3264 = vmatpush1.msra.mxu0 %v3263
        %v3265 = vand.u32 %v2197, 4294901760
        %3266 = vmatprep.subr.mxu0 %v3265
        %v3267 = vand.u32 %v2196, 4294901760
        %3268 = vmatpush1.msra.mxu0 %v3267
        %v3269 = vand.u32 %v2199, 4294901760
        %3270 = vmatprep.subr.mxu0 %v3269
        %v3271 = vand.u32 %v2198, 4294901760
        %3272 = vmatpush1.msra.mxu0 %v3271
        %v3273 = vand.u32 %v2201, 4294901760
        %3274 = vmatprep.subr.mxu0 %v3273
        %v3275 = vand.u32 %v2200, 4294901760
        %3276 = vmatpush1.msra.mxu0 %v3275
        %v3277 = vand.u32 %v2203, 4294901760
        %3278 = vmatprep.subr.mxu0 %v3277
        %v3279 = vand.u32 %v2202, 4294901760
        %3280 = vmatpush1.msra.mxu0 %v3279
        %v3281 = vand.u32 %v2205, 4294901760
        %3282 = vmatprep.subr.mxu0 %v3281
        %v3283 = vand.u32 %v2204, 4294901760
        %3284 = vmatpush1.msra.mxu0 %v3283
        %v3285 = vand.u32 %v2207, 4294901760
        %3286 = vmatprep.subr.mxu0 %v3285
        %v3287 = vand.u32 %v2206, 4294901760
        %3288 = vmatpush1.msra.mxu0 %v3287
        %v3289 = vand.u32 %v2209, 4294901760
        %3290 = vmatprep.subr.mxu0 %v3289
        %v3291 = vand.u32 %v2208, 4294901760
        %3292 = vmatpush1.msra.mxu0 %v3291
        %v3293 = vand.u32 %v2211, 4294901760
        %3294 = vmatprep.subr.mxu0 %v3293
        %v3295 = vand.u32 %v2210, 4294901760
        %3296 = vmatpush1.msra.mxu0 %v3295
        %v3297 = vand.u32 %v2213, 4294901760
        %3298 = vmatprep.subr.mxu0 %v3297
        %v3299 = vand.u32 %v2212, 4294901760
        %3300 = vmatpush1.msra.mxu0 %v3299
        %v3301 = vand.u32 %v2215, 4294901760
        %3302 = vmatprep.subr.mxu0 %v3301
        %v3303 = vand.u32 %v2214, 4294901760
        %3304 = vmatpush1.msra.mxu0 %v3303
        %v3305 = vand.u32 %v2217, 4294901760
        %3306 = vmatprep.subr.mxu0 %v3305
        %v3307 = vand.u32 %v2216, 4294901760
        %3308 = vmatpush1.msra.mxu0 %v3307
        %v3309 = vand.u32 %v2219, 4294901760
        %3310 = vmatprep.subr.mxu0 %v3309
        %v3311 = vand.u32 %v2218, 4294901760
        %3312 = vmatpush1.msra.mxu0 %v3311
        %v3313 = vand.u32 %v2221, 4294901760
        %3314 = vmatprep.subr.mxu0 %v3313
        %v3315 = vand.u32 %v2220, 4294901760
        %3316 = vmatpush1.msra.mxu0 %v3315
        %v3317 = vand.u32 %v2223, 4294901760
        %3318 = vmatprep.subr.mxu0 %v3317
        %v3319 = vand.u32 %v2222, 4294901760
        %3320 = vmatpush1.msra.mxu0 %v3319
        %v3321 = vand.u32 %v2225, 4294901760
        %3322 = vmatprep.subr.mxu0 %v3321
        %v3323 = vand.u32 %v2224, 4294901760
        %3324 = vmatpush1.msra.mxu0 %v3323
        %v3325 = vand.u32 %v2227, 4294901760
        %3326 = vmatprep.subr.mxu0 %v3325
        %v3327 = vand.u32 %v2226, 4294901760
        %3328 = vmatpush1.msra.mxu0 %v3327
        %v3329 = vand.u32 %v2229, 4294901760
        %3330 = vmatprep.subr.mxu0 %v3329
        %v3331 = vand.u32 %v2228, 4294901760
        %3332 = vmatpush1.msra.mxu0 %v3331
        %v3333 = vand.u32 %v2231, 4294901760
        %3334 = vmatprep.subr.mxu0 %v3333
        %v3335 = vand.u32 %v2230, 4294901760
        %3336 = vmatpush1.msra.mxu0 %v3335
        %v3337 = vand.u32 %v2233, 4294901760
        %3338 = vmatprep.subr.mxu0 %v3337
        %v3339 = vand.u32 %v2232, 4294901760
        %3340 = vmatpush1.msra.mxu0 %v3339
        %v3341 = vand.u32 %v373, 4294901760
        %v3342 = vsub.f32 %v373, %v3341
        %v3343 = vand.u32 %v3342, 4294901760
        %3344 = vmatprep.mubr.f32.mxu0 %v3343
        %v3345 = vand.u32 %v372, 4294901760
        %v3346 = vsub.f32 %v372, %v3345
        %v3347 = vand.u32 %v3346, 4294901760
        %3348 = vmatmul.mubr.f32.gmra.mrb[0].mxu0 %v3347
        %v3349 = vpop.f32.mrb[0].mxu0
        %v3350 = vadd.f32 %v3139, %v3349
        %v3351 = vpop.f32.mrb[0].mxu0
        %v3352 = vadd.f32 %v3141, %v3351
        %v3353 = vand.u32 %v375, 4294901760
        %v3354 = vsub.f32 %v375, %v3353
        %v3355 = vand.u32 %v3354, 4294901760
        %3356 = vmatprep.mubr.f32.mxu0 %v3355
        %v3357 = vand.u32 %v374, 4294901760
        %v3358 = vsub.f32 %v374, %v3357
        %v3359 = vand.u32 %v3358, 4294901760
        %3360 = vmatmul.mubr.f32.gmra.mrb[0].mxu0 %v3359
        %v3361 = vpop.f32.mrb[0].mxu0
        %v3362 = vadd.f32 %v3149, %v3361
        %v3363 = vpop.f32.mrb[0].mxu0
        %v3364 = vadd.f32 %v3151, %v3363
        %v3365 = vand.u32 %v377, 4294901760
        %v3366 = vsub.f32 %v377, %v3365
        %v3367 = vand.u32 %v3366, 4294901760
        %3368 = vmatprep.mubr.f32.mxu0 %v3367
        %v3369 = vand.u32 %v376, 4294901760
        %v3370 = vsub.f32 %v376, %v3369
        %v3371 = vand.u32 %v3370, 4294901760
        %3372 = vmatmul.mubr.f32.gmra.mrb[0].mxu0 %v3371
        %v3373 = vpop.f32.mrb[0].mxu0
        %v3374 = vadd.f32 %v3159, %v3373
        %v3375 = vpop.f32.mrb[0].mxu0
        %v3376 = vadd.f32 %v3161, %v3375
        %v3377 = vand.u32 %v379, 4294901760
        %v3378 = vsub.f32 %v379, %v3377
        %v3379 = vand.u32 %v3378, 4294901760
        %3380 = vmatprep.mubr.f32.mxu0 %v3379
        %v3381 = vand.u32 %v378, 4294901760
        %v3382 = vsub.f32 %v378, %v3381
        %v3383 = vand.u32 %v3382, 4294901760
        %3384 = vmatmul.mubr.f32.gmra.mrb[0].mxu0 %v3383
        %v3385 = vpop.f32.mrb[0].mxu0
        %v3386 = vadd.f32 %v3169, %v3385
        %v3387 = vpop.f32.mrb[0].mxu0
        %v3388 = vadd.f32 %v3171, %v3387
        %v3389 = vand.u32 %v381, 4294901760
        %v3390 = vsub.f32 %v381, %v3389
        %v3391 = vand.u32 %v3390, 4294901760
        %3392 = vmatprep.mubr.f32.mxu0 %v3391
        %v3393 = vand.u32 %v380, 4294901760
        %v3394 = vsub.f32 %v380, %v3393
        %v3395 = vand.u32 %v3394, 4294901760
        %3396 = vmatmul.mubr.f32.gmra.mrb[0].mxu0 %v3395
        %v3397 = vpop.f32.mrb[0].mxu0
        %v3398 = vadd.f32 %v3179, %v3397
        %v3399 = vpop.f32.mrb[0].mxu0
        %v3400 = vadd.f32 %v3181, %v3399
        %v3401 = vand.u32 %v383, 4294901760
        %v3402 = vsub.f32 %v383, %v3401
        %v3403 = vand.u32 %v3402, 4294901760
        %3404 = vmatprep.mubr.f32.mxu0 %v3403
        %v3405 = vand.u32 %v382, 4294901760
        %v3406 = vsub.f32 %v382, %v3405
        %v3407 = vand.u32 %v3406, 4294901760
        %3408 = vmatmul.mubr.f32.gmra.mrb[0].mxu0 %v3407
        %v3409 = vpop.f32.mrb[0].mxu0
        %v3410 = vadd.f32 %v3189, %v3409
        %v3411 = vpop.f32.mrb[0].mxu0
        %v3412 = vadd.f32 %v3191, %v3411
        %v3413 = vand.u32 %v385, 4294901760
        %v3414 = vsub.f32 %v385, %v3413
        %v3415 = vand.u32 %v3414, 4294901760
        %3416 = vmatprep.mubr.f32.mxu0 %v3415
        %v3417 = vand.u32 %v384, 4294901760
        %v3418 = vsub.f32 %v384, %v3417
        %v3419 = vand.u32 %v3418, 4294901760
        %3420 = vmatmul.mubr.f32.gmra.mrb[0].mxu0 %v3419
        %v3421 = vpop.f32.mrb[0].mxu0
        %v3422 = vadd.f32 %v3199, %v3421
        %v3423 = vpop.f32.mrb[0].mxu0
        %v3424 = vadd.f32 %v3201, %v3423
        %v3425 = vand.u32 %v387, 4294901760
        %v3426 = vsub.f32 %v387, %v3425
        %v3427 = vand.u32 %v3426, 4294901760
        %3428 = vmatprep.mubr.f32.mxu0 %v3427
        %v3429 = vand.u32 %v386, 4294901760
        %v3430 = vsub.f32 %v386, %v3429
        %v3431 = vand.u32 %v3430, 4294901760
        %3432 = vmatmul.mubr.f32.gmra.mrb[0].mxu0 %v3431
        %v3433 = vpop.f32.mrb[0].mxu0
        %v3434 = vadd.f32 %v3209, %v3433
        %v3435 = vpop.f32.mrb[0].mxu0
        %v3436 = vadd.f32 %v3211, %v3435
        %3437 = vdwg.mxu0
        %v3438 = vand.u32 %v2171, 4294901760
        %v3439 = vsub.f32 %v2171, %v3438
        %v3440 = vand.u32 %v3439, 4294901760
        %3441 = vmatprep.subr.mxu0 %v3440
        %v3442 = vand.u32 %v2170, 4294901760
        %v3443 = vsub.f32 %v2170, %v3442
        %v3444 = vand.u32 %v3443, 4294901760
        %3445 = vmatpush1.msra.mxu0 %v3444
        %v3446 = vand.u32 %v2173, 4294901760
        %v3447 = vsub.f32 %v2173, %v3446
        %v3448 = vand.u32 %v3447, 4294901760
        %3449 = vmatprep.subr.mxu0 %v3448
        %v3450 = vand.u32 %v2172, 4294901760
        %v3451 = vsub.f32 %v2172, %v3450
        %v3452 = vand.u32 %v3451, 4294901760
        %3453 = vmatpush1.msra.mxu0 %v3452
        %v3454 = vand.u32 %v2175, 4294901760
        %v3455 = vsub.f32 %v2175, %v3454
        %v3456 = vand.u32 %v3455, 4294901760
        %3457 = vmatprep.subr.mxu0 %v3456
        %v3458 = vand.u32 %v2174, 4294901760
        %v3459 = vsub.f32 %v2174, %v3458
        %v3460 = vand.u32 %v3459, 4294901760
        %3461 = vmatpush1.msra.mxu0 %v3460
        %v3462 = vand.u32 %v2177, 4294901760
        %v3463 = vsub.f32 %v2177, %v3462
        %v3464 = vand.u32 %v3463, 4294901760
        %3465 = vmatprep.subr.mxu0 %v3464
        %v3466 = vand.u32 %v2176, 4294901760
        %v3467 = vsub.f32 %v2176, %v3466
        %v3468 = vand.u32 %v3467, 4294901760
        %3469 = vmatpush1.msra.mxu0 %v3468
        %v3470 = vand.u32 %v2179, 4294901760
        %v3471 = vsub.f32 %v2179, %v3470
        %v3472 = vand.u32 %v3471, 4294901760
        %3473 = vmatprep.subr.mxu0 %v3472
        %v3474 = vand.u32 %v2178, 4294901760
        %v3475 = vsub.f32 %v2178, %v3474
        %v3476 = vand.u32 %v3475, 4294901760
        %3477 = vmatpush1.msra.mxu0 %v3476
        %v3478 = vand.u32 %v2181, 4294901760
        %v3479 = vsub.f32 %v2181, %v3478
        %v3480 = vand.u32 %v3479, 4294901760
        %3481 = vmatprep.subr.mxu0 %v3480
        %v3482 = vand.u32 %v2180, 4294901760
        %v3483 = vsub.f32 %v2180, %v3482
        %v3484 = vand.u32 %v3483, 4294901760
        %3485 = vmatpush1.msra.mxu0 %v3484
        %v3486 = vand.u32 %v2183, 4294901760
        %v3487 = vsub.f32 %v2183, %v3486
        %v3488 = vand.u32 %v3487, 4294901760
        %3489 = vmatprep.subr.mxu0 %v3488
        %v3490 = vand.u32 %v2182, 4294901760
        %v3491 = vsub.f32 %v2182, %v3490
        %v3492 = vand.u32 %v3491, 4294901760
        %3493 = vmatpush1.msra.mxu0 %v3492
        %v3494 = vand.u32 %v2185, 4294901760
        %v3495 = vsub.f32 %v2185, %v3494
        %v3496 = vand.u32 %v3495, 4294901760
        %3497 = vmatprep.subr.mxu0 %v3496
        %v3498 = vand.u32 %v2184, 4294901760
        %v3499 = vsub.f32 %v2184, %v3498
        %v3500 = vand.u32 %v3499, 4294901760
        %3501 = vmatpush1.msra.mxu0 %v3500
        %v3502 = vand.u32 %v2187, 4294901760
        %v3503 = vsub.f32 %v2187, %v3502
        %v3504 = vand.u32 %v3503, 4294901760
        %3505 = vmatprep.subr.mxu0 %v3504
        %v3506 = vand.u32 %v2186, 4294901760
        %v3507 = vsub.f32 %v2186, %v3506
        %v3508 = vand.u32 %v3507, 4294901760
        %3509 = vmatpush1.msra.mxu0 %v3508
        %v3510 = vand.u32 %v2189, 4294901760
        %v3511 = vsub.f32 %v2189, %v3510
        %v3512 = vand.u32 %v3511, 4294901760
        %3513 = vmatprep.subr.mxu0 %v3512
        %v3514 = vand.u32 %v2188, 4294901760
        %v3515 = vsub.f32 %v2188, %v3514
        %v3516 = vand.u32 %v3515, 4294901760
        %3517 = vmatpush1.msra.mxu0 %v3516
        %v3518 = vand.u32 %v2191, 4294901760
        %v3519 = vsub.f32 %v2191, %v3518
        %v3520 = vand.u32 %v3519, 4294901760
        %3521 = vmatprep.subr.mxu0 %v3520
        %v3522 = vand.u32 %v2190, 4294901760
        %v3523 = vsub.f32 %v2190, %v3522
        %v3524 = vand.u32 %v3523, 4294901760
        %3525 = vmatpush1.msra.mxu0 %v3524
        %v3526 = vand.u32 %v2193, 4294901760
        %v3527 = vsub.f32 %v2193, %v3526
        %v3528 = vand.u32 %v3527, 4294901760
        %3529 = vmatprep.subr.mxu0 %v3528
        %v3530 = vand.u32 %v2192, 4294901760
        %v3531 = vsub.f32 %v2192, %v3530
        %v3532 = vand.u32 %v3531, 4294901760
        %3533 = vmatpush1.msra.mxu0 %v3532
        %v3534 = vand.u32 %v2195, 4294901760
        %v3535 = vsub.f32 %v2195, %v3534
        %v3536 = vand.u32 %v3535, 4294901760
        %3537 = vmatprep.subr.mxu0 %v3536
        %v3538 = vand.u32 %v2194, 4294901760
        %v3539 = vsub.f32 %v2194, %v3538
        %v3540 = vand.u32 %v3539, 4294901760
        %3541 = vmatpush1.msra.mxu0 %v3540
        %v3542 = vand.u32 %v2197, 4294901760
        %v3543 = vsub.f32 %v2197, %v3542
        %v3544 = vand.u32 %v3543, 4294901760
        %3545 = vmatprep.subr.mxu0 %v3544
        %v3546 = vand.u32 %v2196, 4294901760
        %v3547 = vsub.f32 %v2196, %v3546
        %v3548 = vand.u32 %v3547, 4294901760
        %3549 = vmatpush1.msra.mxu0 %v3548
        %v3550 = vand.u32 %v2199, 4294901760
        %v3551 = vsub.f32 %v2199, %v3550
        %v3552 = vand.u32 %v3551, 4294901760
        %3553 = vmatprep.subr.mxu0 %v3552
        %v3554 = vand.u32 %v2198, 4294901760
        %v3555 = vsub.f32 %v2198, %v3554
        %v3556 = vand.u32 %v3555, 4294901760
        %3557 = vmatpush1.msra.mxu0 %v3556
        %v3558 = vand.u32 %v2201, 4294901760
        %v3559 = vsub.f32 %v2201, %v3558
        %v3560 = vand.u32 %v3559, 4294901760
        %3561 = vmatprep.subr.mxu0 %v3560
        %v3562 = vand.u32 %v2200, 4294901760
        %v3563 = vsub.f32 %v2200, %v3562
        %v3564 = vand.u32 %v3563, 4294901760
        %3565 = vmatpush1.msra.mxu0 %v3564
        %v3566 = vand.u32 %v2203, 4294901760
        %v3567 = vsub.f32 %v2203, %v3566
        %v3568 = vand.u32 %v3567, 4294901760
        %3569 = vmatprep.subr.mxu0 %v3568
        %v3570 = vand.u32 %v2202, 4294901760
        %v3571 = vsub.f32 %v2202, %v3570
        %v3572 = vand.u32 %v3571, 4294901760
        %3573 = vmatpush1.msra.mxu0 %v3572
        %v3574 = vand.u32 %v2205, 4294901760
        %v3575 = vsub.f32 %v2205, %v3574
        %v3576 = vand.u32 %v3575, 4294901760
        %3577 = vmatprep.subr.mxu0 %v3576
        %v3578 = vand.u32 %v2204, 4294901760
        %v3579 = vsub.f32 %v2204, %v3578
        %v3580 = vand.u32 %v3579, 4294901760
        %3581 = vmatpush1.msra.mxu0 %v3580
        %v3582 = vand.u32 %v2207, 4294901760
        %v3583 = vsub.f32 %v2207, %v3582
        %v3584 = vand.u32 %v3583, 4294901760
        %3585 = vmatprep.subr.mxu0 %v3584
        %v3586 = vand.u32 %v2206, 4294901760
        %v3587 = vsub.f32 %v2206, %v3586
        %v3588 = vand.u32 %v3587, 4294901760
        %3589 = vmatpush1.msra.mxu0 %v3588
        %v3590 = vand.u32 %v2209, 4294901760
        %v3591 = vsub.f32 %v2209, %v3590
        %v3592 = vand.u32 %v3591, 4294901760
        %3593 = vmatprep.subr.mxu0 %v3592
        %v3594 = vand.u32 %v2208, 4294901760
        %v3595 = vsub.f32 %v2208, %v3594
        %v3596 = vand.u32 %v3595, 4294901760
        %3597 = vmatpush1.msra.mxu0 %v3596
        %v3598 = vand.u32 %v2211, 4294901760
        %v3599 = vsub.f32 %v2211, %v3598
        %v3600 = vand.u32 %v3599, 4294901760
        %3601 = vmatprep.subr.mxu0 %v3600
        %v3602 = vand.u32 %v2210, 4294901760
        %v3603 = vsub.f32 %v2210, %v3602
        %v3604 = vand.u32 %v3603, 4294901760
        %3605 = vmatpush1.msra.mxu0 %v3604
        %v3606 = vand.u32 %v2213, 4294901760
        %v3607 = vsub.f32 %v2213, %v3606
        %v3608 = vand.u32 %v3607, 4294901760
        %3609 = vmatprep.subr.mxu0 %v3608
        %v3610 = vand.u32 %v2212, 4294901760
        %v3611 = vsub.f32 %v2212, %v3610
        %v3612 = vand.u32 %v3611, 4294901760
        %3613 = vmatpush1.msra.mxu0 %v3612
        %v3614 = vand.u32 %v2215, 4294901760
        %v3615 = vsub.f32 %v2215, %v3614
        %v3616 = vand.u32 %v3615, 4294901760
        %3617 = vmatprep.subr.mxu0 %v3616
        %v3618 = vand.u32 %v2214, 4294901760
        %v3619 = vsub.f32 %v2214, %v3618
        %v3620 = vand.u32 %v3619, 4294901760
        %3621 = vmatpush1.msra.mxu0 %v3620
        %v3622 = vand.u32 %v2217, 4294901760
        %v3623 = vsub.f32 %v2217, %v3622
        %v3624 = vand.u32 %v3623, 4294901760
        %3625 = vmatprep.subr.mxu0 %v3624
        %v3626 = vand.u32 %v2216, 4294901760
        %v3627 = vsub.f32 %v2216, %v3626
        %v3628 = vand.u32 %v3627, 4294901760
        %3629 = vmatpush1.msra.mxu0 %v3628
        %v3630 = vand.u32 %v2219, 4294901760
        %v3631 = vsub.f32 %v2219, %v3630
        %v3632 = vand.u32 %v3631, 4294901760
        %3633 = vmatprep.subr.mxu0 %v3632
        %v3634 = vand.u32 %v2218, 4294901760
        %v3635 = vsub.f32 %v2218, %v3634
        %v3636 = vand.u32 %v3635, 4294901760
        %3637 = vmatpush1.msra.mxu0 %v3636
        %v3638 = vand.u32 %v2221, 4294901760
        %v3639 = vsub.f32 %v2221, %v3638
        %v3640 = vand.u32 %v3639, 4294901760
        %3641 = vmatprep.subr.mxu0 %v3640
        %v3642 = vand.u32 %v2220, 4294901760
        %v3643 = vsub.f32 %v2220, %v3642
        %v3644 = vand.u32 %v3643, 4294901760
        %3645 = vmatpush1.msra.mxu0 %v3644
        %v3646 = vand.u32 %v2223, 4294901760
        %v3647 = vsub.f32 %v2223, %v3646
        %v3648 = vand.u32 %v3647, 4294901760
        %3649 = vmatprep.subr.mxu0 %v3648
        %v3650 = vand.u32 %v2222, 4294901760
        %v3651 = vsub.f32 %v2222, %v3650
        %v3652 = vand.u32 %v3651, 4294901760
        %3653 = vmatpush1.msra.mxu0 %v3652
        %v3654 = vand.u32 %v2225, 4294901760
        %v3655 = vsub.f32 %v2225, %v3654
        %v3656 = vand.u32 %v3655, 4294901760
        %3657 = vmatprep.subr.mxu0 %v3656
        %v3658 = vand.u32 %v2224, 4294901760
        %v3659 = vsub.f32 %v2224, %v3658
        %v3660 = vand.u32 %v3659, 4294901760
        %3661 = vmatpush1.msra.mxu0 %v3660
        %v3662 = vand.u32 %v2227, 4294901760
        %v3663 = vsub.f32 %v2227, %v3662
        %v3664 = vand.u32 %v3663, 4294901760
        %3665 = vmatprep.subr.mxu0 %v3664
        %v3666 = vand.u32 %v2226, 4294901760
        %v3667 = vsub.f32 %v2226, %v3666
        %v3668 = vand.u32 %v3667, 4294901760
        %3669 = vmatpush1.msra.mxu0 %v3668
        %v3670 = vand.u32 %v2229, 4294901760
        %v3671 = vsub.f32 %v2229, %v3670
        %v3672 = vand.u32 %v3671, 4294901760
        %3673 = vmatprep.subr.mxu0 %v3672
        %v3674 = vand.u32 %v2228, 4294901760
        %v3675 = vsub.f32 %v2228, %v3674
        %v3676 = vand.u32 %v3675, 4294901760
        %3677 = vmatpush1.msra.mxu0 %v3676
        %v3678 = vand.u32 %v2231, 4294901760
        %v3679 = vsub.f32 %v2231, %v3678
        %v3680 = vand.u32 %v3679, 4294901760
        %3681 = vmatprep.subr.mxu0 %v3680
        %v3682 = vand.u32 %v2230, 4294901760
        %v3683 = vsub.f32 %v2230, %v3682
        %v3684 = vand.u32 %v3683, 4294901760
        %3685 = vmatpush1.msra.mxu0 %v3684
        %v3686 = vand.u32 %v2233, 4294901760
        %v3687 = vsub.f32 %v2233, %v3686
        %v3688 = vand.u32 %v3687, 4294901760
        %3689 = vmatprep.subr.mxu0 %v3688
        %v3690 = vand.u32 %v2232, 4294901760
        %v3691 = vsub.f32 %v2232, %v3690
        %v3692 = vand.u32 %v3691, 4294901760
        %3693 = vmatpush1.msra.mxu0 %v3692
        %v3694 = vand.u32 %v373, 4294901760
        %3695 = vmatprep.mubr.f32.mxu0 %v3694
        %v3696 = vand.u32 %v372, 4294901760
        %3697 = vmatmul.mubr.f32.gmra.mrb[0].mxu0 %v3696
        %v3698 = vpop.f32.mrb[0].mxu0
        %v3699 = vadd.f32 %v3350, %v3698
        %v3700 = vpop.f32.mrb[0].mxu0
        %v3701 = vadd.f32 %v3352, %v3700
        %v3702 = vand.u32 %v375, 4294901760
        %3703 = vmatprep.mubr.f32.mxu0 %v3702
        %v3704 = vand.u32 %v374, 4294901760
        %3705 = vmatmul.mubr.f32.gmra.mrb[0].mxu0 %v3704
        %v3706 = vpop.f32.mrb[0].mxu0
        %v3707 = vadd.f32 %v3362, %v3706
        %v3708 = vpop.f32.mrb[0].mxu0
        %v3709 = vadd.f32 %v3364, %v3708
        %v3710 = vand.u32 %v377, 4294901760
        %3711 = vmatprep.mubr.f32.mxu0 %v3710
        %v3712 = vand.u32 %v376, 4294901760
        %3713 = vmatmul.mubr.f32.gmra.mrb[0].mxu0 %v3712
        %v3714 = vpop.f32.mrb[0].mxu0
        %v3715 = vadd.f32 %v3374, %v3714
        %v3716 = vpop.f32.mrb[0].mxu0
        %v3717 = vadd.f32 %v3376, %v3716
        %v3718 = vand.u32 %v379, 4294901760
        %3719 = vmatprep.mubr.f32.mxu0 %v3718
        %v3720 = vand.u32 %v378, 4294901760
        %3721 = vmatmul.mubr.f32.gmra.mrb[0].mxu0 %v3720
        %v3722 = vpop.f32.mrb[0].mxu0
        %v3723 = vadd.f32 %v3386, %v3722
        %v3724 = vpop.f32.mrb[0].mxu0
        %v3725 = vadd.f32 %v3388, %v3724
        %v3726 = vand.u32 %v381, 4294901760
        %3727 = vmatprep.mubr.f32.mxu0 %v3726
        %v3728 = vand.u32 %v380, 4294901760
        %3729 = vmatmul.mubr.f32.gmra.mrb[0].mxu0 %v3728
        %v3730 = vpop.f32.mrb[0].mxu0
        %v3731 = vadd.f32 %v3398, %v3730
        %v3732 = vpop.f32.mrb[0].mxu0
        %v3733 = vadd.f32 %v3400, %v3732
        %v3734 = vand.u32 %v383, 4294901760
        %3735 = vmatprep.mubr.f32.mxu0 %v3734
        %v3736 = vand.u32 %v382, 4294901760
        %3737 = vmatmul.mubr.f32.gmra.mrb[0].mxu0 %v3736
        %v3738 = vpop.f32.mrb[0].mxu0
        %v3739 = vadd.f32 %v3410, %v3738
        %v3740 = vpop.f32.mrb[0].mxu0
        %v3741 = vadd.f32 %v3412, %v3740
        %v3742 = vand.u32 %v385, 4294901760
        %3743 = vmatprep.mubr.f32.mxu0 %v3742
        %v3744 = vand.u32 %v384, 4294901760
        %3745 = vmatmul.mubr.f32.gmra.mrb[0].mxu0 %v3744
        %v3746 = vpop.f32.mrb[0].mxu0
        %v3747 = vadd.f32 %v3422, %v3746
        %v3748 = vpop.f32.mrb[0].mxu0
        %v3749 = vadd.f32 %v3424, %v3748
        %v3750 = vand.u32 %v387, 4294901760
        %3751 = vmatprep.mubr.f32.mxu0 %v3750
        %v3752 = vand.u32 %v386, 4294901760
        %3753 = vmatmul.mubr.f32.gmra.mrb[0].mxu0 %v3752
        %v3754 = vpop.f32.mrb[0].mxu0
        %v3755 = vadd.f32 %v3434, %v3754
        %v3756 = vpop.f32.mrb[0].mxu0
        %v3757 = vadd.f32 %v3436, %v3756
        %3758 = vdwg.mxu0
        %v3759 = vand.u32 %v2171, 4294901760
        %3760 = vmatprep.subr.mxu0 %v3759
        %v3761 = vand.u32 %v2170, 4294901760
        %3762 = vmatpush1.msra.mxu0 %v3761
        %v3763 = vand.u32 %v2173, 4294901760
        %3764 = vmatprep.subr.mxu0 %v3763
        %v3765 = vand.u32 %v2172, 4294901760
        %3766 = vmatpush1.msra.mxu0 %v3765
        %v3767 = vand.u32 %v2175, 4294901760
        %3768 = vmatprep.subr.mxu0 %v3767
        %v3769 = vand.u32 %v2174, 4294901760
        %3770 = vmatpush1.msra.mxu0 %v3769
        %v3771 = vand.u32 %v2177, 4294901760
        %3772 = vmatprep.subr.mxu0 %v3771
        %v3773 = vand.u32 %v2176, 4294901760
        %3774 = vmatpush1.msra.mxu0 %v3773
        %v3775 = vand.u32 %v2179, 4294901760
        %3776 = vmatprep.subr.mxu0 %v3775
        %v3777 = vand.u32 %v2178, 4294901760
        %3778 = vmatpush1.msra.mxu0 %v3777
        %v3779 = vand.u32 %v2181, 4294901760
        %3780 = vmatprep.subr.mxu0 %v3779
        %v3781 = vand.u32 %v2180, 4294901760
        %3782 = vmatpush1.msra.mxu0 %v3781
        %v3783 = vand.u32 %v2183, 4294901760
        %3784 = vmatprep.subr.mxu0 %v3783
        %v3785 = vand.u32 %v2182, 4294901760
        %3786 = vmatpush1.msra.mxu0 %v3785
        %v3787 = vand.u32 %v2185, 4294901760
        %3788 = vmatprep.subr.mxu0 %v3787
        %v3789 = vand.u32 %v2184, 4294901760
        %3790 = vmatpush1.msra.mxu0 %v3789
        %v3791 = vand.u32 %v2187, 4294901760
        %3792 = vmatprep.subr.mxu0 %v3791
        %v3793 = vand.u32 %v2186, 4294901760
        %3794 = vmatpush1.msra.mxu0 %v3793
        %v3795 = vand.u32 %v2189, 4294901760
        %3796 = vmatprep.subr.mxu0 %v3795
        %v3797 = vand.u32 %v2188, 4294901760
        %3798 = vmatpush1.msra.mxu0 %v3797
        %v3799 = vand.u32 %v2191, 4294901760
        %3800 = vmatprep.subr.mxu0 %v3799
        %v3801 = vand.u32 %v2190, 4294901760
        %3802 = vmatpush1.msra.mxu0 %v3801
        %v3803 = vand.u32 %v2193, 4294901760
        %3804 = vmatprep.subr.mxu0 %v3803
        %v3805 = vand.u32 %v2192, 4294901760
        %3806 = vmatpush1.msra.mxu0 %v3805
        %v3807 = vand.u32 %v2195, 4294901760
        %3808 = vmatprep.subr.mxu0 %v3807
        %v3809 = vand.u32 %v2194, 4294901760
        %3810 = vmatpush1.msra.mxu0 %v3809
        %v3811 = vand.u32 %v2197, 4294901760
        %3812 = vmatprep.subr.mxu0 %v3811
        %v3813 = vand.u32 %v2196, 4294901760
        %3814 = vmatpush1.msra.mxu0 %v3813
        %v3815 = vand.u32 %v2199, 4294901760
        %3816 = vmatprep.subr.mxu0 %v3815
        %v3817 = vand.u32 %v2198, 4294901760
        %3818 = vmatpush1.msra.mxu0 %v3817
        %v3819 = vand.u32 %v2201, 4294901760
        %3820 = vmatprep.subr.mxu0 %v3819
        %v3821 = vand.u32 %v2200, 4294901760
        %3822 = vmatpush1.msra.mxu0 %v3821
        %v3823 = vand.u32 %v2203, 4294901760
        %3824 = vmatprep.subr.mxu0 %v3823
        %v3825 = vand.u32 %v2202, 4294901760
        %3826 = vmatpush1.msra.mxu0 %v3825
        %v3827 = vand.u32 %v2205, 4294901760
        %3828 = vmatprep.subr.mxu0 %v3827
        %v3829 = vand.u32 %v2204, 4294901760
        %3830 = vmatpush1.msra.mxu0 %v3829
        %v3831 = vand.u32 %v2207, 4294901760
        %3832 = vmatprep.subr.mxu0 %v3831
        %v3833 = vand.u32 %v2206, 4294901760
        %3834 = vmatpush1.msra.mxu0 %v3833
        %v3835 = vand.u32 %v2209, 4294901760
        %3836 = vmatprep.subr.mxu0 %v3835
        %v3837 = vand.u32 %v2208, 4294901760
        %3838 = vmatpush1.msra.mxu0 %v3837
        %v3839 = vand.u32 %v2211, 4294901760
        %3840 = vmatprep.subr.mxu0 %v3839
        %v3841 = vand.u32 %v2210, 4294901760
        %3842 = vmatpush1.msra.mxu0 %v3841
        %v3843 = vand.u32 %v2213, 4294901760
        %3844 = vmatprep.subr.mxu0 %v3843
        %v3845 = vand.u32 %v2212, 4294901760
        %3846 = vmatpush1.msra.mxu0 %v3845
        %v3847 = vand.u32 %v2215, 4294901760
        %3848 = vmatprep.subr.mxu0 %v3847
        %v3849 = vand.u32 %v2214, 4294901760
        %3850 = vmatpush1.msra.mxu0 %v3849
        %v3851 = vand.u32 %v2217, 4294901760
        %3852 = vmatprep.subr.mxu0 %v3851
        %v3853 = vand.u32 %v2216, 4294901760
        %3854 = vmatpush1.msra.mxu0 %v3853
        %v3855 = vand.u32 %v2219, 4294901760
        %3856 = vmatprep.subr.mxu0 %v3855
        %v3857 = vand.u32 %v2218, 4294901760
        %3858 = vmatpush1.msra.mxu0 %v3857
        %v3859 = vand.u32 %v2221, 4294901760
        %3860 = vmatprep.subr.mxu0 %v3859
        %v3861 = vand.u32 %v2220, 4294901760
        %3862 = vmatpush1.msra.mxu0 %v3861
        %v3863 = vand.u32 %v2223, 4294901760
        %3864 = vmatprep.subr.mxu0 %v3863
        %v3865 = vand.u32 %v2222, 4294901760
        %3866 = vmatpush1.msra.mxu0 %v3865
        %v3867 = vand.u32 %v2225, 4294901760
        %3868 = vmatprep.subr.mxu0 %v3867
        %v3869 = vand.u32 %v2224, 4294901760
        %3870 = vmatpush1.msra.mxu0 %v3869
        %v3871 = vand.u32 %v2227, 4294901760
        %3872 = vmatprep.subr.mxu0 %v3871
        %v3873 = vand.u32 %v2226, 4294901760
        %3874 = vmatpush1.msra.mxu0 %v3873
        %v3875 = vand.u32 %v2229, 4294901760
        %3876 = vmatprep.subr.mxu0 %v3875
        %v3877 = vand.u32 %v2228, 4294901760
        %3878 = vmatpush1.msra.mxu0 %v3877
        %v3879 = vand.u32 %v2231, 4294901760
        %3880 = vmatprep.subr.mxu0 %v3879
        %v3881 = vand.u32 %v2230, 4294901760
        %3882 = vmatpush1.msra.mxu0 %v3881
        %v3883 = vand.u32 %v2233, 4294901760
        %3884 = vmatprep.subr.mxu0 %v3883
        %v3885 = vand.u32 %v2232, 4294901760
        %3886 = vmatpush1.msra.mxu0 %v3885
        %v3887 = vand.u32 %v373, 4294901760
        %3888 = vmatprep.mubr.f32.mxu0 %v3887
        %v3889 = vand.u32 %v372, 4294901760
        %3890 = vmatmul.mubr.f32.gmra.mrb[0].mxu0 %v3889
        %v3891 = vpop.f32.mrb[0].mxu0
        %v3892 = vadd.f32 %v3699, %v3891
        %v3893 = vpop.f32.mrb[0].mxu0
        %v3894 = vadd.f32 %v3701, %v3893
        %v3895 = vand.u32 %v375, 4294901760
        %3896 = vmatprep.mubr.f32.mxu0 %v3895
        %v3897 = vand.u32 %v374, 4294901760
        %3898 = vmatmul.mubr.f32.gmra.mrb[0].mxu0 %v3897
        %v3899 = vpop.f32.mrb[0].mxu0
        %v3900 = vadd.f32 %v3707, %v3899
        %v3901 = vpop.f32.mrb[0].mxu0
        %v3902 = vadd.f32 %v3709, %v3901
        %v3903 = vand.u32 %v377, 4294901760
        %3904 = vmatprep.mubr.f32.mxu0 %v3903
        %v3905 = vand.u32 %v376, 4294901760
        %3906 = vmatmul.mubr.f32.gmra.mrb[0].mxu0 %v3905
        %v3907 = vpop.f32.mrb[0].mxu0
        %v3908 = vadd.f32 %v3715, %v3907
        %v3909 = vpop.f32.mrb[0].mxu0
        %v3910 = vadd.f32 %v3717, %v3909
        %v3911 = vand.u32 %v379, 4294901760
        %3912 = vmatprep.mubr.f32.mxu0 %v3911
        %v3913 = vand.u32 %v378, 4294901760
        %3914 = vmatmul.mubr.f32.gmra.mrb[0].mxu0 %v3913
        %v3915 = vpop.f32.mrb[0].mxu0
        %v3916 = vadd.f32 %v3723, %v3915
        %v3917 = vpop.f32.mrb[0].mxu0
        %v3918 = vadd.f32 %v3725, %v3917
        %v3919 = vand.u32 %v381, 4294901760
        %3920 = vmatprep.mubr.f32.mxu0 %v3919
        %v3921 = vand.u32 %v380, 4294901760
        %3922 = vmatmul.mubr.f32.gmra.mrb[0].mxu0 %v3921
        %v3923 = vpop.f32.mrb[0].mxu0
        %v3924 = vadd.f32 %v3731, %v3923
        %v3925 = vpop.f32.mrb[0].mxu0
        %v3926 = vadd.f32 %v3733, %v3925
        %v3927 = vand.u32 %v383, 4294901760
        %3928 = vmatprep.mubr.f32.mxu0 %v3927
        %v3929 = vand.u32 %v382, 4294901760
        %3930 = vmatmul.mubr.f32.gmra.mrb[0].mxu0 %v3929
        %v3931 = vpop.f32.mrb[0].mxu0
        %v3932 = vadd.f32 %v3739, %v3931
        %v3933 = vpop.f32.mrb[0].mxu0
        %v3934 = vadd.f32 %v3741, %v3933
        %v3935 = vand.u32 %v385, 4294901760
        %3936 = vmatprep.mubr.f32.mxu0 %v3935
        %v3937 = vand.u32 %v384, 4294901760
        %3938 = vmatmul.mubr.f32.gmra.mrb[0].mxu0 %v3937
        %v3939 = vpop.f32.mrb[0].mxu0
        %v3940 = vadd.f32 %v3747, %v3939
        %v3941 = vpop.f32.mrb[0].mxu0
        %v3942 = vadd.f32 %v3749, %v3941
        %v3943 = vand.u32 %v387, 4294901760
        %3944 = vmatprep.mubr.f32.mxu0 %v3943
        %v3945 = vand.u32 %v386, 4294901760
        %3946 = vmatmul.mubr.f32.gmra.mrb[0].mxu0 %v3945
        %v3947 = vpop.f32.mrb[0].mxu0
        %v3948 = vadd.f32 %v3755, %v3947
        %v3949 = vpop.f32.mrb[0].mxu0
        %v3950 = vadd.f32 %v3757, %v3949
        %3951 = vdwg.mxu0
        %v3952 = vsub.f32 0.0, %v2110
        %v3953 = vsub.f32 0.0, %v2112
        %v3954 = vsub.f32 0.0, %v2118
        %v3955 = vsub.f32 0.0, %v2120
        %v3956 = vsub.f32 0.0, %v2126
        %v3957 = vsub.f32 0.0, %v2128
        %v3958 = vsub.f32 0.0, %v2134
        %v3959 = vsub.f32 0.0, %v2136
        %v3960 = vsub.f32 0.0, %v2142
        %v3961 = vsub.f32 0.0, %v2144
        %v3962 = vsub.f32 0.0, %v2150
        %v3963 = vsub.f32 0.0, %v2152
        %v3964 = vsub.f32 0.0, %v2158
        %v3965 = vsub.f32 0.0, %v2160
        %v3966 = vsub.f32 0.0, %v2166
        %v3967 = vsub.f32 0.0, %v2168
        %v3968 = vmul.f32 %v3952, 1.442695
        %v3969 = vpow.pop %v3968
        %v3970 = vmul.f32 %v3953, 1.442695
        %v3971 = vpow.pop %v3970
        %v3972 = vmul.f32 %v3954, 1.442695
        %v3973 = vpow.pop %v3972
        %v3974 = vmul.f32 %v3955, 1.442695
        %v3975 = vpow.pop %v3974
        %v3976 = vmul.f32 %v3956, 1.442695
        %v3977 = vpow.pop %v3976
        %v3978 = vmul.f32 %v3957, 1.442695
        %v3979 = vpow.pop %v3978
        %v3980 = vmul.f32 %v3958, 1.442695
        %v3981 = vpow.pop %v3980
        %v3982 = vmul.f32 %v3959, 1.442695
        %v3983 = vpow.pop %v3982
        %v3984 = vmul.f32 %v3960, 1.442695
        %v3985 = vpow.pop %v3984
        %v3986 = vmul.f32 %v3961, 1.442695
        %v3987 = vpow.pop %v3986
        %v3988 = vmul.f32 %v3962, 1.442695
        %v3989 = vpow.pop %v3988
        %v3990 = vmul.f32 %v3963, 1.442695
        %v3991 = vpow.pop %v3990
        %v3992 = vmul.f32 %v3964, 1.442695
        %v3993 = vpow.pop %v3992
        %v3994 = vmul.f32 %v3965, 1.442695
        %v3995 = vpow.pop %v3994
        %v3996 = vmul.f32 %v3966, 1.442695
        %v3997 = vpow.pop %v3996
        %v3998 = vmul.f32 %v3967, 1.442695
        %v3999 = vpow.pop %v3998
        %v4000 = vadd.f32 %v3969, 1.0
        %v4001 = vadd.f32 %v3971, 1.0
        %v4002 = vadd.f32 %v3973, 1.0
        %v4003 = vadd.f32 %v3975, 1.0
        %v4004 = vadd.f32 %v3977, 1.0
        %v4005 = vadd.f32 %v3979, 1.0
        %v4006 = vadd.f32 %v3981, 1.0
        %v4007 = vadd.f32 %v3983, 1.0
        %v4008 = vadd.f32 %v3985, 1.0
        %v4009 = vadd.f32 %v3987, 1.0
        %v4010 = vadd.f32 %v3989, 1.0
        %v4011 = vadd.f32 %v3991, 1.0
        %v4012 = vadd.f32 %v3993, 1.0
        %v4013 = vadd.f32 %v3995, 1.0
        %v4014 = vadd.f32 %v3997, 1.0
        %v4015 = vadd.f32 %v3999, 1.0
        %v4016 = vrcp.pop %v4000
        %v4017 = vrcp.pop %v4001
        %v4018 = vrcp.pop %v4002
        %v4019 = vrcp.pop %v4003
        %v4020 = vrcp.pop %v4004
        %v4021 = vrcp.pop %v4005
        %v4022 = vrcp.pop %v4006
        %v4023 = vrcp.pop %v4007
        %v4024 = vrcp.pop %v4008
        %v4025 = vrcp.pop %v4009
        %v4026 = vrcp.pop %v4010
        %v4027 = vrcp.pop %v4011
        %v4028 = vrcp.pop %v4012
        %v4029 = vrcp.pop %v4013
        %v4030 = vrcp.pop %v4014
        %v4031 = vrcp.pop %v4015
        %v4032 = vmul.f32 %v2110, %v4016
        %v4033 = vmul.f32 %v2112, %v4017
        %v4034 = vmul.f32 %v2118, %v4018
        %v4035 = vmul.f32 %v2120, %v4019
        %v4036 = vmul.f32 %v2126, %v4020
        %v4037 = vmul.f32 %v2128, %v4021
        %v4038 = vmul.f32 %v2134, %v4022
        %v4039 = vmul.f32 %v2136, %v4023
        %v4040 = vmul.f32 %v2142, %v4024
        %v4041 = vmul.f32 %v2144, %v4025
        %v4042 = vmul.f32 %v2150, %v4026
        %v4043 = vmul.f32 %v2152, %v4027
        %v4044 = vmul.f32 %v2158, %v4028
        %v4045 = vmul.f32 %v2160, %v4029
        %v4046 = vmul.f32 %v2166, %v4030
        %v4047 = vmul.f32 %v2168, %v4031
        %v4048 = vmul.f32 %v4032, %v3892
        %v4049 = vmul.f32 %v4033, %v3894
        %v4050 = vmul.f32 %v4034, %v3900
        %v4051 = vmul.f32 %v4035, %v3902
        %v4052 = vmul.f32 %v4036, %v3908
        %v4053 = vmul.f32 %v4037, %v3910
        %v4054 = vmul.f32 %v4038, %v3916
        %v4055 = vmul.f32 %v4039, %v3918
        %v4056 = vmul.f32 %v4040, %v3924
        %v4057 = vmul.f32 %v4041, %v3926
        %v4058 = vmul.f32 %v4042, %v3932
        %v4059 = vmul.f32 %v4043, %v3934
        %v4060 = vmul.f32 %v4044, %v3940
        %v4061 = vmul.f32 %v4045, %v3942
        %v4062 = vmul.f32 %v4046, %v3948
        %v4063 = vmul.f32 %v4047, %v3950
        %v4064 = vld [vmem:[#allocation2] sm:$0xff]
        %v4065 = vld [vmem:[#allocation2 + $0x8] sm:$0xff]
        %v4066 = vld [vmem:[#allocation2 + $0x10] sm:$0xff]
        %v4067 = vld [vmem:[#allocation2 + $0x18] sm:$0xff]
        %v4068 = vld [vmem:[#allocation2 + $0x20] sm:$0xff]
        %v4069 = vld [vmem:[#allocation2 + $0x28] sm:$0xff]
        %v4070 = vld [vmem:[#allocation2 + $0x30] sm:$0xff]
        %v4071 = vld [vmem:[#allocation2 + $0x38] sm:$0xff]
        %v4072 = vld [vmem:[#allocation2 + $0x40] sm:$0xff]
        %v4073 = vld [vmem:[#allocation2 + $0x48] sm:$0xff]
        %v4074 = vld [vmem:[#allocation2 + $0x50] sm:$0xff]
        %v4075 = vld [vmem:[#allocation2 + $0x58] sm:$0xff]
        %v4076 = vld [vmem:[#allocation2 + $0x60] sm:$0xff]
        %v4077 = vld [vmem:[#allocation2 + $0x68] sm:$0xff]
        %v4078 = vld [vmem:[#allocation2 + $0x70] sm:$0xff]
        %v4079 = vld [vmem:[#allocation2 + $0x78] sm:$0xff]
        %v4080 = vld [vmem:[%s307] sm:$0xff]
        %v4081 = vld [vmem:[%s307 + $0x8] sm:$0xff]
        %v4082 = vld [vmem:[%s307 + $0x10] sm:$0xff]
        %v4083 = vld [vmem:[%s307 + $0x18] sm:$0xff]
        %v4084 = vld [vmem:[%s307 + $0x20] sm:$0xff]
        %v4085 = vld [vmem:[%s307 + $0x28] sm:$0xff]
        %v4086 = vld [vmem:[%s307 + $0x30] sm:$0xff]
        %v4087 = vld [vmem:[%s307 + $0x38] sm:$0xff]
        %v4088 = vld [vmem:[%s307 + $0x40] sm:$0xff]
        %v4089 = vld [vmem:[%s307 + $0x48] sm:$0xff]
        %v4090 = vld [vmem:[%s307 + $0x50] sm:$0xff]
        %v4091 = vld [vmem:[%s307 + $0x58] sm:$0xff]
        %v4092 = vld [vmem:[%s307 + $0x60] sm:$0xff]
        %v4093 = vld [vmem:[%s307 + $0x68] sm:$0xff]
        %v4094 = vld [vmem:[%s307 + $0x70] sm:$0xff]
        %v4095 = vld [vmem:[%s307 + $0x78] sm:$0xff]
        %v4096 = vld [vmem:[%s307 + $0x80] sm:$0xff]
        %v4097 = vld [vmem:[%s307 + $0x88] sm:$0xff]
        %v4098 = vld [vmem:[%s307 + $0x90] sm:$0xff]
        %v4099 = vld [vmem:[%s307 + $0x98] sm:$0xff]
        %v4100 = vld [vmem:[%s307 + $0xa0] sm:$0xff]
        %v4101 = vld [vmem:[%s307 + $0xa8] sm:$0xff]
        %v4102 = vld [vmem:[%s307 + $0xb0] sm:$0xff]
        %v4103 = vld [vmem:[%s307 + $0xb8] sm:$0xff]
        %v4104 = vld [vmem:[%s307 + $0xc0] sm:$0xff]
        %v4105 = vld [vmem:[%s307 + $0xc8] sm:$0xff]
        %v4106 = vld [vmem:[%s307 + $0xd0] sm:$0xff]
        %v4107 = vld [vmem:[%s307 + $0xd8] sm:$0xff]
        %v4108 = vld [vmem:[%s307 + $0xe0] sm:$0xff]
        %v4109 = vld [vmem:[%s307 + $0xe8] sm:$0xff]
        %v4110 = vld [vmem:[%s307 + $0xf0] sm:$0xff]
        %v4111 = vld [vmem:[%s307 + $0xf8] sm:$0xff]
        %v4112 = vld [vmem:[%s307 + $0x100] sm:$0xff]
        %v4113 = vld [vmem:[%s307 + $0x108] sm:$0xff]
        %v4114 = vld [vmem:[%s307 + $0x110] sm:$0xff]
        %v4115 = vld [vmem:[%s307 + $0x118] sm:$0xff]
        %v4116 = vld [vmem:[%s307 + $0x120] sm:$0xff]
        %v4117 = vld [vmem:[%s307 + $0x128] sm:$0xff]
        %v4118 = vld [vmem:[%s307 + $0x130] sm:$0xff]
        %v4119 = vld [vmem:[%s307 + $0x138] sm:$0xff]
        %v4120 = vld [vmem:[%s307 + $0x140] sm:$0xff]
        %v4121 = vld [vmem:[%s307 + $0x148] sm:$0xff]
        %v4122 = vld [vmem:[%s307 + $0x150] sm:$0xff]
        %v4123 = vld [vmem:[%s307 + $0x158] sm:$0xff]
        %v4124 = vld [vmem:[%s307 + $0x160] sm:$0xff]
        %v4125 = vld [vmem:[%s307 + $0x168] sm:$0xff]
        %v4126 = vld [vmem:[%s307 + $0x170] sm:$0xff]
        %v4127 = vld [vmem:[%s307 + $0x178] sm:$0xff]
        %v4128 = vld [vmem:[%s307 + $0x180] sm:$0xff]
        %v4129 = vld [vmem:[%s307 + $0x188] sm:$0xff]
        %v4130 = vld [vmem:[%s307 + $0x190] sm:$0xff]
        %v4131 = vld [vmem:[%s307 + $0x198] sm:$0xff]
        %v4132 = vld [vmem:[%s307 + $0x1a0] sm:$0xff]
        %v4133 = vld [vmem:[%s307 + $0x1a8] sm:$0xff]
        %v4134 = vld [vmem:[%s307 + $0x1b0] sm:$0xff]
        %v4135 = vld [vmem:[%s307 + $0x1b8] sm:$0xff]
        %v4136 = vld [vmem:[%s307 + $0x1c0] sm:$0xff]
        %v4137 = vld [vmem:[%s307 + $0x1c8] sm:$0xff]
        %v4138 = vld [vmem:[%s307 + $0x1d0] sm:$0xff]
        %v4139 = vld [vmem:[%s307 + $0x1d8] sm:$0xff]
        %v4140 = vld [vmem:[%s307 + $0x1e0] sm:$0xff]
        %v4141 = vld [vmem:[%s307 + $0x1e8] sm:$0xff]
        %v4142 = vld [vmem:[%s307 + $0x1f0] sm:$0xff]
        %v4143 = vld [vmem:[%s307 + $0x1f8] sm:$0xff]
        %v4144 = vand.u32 %v4081, 4294901760
        %4145 = vmatprep.subr.mxu0 %v4144
        %v4146 = vand.u32 %v4080, 4294901760
        %4147 = vmatpush1.msra.mxu0 %v4146
        %v4148 = vand.u32 %v4083, 4294901760
        %4149 = vmatprep.subr.mxu0 %v4148
        %v4150 = vand.u32 %v4082, 4294901760
        %4151 = vmatpush1.msra.mxu0 %v4150
        %v4152 = vand.u32 %v4085, 4294901760
        %4153 = vmatprep.subr.mxu0 %v4152
        %v4154 = vand.u32 %v4084, 4294901760
        %4155 = vmatpush1.msra.mxu0 %v4154
        %v4156 = vand.u32 %v4087, 4294901760
        %4157 = vmatprep.subr.mxu0 %v4156
        %v4158 = vand.u32 %v4086, 4294901760
        %4159 = vmatpush1.msra.mxu0 %v4158
        %v4160 = vand.u32 %v4089, 4294901760
        %4161 = vmatprep.subr.mxu0 %v4160
        %v4162 = vand.u32 %v4088, 4294901760
        %4163 = vmatpush1.msra.mxu0 %v4162
        %v4164 = vand.u32 %v4091, 4294901760
        %4165 = vmatprep.subr.mxu0 %v4164
        %v4166 = vand.u32 %v4090, 4294901760
        %4167 = vmatpush1.msra.mxu0 %v4166
        %v4168 = vand.u32 %v4093, 4294901760
        %4169 = vmatprep.subr.mxu0 %v4168
        %v4170 = vand.u32 %v4092, 4294901760
        %4171 = vmatpush1.msra.mxu0 %v4170
        %v4172 = vand.u32 %v4095, 4294901760
        %4173 = vmatprep.subr.mxu0 %v4172
        %v4174 = vand.u32 %v4094, 4294901760
        %4175 = vmatpush1.msra.mxu0 %v4174
        %v4176 = vand.u32 %v4097, 4294901760
        %4177 = vmatprep.subr.mxu0 %v4176
        %v4178 = vand.u32 %v4096, 4294901760
        %4179 = vmatpush1.msra.mxu0 %v4178
        %v4180 = vand.u32 %v4099, 4294901760
        %4181 = vmatprep.subr.mxu0 %v4180
        %v4182 = vand.u32 %v4098, 4294901760
        %4183 = vmatpush1.msra.mxu0 %v4182
        %v4184 = vand.u32 %v4101, 4294901760
        %4185 = vmatprep.subr.mxu0 %v4184
        %v4186 = vand.u32 %v4100, 4294901760
        %4187 = vmatpush1.msra.mxu0 %v4186
        %v4188 = vand.u32 %v4103, 4294901760
        %4189 = vmatprep.subr.mxu0 %v4188
        %v4190 = vand.u32 %v4102, 4294901760
        %4191 = vmatpush1.msra.mxu0 %v4190
        %v4192 = vand.u32 %v4105, 4294901760
        %4193 = vmatprep.subr.mxu0 %v4192
        %v4194 = vand.u32 %v4104, 4294901760
        %4195 = vmatpush1.msra.mxu0 %v4194
        %v4196 = vand.u32 %v4107, 4294901760
        %4197 = vmatprep.subr.mxu0 %v4196
        %v4198 = vand.u32 %v4106, 4294901760
        %4199 = vmatpush1.msra.mxu0 %v4198
        %v4200 = vand.u32 %v4109, 4294901760
        %4201 = vmatprep.subr.mxu0 %v4200
        %v4202 = vand.u32 %v4108, 4294901760
        %4203 = vmatpush1.msra.mxu0 %v4202
        %v4204 = vand.u32 %v4111, 4294901760
        %4205 = vmatprep.subr.mxu0 %v4204
        %v4206 = vand.u32 %v4110, 4294901760
        %4207 = vmatpush1.msra.mxu0 %v4206
        %v4208 = vand.u32 %v4113, 4294901760
        %4209 = vmatprep.subr.mxu0 %v4208
        %v4210 = vand.u32 %v4112, 4294901760
        %4211 = vmatpush1.msra.mxu0 %v4210
        %v4212 = vand.u32 %v4115, 4294901760
        %4213 = vmatprep.subr.mxu0 %v4212
        %v4214 = vand.u32 %v4114, 4294901760
        %4215 = vmatpush1.msra.mxu0 %v4214
        %v4216 = vand.u32 %v4117, 4294901760
        %4217 = vmatprep.subr.mxu0 %v4216
        %v4218 = vand.u32 %v4116, 4294901760
        %4219 = vmatpush1.msra.mxu0 %v4218
        %v4220 = vand.u32 %v4119, 4294901760
        %4221 = vmatprep.subr.mxu0 %v4220
        %v4222 = vand.u32 %v4118, 4294901760
        %4223 = vmatpush1.msra.mxu0 %v4222
        %v4224 = vand.u32 %v4121, 4294901760
        %4225 = vmatprep.subr.mxu0 %v4224
        %v4226 = vand.u32 %v4120, 4294901760
        %4227 = vmatpush1.msra.mxu0 %v4226
        %v4228 = vand.u32 %v4123, 4294901760
        %4229 = vmatprep.subr.mxu0 %v4228
        %v4230 = vand.u32 %v4122, 4294901760
        %4231 = vmatpush1.msra.mxu0 %v4230
        %v4232 = vand.u32 %v4125, 4294901760
        %4233 = vmatprep.subr.mxu0 %v4232
        %v4234 = vand.u32 %v4124, 4294901760
        %4235 = vmatpush1.msra.mxu0 %v4234
        %v4236 = vand.u32 %v4127, 4294901760
        %4237 = vmatprep.subr.mxu0 %v4236
        %v4238 = vand.u32 %v4126, 4294901760
        %4239 = vmatpush1.msra.mxu0 %v4238
        %v4240 = vand.u32 %v4129, 4294901760
        %4241 = vmatprep.subr.mxu0 %v4240
        %v4242 = vand.u32 %v4128, 4294901760
        %4243 = vmatpush1.msra.mxu0 %v4242
        %v4244 = vand.u32 %v4131, 4294901760
        %4245 = vmatprep.subr.mxu0 %v4244
        %v4246 = vand.u32 %v4130, 4294901760
        %4247 = vmatpush1.msra.mxu0 %v4246
        %v4248 = vand.u32 %v4133, 4294901760
        %4249 = vmatprep.subr.mxu0 %v4248
        %v4250 = vand.u32 %v4132, 4294901760
        %4251 = vmatpush1.msra.mxu0 %v4250
        %v4252 = vand.u32 %v4135, 4294901760
        %4253 = vmatprep.subr.mxu0 %v4252
        %v4254 = vand.u32 %v4134, 4294901760
        %4255 = vmatpush1.msra.mxu0 %v4254
        %v4256 = vand.u32 %v4137, 4294901760
        %4257 = vmatprep.subr.mxu0 %v4256
        %v4258 = vand.u32 %v4136, 4294901760
        %4259 = vmatpush1.msra.mxu0 %v4258
        %v4260 = vand.u32 %v4139, 4294901760
        %4261 = vmatprep.subr.mxu0 %v4260
        %v4262 = vand.u32 %v4138, 4294901760
        %4263 = vmatpush1.msra.mxu0 %v4262
        %v4264 = vand.u32 %v4141, 4294901760
        %4265 = vmatprep.subr.mxu0 %v4264
        %v4266 = vand.u32 %v4140, 4294901760
        %4267 = vmatpush1.msra.mxu0 %v4266
        %v4268 = vand.u32 %v4143, 4294901760
        %4269 = vmatprep.subr.mxu0 %v4268
        %v4270 = vand.u32 %v4142, 4294901760
        %4271 = vmatpush1.msra.mxu0 %v4270
        %v4272 = vand.u32 %v4049, 4294901760
        %v4273 = vsub.f32 %v4049, %v4272
        %v4274 = vand.u32 %v4273, 4294901760
        %v4275 = vsub.f32 %v4273, %v4274
        %v4276 = vand.u32 %v4275, 4294901760
        %4277 = vmatprep.mubr.f32.mxu0 %v4276
        %v4278 = vand.u32 %v4048, 4294901760
        %v4279 = vsub.f32 %v4048, %v4278
        %v4280 = vand.u32 %v4279, 4294901760
        %v4281 = vsub.f32 %v4279, %v4280
        %v4282 = vand.u32 %v4281, 4294901760
        %4283 = vmatmul.mubr.f32.gmra.mrb[0].mxu0 %v4282
        %v4284 = vpop.f32.mrb[0].mxu0
        %v4285 = vadd.f32 0.0, %v4284
        %v4286 = vpop.f32.mrb[0].mxu0
        %v4287 = vadd.f32 0.0, %v4286
        %v4288 = vand.u32 %v4051, 4294901760
        %v4289 = vsub.f32 %v4051, %v4288
        %v4290 = vand.u32 %v4289, 4294901760
        %v4291 = vsub.f32 %v4289, %v4290
        %v4292 = vand.u32 %v4291, 4294901760
        %4293 = vmatprep.mubr.f32.mxu0 %v4292
        %v4294 = vand.u32 %v4050, 4294901760
        %v4295 = vsub.f32 %v4050, %v4294
        %v4296 = vand.u32 %v4295, 4294901760
        %v4297 = vsub.f32 %v4295, %v4296
        %v4298 = vand.u32 %v4297, 4294901760
        %4299 = vmatmul.mubr.f32.gmra.mrb[0].mxu0 %v4298
        %v4300 = vpop.f32.mrb[0].mxu0
        %v4301 = vadd.f32 0.0, %v4300
        %v4302 = vpop.f32.mrb[0].mxu0
        %v4303 = vadd.f32 0.0, %v4302
        %v4304 = vand.u32 %v4053, 4294901760
        %v4305 = vsub.f32 %v4053, %v4304
        %v4306 = vand.u32 %v4305, 4294901760
        %v4307 = vsub.f32 %v4305, %v4306
        %v4308 = vand.u32 %v4307, 4294901760
        %4309 = vmatprep.mubr.f32.mxu0 %v4308
        %v4310 = vand.u32 %v4052, 4294901760
        %v4311 = vsub.f32 %v4052, %v4310
        %v4312 = vand.u32 %v4311, 4294901760
        %v4313 = vsub.f32 %v4311, %v4312
        %v4314 = vand.u32 %v4313, 4294901760
        %4315 = vmatmul.mubr.f32.gmra.mrb[0].mxu0 %v4314
        %v4316 = vpop.f32.mrb[0].mxu0
        %v4317 = vadd.f32 0.0, %v4316
        %v4318 = vpop.f32.mrb[0].mxu0
        %v4319 = vadd.f32 0.0, %v4318
        %v4320 = vand.u32 %v4055, 4294901760
        %v4321 = vsub.f32 %v4055, %v4320
        %v4322 = vand.u32 %v4321, 4294901760
        %v4323 = vsub.f32 %v4321, %v4322
        %v4324 = vand.u32 %v4323, 4294901760
        %4325 = vmatprep.mubr.f32.mxu0 %v4324
        %v4326 = vand.u32 %v4054, 4294901760
        %v4327 = vsub.f32 %v4054, %v4326
        %v4328 = vand.u32 %v4327, 4294901760
        %v4329 = vsub.f32 %v4327, %v4328
        %v4330 = vand.u32 %v4329, 4294901760
        %4331 = vmatmul.mubr.f32.gmra.mrb[0].mxu0 %v4330
        %v4332 = vpop.f32.mrb[0].mxu0
        %v4333 = vadd.f32 0.0, %v4332
        %v4334 = vpop.f32.mrb[0].mxu0
        %v4335 = vadd.f32 0.0, %v4334
        %v4336 = vand.u32 %v4057, 4294901760
        %v4337 = vsub.f32 %v4057, %v4336
        %v4338 = vand.u32 %v4337, 4294901760
        %v4339 = vsub.f32 %v4337, %v4338
        %v4340 = vand.u32 %v4339, 4294901760
        %4341 = vmatprep.mubr.f32.mxu0 %v4340
        %v4342 = vand.u32 %v4056, 4294901760
        %v4343 = vsub.f32 %v4056, %v4342
        %v4344 = vand.u32 %v4343, 4294901760
        %v4345 = vsub.f32 %v4343, %v4344
        %v4346 = vand.u32 %v4345, 4294901760
        %4347 = vmatmul.mubr.f32.gmra.mrb[0].mxu0 %v4346
        %v4348 = vpop.f32.mrb[0].mxu0
        %v4349 = vadd.f32 0.0, %v4348
        %v4350 = vpop.f32.mrb[0].mxu0
        %v4351 = vadd.f32 0.0, %v4350
        %v4352 = vand.u32 %v4059, 4294901760
        %v4353 = vsub.f32 %v4059, %v4352
        %v4354 = vand.u32 %v4353, 4294901760
        %v4355 = vsub.f32 %v4353, %v4354
        %v4356 = vand.u32 %v4355, 4294901760
        %4357 = vmatprep.mubr.f32.mxu0 %v4356
        %v4358 = vand.u32 %v4058, 4294901760
        %v4359 = vsub.f32 %v4058, %v4358
        %v4360 = vand.u32 %v4359, 4294901760
        %v4361 = vsub.f32 %v4359, %v4360
        %v4362 = vand.u32 %v4361, 4294901760
        %4363 = vmatmul.mubr.f32.gmra.mrb[0].mxu0 %v4362
        %v4364 = vpop.f32.mrb[0].mxu0
        %v4365 = vadd.f32 0.0, %v4364
        %v4366 = vpop.f32.mrb[0].mxu0
        %v4367 = vadd.f32 0.0, %v4366
        %v4368 = vand.u32 %v4061, 4294901760
        %v4369 = vsub.f32 %v4061, %v4368
        %v4370 = vand.u32 %v4369, 4294901760
        %v4371 = vsub.f32 %v4369, %v4370
        %v4372 = vand.u32 %v4371, 4294901760
        %4373 = vmatprep.mubr.f32.mxu0 %v4372
        %v4374 = vand.u32 %v4060, 4294901760
        %v4375 = vsub.f32 %v4060, %v4374
        %v4376 = vand.u32 %v4375, 4294901760
        %v4377 = vsub.f32 %v4375, %v4376
        %v4378 = vand.u32 %v4377, 4294901760
        %4379 = vmatmul.mubr.f32.gmra.mrb[0].mxu0 %v4378
        %v4380 = vpop.f32.mrb[0].mxu0
        %v4381 = vadd.f32 0.0, %v4380
        %v4382 = vpop.f32.mrb[0].mxu0
        %v4383 = vadd.f32 0.0, %v4382
        %v4384 = vand.u32 %v4063, 4294901760
        %v4385 = vsub.f32 %v4063, %v4384
        %v4386 = vand.u32 %v4385, 4294901760
        %v4387 = vsub.f32 %v4385, %v4386
        %v4388 = vand.u32 %v4387, 4294901760
        %4389 = vmatprep.mubr.f32.mxu0 %v4388
        %v4390 = vand.u32 %v4062, 4294901760
        %v4391 = vsub.f32 %v4062, %v4390
        %v4392 = vand.u32 %v4391, 4294901760
        %v4393 = vsub.f32 %v4391, %v4392
        %v4394 = vand.u32 %v4393, 4294901760
        %4395 = vmatmul.mubr.f32.gmra.mrb[0].mxu0 %v4394
        %v4396 = vpop.f32.mrb[0].mxu0
        %v4397 = vadd.f32 0.0, %v4396
        %v4398 = vpop.f32.mrb[0].mxu0
        %v4399 = vadd.f32 0.0, %v4398
        %4400 = vdwg.mxu0
        %v4401 = vand.u32 %v4081, 4294901760
        %v4402 = vsub.f32 %v4081, %v4401
        %v4403 = vand.u32 %v4402, 4294901760
        %v4404 = vsub.f32 %v4402, %v4403
        %v4405 = vand.u32 %v4404, 4294901760
        %4406 = vmatprep.subr.mxu0 %v4405
        %v4407 = vand.u32 %v4080, 4294901760
        %v4408 = vsub.f32 %v4080, %v4407
        %v4409 = vand.u32 %v4408, 4294901760
        %v4410 = vsub.f32 %v4408, %v4409
        %v4411 = vand.u32 %v4410, 4294901760
        %4412 = vmatpush1.msra.mxu0 %v4411
        %v4413 = vand.u32 %v4083, 4294901760
        %v4414 = vsub.f32 %v4083, %v4413
        %v4415 = vand.u32 %v4414, 4294901760
        %v4416 = vsub.f32 %v4414, %v4415
        %v4417 = vand.u32 %v4416, 4294901760
        %4418 = vmatprep.subr.mxu0 %v4417
        %v4419 = vand.u32 %v4082, 4294901760
        %v4420 = vsub.f32 %v4082, %v4419
        %v4421 = vand.u32 %v4420, 4294901760
        %v4422 = vsub.f32 %v4420, %v4421
        %v4423 = vand.u32 %v4422, 4294901760
        %4424 = vmatpush1.msra.mxu0 %v4423
        %v4425 = vand.u32 %v4085, 4294901760
        %v4426 = vsub.f32 %v4085, %v4425
        %v4427 = vand.u32 %v4426, 4294901760
        %v4428 = vsub.f32 %v4426, %v4427
        %v4429 = vand.u32 %v4428, 4294901760
        %4430 = vmatprep.subr.mxu0 %v4429
        %v4431 = vand.u32 %v4084, 4294901760
        %v4432 = vsub.f32 %v4084, %v4431
        %v4433 = vand.u32 %v4432, 4294901760
        %v4434 = vsub.f32 %v4432, %v4433
        %v4435 = vand.u32 %v4434, 4294901760
        %4436 = vmatpush1.msra.mxu0 %v4435
        %v4437 = vand.u32 %v4087, 4294901760
        %v4438 = vsub.f32 %v4087, %v4437
        %v4439 = vand.u32 %v4438, 4294901760
        %v4440 = vsub.f32 %v4438, %v4439
        %v4441 = vand.u32 %v4440, 4294901760
        %4442 = vmatprep.subr.mxu0 %v4441
        %v4443 = vand.u32 %v4086, 4294901760
        %v4444 = vsub.f32 %v4086, %v4443
        %v4445 = vand.u32 %v4444, 4294901760
        %v4446 = vsub.f32 %v4444, %v4445
        %v4447 = vand.u32 %v4446, 4294901760
        %4448 = vmatpush1.msra.mxu0 %v4447
        %v4449 = vand.u32 %v4089, 4294901760
        %v4450 = vsub.f32 %v4089, %v4449
        %v4451 = vand.u32 %v4450, 4294901760
        %v4452 = vsub.f32 %v4450, %v4451
        %v4453 = vand.u32 %v4452, 4294901760
        %4454 = vmatprep.subr.mxu0 %v4453
        %v4455 = vand.u32 %v4088, 4294901760
        %v4456 = vsub.f32 %v4088, %v4455
        %v4457 = vand.u32 %v4456, 4294901760
        %v4458 = vsub.f32 %v4456, %v4457
        %v4459 = vand.u32 %v4458, 4294901760
        %4460 = vmatpush1.msra.mxu0 %v4459
        %v4461 = vand.u32 %v4091, 4294901760
        %v4462 = vsub.f32 %v4091, %v4461
        %v4463 = vand.u32 %v4462, 4294901760
        %v4464 = vsub.f32 %v4462, %v4463
        %v4465 = vand.u32 %v4464, 4294901760
        %4466 = vmatprep.subr.mxu0 %v4465
        %v4467 = vand.u32 %v4090, 4294901760
        %v4468 = vsub.f32 %v4090, %v4467
        %v4469 = vand.u32 %v4468, 4294901760
        %v4470 = vsub.f32 %v4468, %v4469
        %v4471 = vand.u32 %v4470, 4294901760
        %4472 = vmatpush1.msra.mxu0 %v4471
        %v4473 = vand.u32 %v4093, 4294901760
        %v4474 = vsub.f32 %v4093, %v4473
        %v4475 = vand.u32 %v4474, 4294901760
        %v4476 = vsub.f32 %v4474, %v4475
        %v4477 = vand.u32 %v4476, 4294901760
        %4478 = vmatprep.subr.mxu0 %v4477
        %v4479 = vand.u32 %v4092, 4294901760
        %v4480 = vsub.f32 %v4092, %v4479
        %v4481 = vand.u32 %v4480, 4294901760
        %v4482 = vsub.f32 %v4480, %v4481
        %v4483 = vand.u32 %v4482, 4294901760
        %4484 = vmatpush1.msra.mxu0 %v4483
        %v4485 = vand.u32 %v4095, 4294901760
        %v4486 = vsub.f32 %v4095, %v4485
        %v4487 = vand.u32 %v4486, 4294901760
        %v4488 = vsub.f32 %v4486, %v4487
        %v4489 = vand.u32 %v4488, 4294901760
        %4490 = vmatprep.subr.mxu0 %v4489
        %v4491 = vand.u32 %v4094, 4294901760
        %v4492 = vsub.f32 %v4094, %v4491
        %v4493 = vand.u32 %v4492, 4294901760
        %v4494 = vsub.f32 %v4492, %v4493
        %v4495 = vand.u32 %v4494, 4294901760
        %4496 = vmatpush1.msra.mxu0 %v4495
        %v4497 = vand.u32 %v4097, 4294901760
        %v4498 = vsub.f32 %v4097, %v4497
        %v4499 = vand.u32 %v4498, 4294901760
        %v4500 = vsub.f32 %v4498, %v4499
        %v4501 = vand.u32 %v4500, 4294901760
        %4502 = vmatprep.subr.mxu0 %v4501
        %v4503 = vand.u32 %v4096, 4294901760
        %v4504 = vsub.f32 %v4096, %v4503
        %v4505 = vand.u32 %v4504, 4294901760
        %v4506 = vsub.f32 %v4504, %v4505
        %v4507 = vand.u32 %v4506, 4294901760
        %4508 = vmatpush1.msra.mxu0 %v4507
        %v4509 = vand.u32 %v4099, 4294901760
        %v4510 = vsub.f32 %v4099, %v4509
        %v4511 = vand.u32 %v4510, 4294901760
        %v4512 = vsub.f32 %v4510, %v4511
        %v4513 = vand.u32 %v4512, 4294901760
        %4514 = vmatprep.subr.mxu0 %v4513
        %v4515 = vand.u32 %v4098, 4294901760
        %v4516 = vsub.f32 %v4098, %v4515
        %v4517 = vand.u32 %v4516, 4294901760
        %v4518 = vsub.f32 %v4516, %v4517
        %v4519 = vand.u32 %v4518, 4294901760
        %4520 = vmatpush1.msra.mxu0 %v4519
        %v4521 = vand.u32 %v4101, 4294901760
        %v4522 = vsub.f32 %v4101, %v4521
        %v4523 = vand.u32 %v4522, 4294901760
        %v4524 = vsub.f32 %v4522, %v4523
        %v4525 = vand.u32 %v4524, 4294901760
        %4526 = vmatprep.subr.mxu0 %v4525
        %v4527 = vand.u32 %v4100, 4294901760
        %v4528 = vsub.f32 %v4100, %v4527
        %v4529 = vand.u32 %v4528, 4294901760
        %v4530 = vsub.f32 %v4528, %v4529
        %v4531 = vand.u32 %v4530, 4294901760
        %4532 = vmatpush1.msra.mxu0 %v4531
        %v4533 = vand.u32 %v4103, 4294901760
        %v4534 = vsub.f32 %v4103, %v4533
        %v4535 = vand.u32 %v4534, 4294901760
        %v4536 = vsub.f32 %v4534, %v4535
        %v4537 = vand.u32 %v4536, 4294901760
        %4538 = vmatprep.subr.mxu0 %v4537
        %v4539 = vand.u32 %v4102, 4294901760
        %v4540 = vsub.f32 %v4102, %v4539
        %v4541 = vand.u32 %v4540, 4294901760
        %v4542 = vsub.f32 %v4540, %v4541
        %v4543 = vand.u32 %v4542, 4294901760
        %4544 = vmatpush1.msra.mxu0 %v4543
        %v4545 = vand.u32 %v4105, 4294901760
        %v4546 = vsub.f32 %v4105, %v4545
        %v4547 = vand.u32 %v4546, 4294901760
        %v4548 = vsub.f32 %v4546, %v4547
        %v4549 = vand.u32 %v4548, 4294901760
        %4550 = vmatprep.subr.mxu0 %v4549
        %v4551 = vand.u32 %v4104, 4294901760
        %v4552 = vsub.f32 %v4104, %v4551
        %v4553 = vand.u32 %v4552, 4294901760
        %v4554 = vsub.f32 %v4552, %v4553
        %v4555 = vand.u32 %v4554, 4294901760
        %4556 = vmatpush1.msra.mxu0 %v4555
        %v4557 = vand.u32 %v4107, 4294901760
        %v4558 = vsub.f32 %v4107, %v4557
        %v4559 = vand.u32 %v4558, 4294901760
        %v4560 = vsub.f32 %v4558, %v4559
        %v4561 = vand.u32 %v4560, 4294901760
        %4562 = vmatprep.subr.mxu0 %v4561
        %v4563 = vand.u32 %v4106, 4294901760
        %v4564 = vsub.f32 %v4106, %v4563
        %v4565 = vand.u32 %v4564, 4294901760
        %v4566 = vsub.f32 %v4564, %v4565
        %v4567 = vand.u32 %v4566, 4294901760
        %4568 = vmatpush1.msra.mxu0 %v4567
        %v4569 = vand.u32 %v4109, 4294901760
        %v4570 = vsub.f32 %v4109, %v4569
        %v4571 = vand.u32 %v4570, 4294901760
        %v4572 = vsub.f32 %v4570, %v4571
        %v4573 = vand.u32 %v4572, 4294901760
        %4574 = vmatprep.subr.mxu0 %v4573
        %v4575 = vand.u32 %v4108, 4294901760
        %v4576 = vsub.f32 %v4108, %v4575
        %v4577 = vand.u32 %v4576, 4294901760
        %v4578 = vsub.f32 %v4576, %v4577
        %v4579 = vand.u32 %v4578, 4294901760
        %4580 = vmatpush1.msra.mxu0 %v4579
        %v4581 = vand.u32 %v4111, 4294901760
        %v4582 = vsub.f32 %v4111, %v4581
        %v4583 = vand.u32 %v4582, 4294901760
        %v4584 = vsub.f32 %v4582, %v4583
        %v4585 = vand.u32 %v4584, 4294901760
        %4586 = vmatprep.subr.mxu0 %v4585
        %v4587 = vand.u32 %v4110, 4294901760
        %v4588 = vsub.f32 %v4110, %v4587
        %v4589 = vand.u32 %v4588, 4294901760
        %v4590 = vsub.f32 %v4588, %v4589
        %v4591 = vand.u32 %v4590, 4294901760
        %4592 = vmatpush1.msra.mxu0 %v4591
        %v4593 = vand.u32 %v4113, 4294901760
        %v4594 = vsub.f32 %v4113, %v4593
        %v4595 = vand.u32 %v4594, 4294901760
        %v4596 = vsub.f32 %v4594, %v4595
        %v4597 = vand.u32 %v4596, 4294901760
        %4598 = vmatprep.subr.mxu0 %v4597
        %v4599 = vand.u32 %v4112, 4294901760
        %v4600 = vsub.f32 %v4112, %v4599
        %v4601 = vand.u32 %v4600, 4294901760
        %v4602 = vsub.f32 %v4600, %v4601
        %v4603 = vand.u32 %v4602, 4294901760
        %4604 = vmatpush1.msra.mxu0 %v4603
        %v4605 = vand.u32 %v4115, 4294901760
        %v4606 = vsub.f32 %v4115, %v4605
        %v4607 = vand.u32 %v4606, 4294901760
        %v4608 = vsub.f32 %v4606, %v4607
        %v4609 = vand.u32 %v4608, 4294901760
        %4610 = vmatprep.subr.mxu0 %v4609
        %v4611 = vand.u32 %v4114, 4294901760
        %v4612 = vsub.f32 %v4114, %v4611
        %v4613 = vand.u32 %v4612, 4294901760
        %v4614 = vsub.f32 %v4612, %v4613
        %v4615 = vand.u32 %v4614, 4294901760
        %4616 = vmatpush1.msra.mxu0 %v4615
        %v4617 = vand.u32 %v4117, 4294901760
        %v4618 = vsub.f32 %v4117, %v4617
        %v4619 = vand.u32 %v4618, 4294901760
        %v4620 = vsub.f32 %v4618, %v4619
        %v4621 = vand.u32 %v4620, 4294901760
        %4622 = vmatprep.subr.mxu0 %v4621
        %v4623 = vand.u32 %v4116, 4294901760
        %v4624 = vsub.f32 %v4116, %v4623
        %v4625 = vand.u32 %v4624, 4294901760
        %v4626 = vsub.f32 %v4624, %v4625
        %v4627 = vand.u32 %v4626, 4294901760
        %4628 = vmatpush1.msra.mxu0 %v4627
        %v4629 = vand.u32 %v4119, 4294901760
        %v4630 = vsub.f32 %v4119, %v4629
        %v4631 = vand.u32 %v4630, 4294901760
        %v4632 = vsub.f32 %v4630, %v4631
        %v4633 = vand.u32 %v4632, 4294901760
        %4634 = vmatprep.subr.mxu0 %v4633
        %v4635 = vand.u32 %v4118, 4294901760
        %v4636 = vsub.f32 %v4118, %v4635
        %v4637 = vand.u32 %v4636, 4294901760
        %v4638 = vsub.f32 %v4636, %v4637
        %v4639 = vand.u32 %v4638, 4294901760
        %4640 = vmatpush1.msra.mxu0 %v4639
        %v4641 = vand.u32 %v4121, 4294901760
        %v4642 = vsub.f32 %v4121, %v4641
        %v4643 = vand.u32 %v4642, 4294901760
        %v4644 = vsub.f32 %v4642, %v4643
        %v4645 = vand.u32 %v4644, 4294901760
        %4646 = vmatprep.subr.mxu0 %v4645
        %v4647 = vand.u32 %v4120, 4294901760
        %v4648 = vsub.f32 %v4120, %v4647
        %v4649 = vand.u32 %v4648, 4294901760
        %v4650 = vsub.f32 %v4648, %v4649
        %v4651 = vand.u32 %v4650, 4294901760
        %4652 = vmatpush1.msra.mxu0 %v4651
        %v4653 = vand.u32 %v4123, 4294901760
        %v4654 = vsub.f32 %v4123, %v4653
        %v4655 = vand.u32 %v4654, 4294901760
        %v4656 = vsub.f32 %v4654, %v4655
        %v4657 = vand.u32 %v4656, 4294901760
        %4658 = vmatprep.subr.mxu0 %v4657
        %v4659 = vand.u32 %v4122, 4294901760
        %v4660 = vsub.f32 %v4122, %v4659
        %v4661 = vand.u32 %v4660, 4294901760
        %v4662 = vsub.f32 %v4660, %v4661
        %v4663 = vand.u32 %v4662, 4294901760
        %4664 = vmatpush1.msra.mxu0 %v4663
        %v4665 = vand.u32 %v4125, 4294901760
        %v4666 = vsub.f32 %v4125, %v4665
        %v4667 = vand.u32 %v4666, 4294901760
        %v4668 = vsub.f32 %v4666, %v4667
        %v4669 = vand.u32 %v4668, 4294901760
        %4670 = vmatprep.subr.mxu0 %v4669
        %v4671 = vand.u32 %v4124, 4294901760
        %v4672 = vsub.f32 %v4124, %v4671
        %v4673 = vand.u32 %v4672, 4294901760
        %v4674 = vsub.f32 %v4672, %v4673
        %v4675 = vand.u32 %v4674, 4294901760
        %4676 = vmatpush1.msra.mxu0 %v4675
        %v4677 = vand.u32 %v4127, 4294901760
        %v4678 = vsub.f32 %v4127, %v4677
        %v4679 = vand.u32 %v4678, 4294901760
        %v4680 = vsub.f32 %v4678, %v4679
        %v4681 = vand.u32 %v4680, 4294901760
        %4682 = vmatprep.subr.mxu0 %v4681
        %v4683 = vand.u32 %v4126, 4294901760
        %v4684 = vsub.f32 %v4126, %v4683
        %v4685 = vand.u32 %v4684, 4294901760
        %v4686 = vsub.f32 %v4684, %v4685
        %v4687 = vand.u32 %v4686, 4294901760
        %4688 = vmatpush1.msra.mxu0 %v4687
        %v4689 = vand.u32 %v4129, 4294901760
        %v4690 = vsub.f32 %v4129, %v4689
        %v4691 = vand.u32 %v4690, 4294901760
        %v4692 = vsub.f32 %v4690, %v4691
        %v4693 = vand.u32 %v4692, 4294901760
        %4694 = vmatprep.subr.mxu0 %v4693
        %v4695 = vand.u32 %v4128, 4294901760
        %v4696 = vsub.f32 %v4128, %v4695
        %v4697 = vand.u32 %v4696, 4294901760
        %v4698 = vsub.f32 %v4696, %v4697
        %v4699 = vand.u32 %v4698, 4294901760
        %4700 = vmatpush1.msra.mxu0 %v4699
        %v4701 = vand.u32 %v4131, 4294901760
        %v4702 = vsub.f32 %v4131, %v4701
        %v4703 = vand.u32 %v4702, 4294901760
        %v4704 = vsub.f32 %v4702, %v4703
        %v4705 = vand.u32 %v4704, 4294901760
        %4706 = vmatprep.subr.mxu0 %v4705
        %v4707 = vand.u32 %v4130, 4294901760
        %v4708 = vsub.f32 %v4130, %v4707
        %v4709 = vand.u32 %v4708, 4294901760
        %v4710 = vsub.f32 %v4708, %v4709
        %v4711 = vand.u32 %v4710, 4294901760
        %4712 = vmatpush1.msra.mxu0 %v4711
        %v4713 = vand.u32 %v4133, 4294901760
        %v4714 = vsub.f32 %v4133, %v4713
        %v4715 = vand.u32 %v4714, 4294901760
        %v4716 = vsub.f32 %v4714, %v4715
        %v4717 = vand.u32 %v4716, 4294901760
        %4718 = vmatprep.subr.mxu0 %v4717
        %v4719 = vand.u32 %v4132, 4294901760
        %v4720 = vsub.f32 %v4132, %v4719
        %v4721 = vand.u32 %v4720, 4294901760
        %v4722 = vsub.f32 %v4720, %v4721
        %v4723 = vand.u32 %v4722, 4294901760
        %4724 = vmatpush1.msra.mxu0 %v4723
        %v4725 = vand.u32 %v4135, 4294901760
        %v4726 = vsub.f32 %v4135, %v4725
        %v4727 = vand.u32 %v4726, 4294901760
        %v4728 = vsub.f32 %v4726, %v4727
        %v4729 = vand.u32 %v4728, 4294901760
        %4730 = vmatprep.subr.mxu0 %v4729
        %v4731 = vand.u32 %v4134, 4294901760
        %v4732 = vsub.f32 %v4134, %v4731
        %v4733 = vand.u32 %v4732, 4294901760
        %v4734 = vsub.f32 %v4732, %v4733
        %v4735 = vand.u32 %v4734, 4294901760
        %4736 = vmatpush1.msra.mxu0 %v4735
        %v4737 = vand.u32 %v4137, 4294901760
        %v4738 = vsub.f32 %v4137, %v4737
        %v4739 = vand.u32 %v4738, 4294901760
        %v4740 = vsub.f32 %v4738, %v4739
        %v4741 = vand.u32 %v4740, 4294901760
        %4742 = vmatprep.subr.mxu0 %v4741
        %v4743 = vand.u32 %v4136, 4294901760
        %v4744 = vsub.f32 %v4136, %v4743
        %v4745 = vand.u32 %v4744, 4294901760
        %v4746 = vsub.f32 %v4744, %v4745
        %v4747 = vand.u32 %v4746, 4294901760
        %4748 = vmatpush1.msra.mxu0 %v4747
        %v4749 = vand.u32 %v4139, 4294901760
        %v4750 = vsub.f32 %v4139, %v4749
        %v4751 = vand.u32 %v4750, 4294901760
        %v4752 = vsub.f32 %v4750, %v4751
        %v4753 = vand.u32 %v4752, 4294901760
        %4754 = vmatprep.subr.mxu0 %v4753
        %v4755 = vand.u32 %v4138, 4294901760
        %v4756 = vsub.f32 %v4138, %v4755
        %v4757 = vand.u32 %v4756, 4294901760
        %v4758 = vsub.f32 %v4756, %v4757
        %v4759 = vand.u32 %v4758, 4294901760
        %4760 = vmatpush1.msra.mxu0 %v4759
        %v4761 = vand.u32 %v4141, 4294901760
        %v4762 = vsub.f32 %v4141, %v4761
        %v4763 = vand.u32 %v4762, 4294901760
        %v4764 = vsub.f32 %v4762, %v4763
        %v4765 = vand.u32 %v4764, 4294901760
        %4766 = vmatprep.subr.mxu0 %v4765
        %v4767 = vand.u32 %v4140, 4294901760
        %v4768 = vsub.f32 %v4140, %v4767
        %v4769 = vand.u32 %v4768, 4294901760
        %v4770 = vsub.f32 %v4768, %v4769
        %v4771 = vand.u32 %v4770, 4294901760
        %4772 = vmatpush1.msra.mxu0 %v4771
        %v4773 = vand.u32 %v4143, 4294901760
        %v4774 = vsub.f32 %v4143, %v4773
        %v4775 = vand.u32 %v4774, 4294901760
        %v4776 = vsub.f32 %v4774, %v4775
        %v4777 = vand.u32 %v4776, 4294901760
        %4778 = vmatprep.subr.mxu0 %v4777
        %v4779 = vand.u32 %v4142, 4294901760
        %v4780 = vsub.f32 %v4142, %v4779
        %v4781 = vand.u32 %v4780, 4294901760
        %v4782 = vsub.f32 %v4780, %v4781
        %v4783 = vand.u32 %v4782, 4294901760
        %4784 = vmatpush1.msra.mxu0 %v4783
        %v4785 = vand.u32 %v4049, 4294901760
        %4786 = vmatprep.mubr.f32.mxu0 %v4785
        %v4787 = vand.u32 %v4048, 4294901760
        %4788 = vmatmul.mubr.f32.gmra.mrb[0].mxu0 %v4787
        %v4789 = vpop.f32.mrb[0].mxu0
        %v4790 = vadd.f32 %v4285, %v4789
        %v4791 = vpop.f32.mrb[0].mxu0
        %v4792 = vadd.f32 %v4287, %v4791
        %v4793 = vand.u32 %v4051, 4294901760
        %4794 = vmatprep.mubr.f32.mxu0 %v4793
        %v4795 = vand.u32 %v4050, 4294901760
        %4796 = vmatmul.mubr.f32.gmra.mrb[0].mxu0 %v4795
        %v4797 = vpop.f32.mrb[0].mxu0
        %v4798 = vadd.f32 %v4301, %v4797
        %v4799 = vpop.f32.mrb[0].mxu0
        %v4800 = vadd.f32 %v4303, %v4799
        %v4801 = vand.u32 %v4053, 4294901760
        %4802 = vmatprep.mubr.f32.mxu0 %v4801
        %v4803 = vand.u32 %v4052, 4294901760
        %4804 = vmatmul.mubr.f32.gmra.mrb[0].mxu0 %v4803
        %v4805 = vpop.f32.mrb[0].mxu0
        %v4806 = vadd.f32 %v4317, %v4805
        %v4807 = vpop.f32.mrb[0].mxu0
        %v4808 = vadd.f32 %v4319, %v4807
        %v4809 = vand.u32 %v4055, 4294901760
        %4810 = vmatprep.mubr.f32.mxu0 %v4809
        %v4811 = vand.u32 %v4054, 4294901760
        %4812 = vmatmul.mubr.f32.gmra.mrb[0].mxu0 %v4811
        %v4813 = vpop.f32.mrb[0].mxu0
        %v4814 = vadd.f32 %v4333, %v4813
        %v4815 = vpop.f32.mrb[0].mxu0
        %v4816 = vadd.f32 %v4335, %v4815
        %v4817 = vand.u32 %v4057, 4294901760
        %4818 = vmatprep.mubr.f32.mxu0 %v4817
        %v4819 = vand.u32 %v4056, 4294901760
        %4820 = vmatmul.mubr.f32.gmra.mrb[0].mxu0 %v4819
        %v4821 = vpop.f32.mrb[0].mxu0
        %v4822 = vadd.f32 %v4349, %v4821
        %v4823 = vpop.f32.mrb[0].mxu0
        %v4824 = vadd.f32 %v4351, %v4823
        %v4825 = vand.u32 %v4059, 4294901760
        %4826 = vmatprep.mubr.f32.mxu0 %v4825
        %v4827 = vand.u32 %v4058, 4294901760
        %4828 = vmatmul.mubr.f32.gmra.mrb[0].mxu0 %v4827
        %v4829 = vpop.f32.mrb[0].mxu0
        %v4830 = vadd.f32 %v4365, %v4829
        %v4831 = vpop.f32.mrb[0].mxu0
        %v4832 = vadd.f32 %v4367, %v4831
        %v4833 = vand.u32 %v4061, 4294901760
        %4834 = vmatprep.mubr.f32.mxu0 %v4833
        %v4835 = vand.u32 %v4060, 4294901760
        %4836 = vmatmul.mubr.f32.gmra.mrb[0].mxu0 %v4835
        %v4837 = vpop.f32.mrb[0].mxu0
        %v4838 = vadd.f32 %v4381, %v4837
        %v4839 = vpop.f32.mrb[0].mxu0
        %v4840 = vadd.f32 %v4383, %v4839
        %v4841 = vand.u32 %v4063, 4294901760
        %4842 = vmatprep.mubr.f32.mxu0 %v4841
        %v4843 = vand.u32 %v4062, 4294901760
        %4844 = vmatmul.mubr.f32.gmra.mrb[0].mxu0 %v4843
        %v4845 = vpop.f32.mrb[0].mxu0
        %v4846 = vadd.f32 %v4397, %v4845
        %v4847 = vpop.f32.mrb[0].mxu0
        %v4848 = vadd.f32 %v4399, %v4847
        %4849 = vdwg.mxu0
        %v4850 = vand.u32 %v4081, 4294901760
        %v4851 = vsub.f32 %v4081, %v4850
        %4852 = vmatprep.subr.mxu0 %v4851
        %v4853 = vand.u32 %v4080, 4294901760
        %v4854 = vsub.f32 %v4080, %v4853
        %4855 = vmatpush1.msra.mxu0 %v4854
        %v4856 = vand.u32 %v4083, 4294901760
        %v4857 = vsub.f32 %v4083, %v4856
        %4858 = vmatprep.subr.mxu0 %v4857
        %v4859 = vand.u32 %v4082, 4294901760
        %v4860 = vsub.f32 %v4082, %v4859
        %4861 = vmatpush1.msra.mxu0 %v4860
        %v4862 = vand.u32 %v4085, 4294901760
        %v4863 = vsub.f32 %v4085, %v4862
        %4864 = vmatprep.subr.mxu0 %v4863
        %v4865 = vand.u32 %v4084, 4294901760
        %v4866 = vsub.f32 %v4084, %v4865
        %4867 = vmatpush1.msra.mxu0 %v4866
        %v4868 = vand.u32 %v4087, 4294901760
        %v4869 = vsub.f32 %v4087, %v4868
        %4870 = vmatprep.subr.mxu0 %v4869
        %v4871 = vand.u32 %v4086, 4294901760
        %v4872 = vsub.f32 %v4086, %v4871
        %4873 = vmatpush1.msra.mxu0 %v4872
        %v4874 = vand.u32 %v4089, 4294901760
        %v4875 = vsub.f32 %v4089, %v4874
        %4876 = vmatprep.subr.mxu0 %v4875
        %v4877 = vand.u32 %v4088, 4294901760
        %v4878 = vsub.f32 %v4088, %v4877
        %4879 = vmatpush1.msra.mxu0 %v4878
        %v4880 = vand.u32 %v4091, 4294901760
        %v4881 = vsub.f32 %v4091, %v4880
        %4882 = vmatprep.subr.mxu0 %v4881
        %v4883 = vand.u32 %v4090, 4294901760
        %v4884 = vsub.f32 %v4090, %v4883
        %4885 = vmatpush1.msra.mxu0 %v4884
        %v4886 = vand.u32 %v4093, 4294901760
        %v4887 = vsub.f32 %v4093, %v4886
        %4888 = vmatprep.subr.mxu0 %v4887
        %v4889 = vand.u32 %v4092, 4294901760
        %v4890 = vsub.f32 %v4092, %v4889
        %4891 = vmatpush1.msra.mxu0 %v4890
        %v4892 = vand.u32 %v4095, 4294901760
        %v4893 = vsub.f32 %v4095, %v4892
        %4894 = vmatprep.subr.mxu0 %v4893
        %v4895 = vand.u32 %v4094, 4294901760
        %v4896 = vsub.f32 %v4094, %v4895
        %4897 = vmatpush1.msra.mxu0 %v4896
        %v4898 = vand.u32 %v4097, 4294901760
        %v4899 = vsub.f32 %v4097, %v4898
        %4900 = vmatprep.subr.mxu0 %v4899
        %v4901 = vand.u32 %v4096, 4294901760
        %v4902 = vsub.f32 %v4096, %v4901
        %4903 = vmatpush1.msra.mxu0 %v4902
        %v4904 = vand.u32 %v4099, 4294901760
        %v4905 = vsub.f32 %v4099, %v4904
        %4906 = vmatprep.subr.mxu0 %v4905
        %v4907 = vand.u32 %v4098, 4294901760
        %v4908 = vsub.f32 %v4098, %v4907
        %4909 = vmatpush1.msra.mxu0 %v4908
        %v4910 = vand.u32 %v4101, 4294901760
        %v4911 = vsub.f32 %v4101, %v4910
        %4912 = vmatprep.subr.mxu0 %v4911
        %v4913 = vand.u32 %v4100, 4294901760
        %v4914 = vsub.f32 %v4100, %v4913
        %4915 = vmatpush1.msra.mxu0 %v4914
        %v4916 = vand.u32 %v4103, 4294901760
        %v4917 = vsub.f32 %v4103, %v4916
        %4918 = vmatprep.subr.mxu0 %v4917
        %v4919 = vand.u32 %v4102, 4294901760
        %v4920 = vsub.f32 %v4102, %v4919
        %4921 = vmatpush1.msra.mxu0 %v4920
        %v4922 = vand.u32 %v4105, 4294901760
        %v4923 = vsub.f32 %v4105, %v4922
        %4924 = vmatprep.subr.mxu0 %v4923
        %v4925 = vand.u32 %v4104, 4294901760
        %v4926 = vsub.f32 %v4104, %v4925
        %4927 = vmatpush1.msra.mxu0 %v4926
        %v4928 = vand.u32 %v4107, 4294901760
        %v4929 = vsub.f32 %v4107, %v4928
        %4930 = vmatprep.subr.mxu0 %v4929
        %v4931 = vand.u32 %v4106, 4294901760
        %v4932 = vsub.f32 %v4106, %v4931
        %4933 = vmatpush1.msra.mxu0 %v4932
        %v4934 = vand.u32 %v4109, 4294901760
        %v4935 = vsub.f32 %v4109, %v4934
        %4936 = vmatprep.subr.mxu0 %v4935
        %v4937 = vand.u32 %v4108, 4294901760
        %v4938 = vsub.f32 %v4108, %v4937
        %4939 = vmatpush1.msra.mxu0 %v4938
        %v4940 = vand.u32 %v4111, 4294901760
        %v4941 = vsub.f32 %v4111, %v4940
        %4942 = vmatprep.subr.mxu0 %v4941
        %v4943 = vand.u32 %v4110, 4294901760
        %v4944 = vsub.f32 %v4110, %v4943
        %4945 = vmatpush1.msra.mxu0 %v4944
        %v4946 = vand.u32 %v4113, 4294901760
        %v4947 = vsub.f32 %v4113, %v4946
        %4948 = vmatprep.subr.mxu0 %v4947
        %v4949 = vand.u32 %v4112, 4294901760
        %v4950 = vsub.f32 %v4112, %v4949
        %4951 = vmatpush1.msra.mxu0 %v4950
        %v4952 = vand.u32 %v4115, 4294901760
        %v4953 = vsub.f32 %v4115, %v4952
        %4954 = vmatprep.subr.mxu0 %v4953
        %v4955 = vand.u32 %v4114, 4294901760
        %v4956 = vsub.f32 %v4114, %v4955
        %4957 = vmatpush1.msra.mxu0 %v4956
        %v4958 = vand.u32 %v4117, 4294901760
        %v4959 = vsub.f32 %v4117, %v4958
        %4960 = vmatprep.subr.mxu0 %v4959
        %v4961 = vand.u32 %v4116, 4294901760
        %v4962 = vsub.f32 %v4116, %v4961
        %4963 = vmatpush1.msra.mxu0 %v4962
        %v4964 = vand.u32 %v4119, 4294901760
        %v4965 = vsub.f32 %v4119, %v4964
        %4966 = vmatprep.subr.mxu0 %v4965
        %v4967 = vand.u32 %v4118, 4294901760
        %v4968 = vsub.f32 %v4118, %v4967
        %4969 = vmatpush1.msra.mxu0 %v4968
        %v4970 = vand.u32 %v4121, 4294901760
        %v4971 = vsub.f32 %v4121, %v4970
        %4972 = vmatprep.subr.mxu0 %v4971
        %v4973 = vand.u32 %v4120, 4294901760
        %v4974 = vsub.f32 %v4120, %v4973
        %4975 = vmatpush1.msra.mxu0 %v4974
        %v4976 = vand.u32 %v4123, 4294901760
        %v4977 = vsub.f32 %v4123, %v4976
        %4978 = vmatprep.subr.mxu0 %v4977
        %v4979 = vand.u32 %v4122, 4294901760
        %v4980 = vsub.f32 %v4122, %v4979
        %4981 = vmatpush1.msra.mxu0 %v4980
        %v4982 = vand.u32 %v4125, 4294901760
        %v4983 = vsub.f32 %v4125, %v4982
        %4984 = vmatprep.subr.mxu0 %v4983
        %v4985 = vand.u32 %v4124, 4294901760
        %v4986 = vsub.f32 %v4124, %v4985
        %4987 = vmatpush1.msra.mxu0 %v4986
        %v4988 = vand.u32 %v4127, 4294901760
        %v4989 = vsub.f32 %v4127, %v4988
        %4990 = vmatprep.subr.mxu0 %v4989
        %v4991 = vand.u32 %v4126, 4294901760
        %v4992 = vsub.f32 %v4126, %v4991
        %4993 = vmatpush1.msra.mxu0 %v4992
        %v4994 = vand.u32 %v4129, 4294901760
        %v4995 = vsub.f32 %v4129, %v4994
        %4996 = vmatprep.subr.mxu0 %v4995
        %v4997 = vand.u32 %v4128, 4294901760
        %v4998 = vsub.f32 %v4128, %v4997
        %4999 = vmatpush1.msra.mxu0 %v4998
        %v5000 = vand.u32 %v4131, 4294901760
        %v5001 = vsub.f32 %v4131, %v5000
        %5002 = vmatprep.subr.mxu0 %v5001
        %v5003 = vand.u32 %v4130, 4294901760
        %v5004 = vsub.f32 %v4130, %v5003
        %5005 = vmatpush1.msra.mxu0 %v5004
        %v5006 = vand.u32 %v4133, 4294901760
        %v5007 = vsub.f32 %v4133, %v5006
        %5008 = vmatprep.subr.mxu0 %v5007
        %v5009 = vand.u32 %v4132, 4294901760
        %v5010 = vsub.f32 %v4132, %v5009
        %5011 = vmatpush1.msra.mxu0 %v5010
        %v5012 = vand.u32 %v4135, 4294901760
        %v5013 = vsub.f32 %v4135, %v5012
        %5014 = vmatprep.subr.mxu0 %v5013
        %v5015 = vand.u32 %v4134, 4294901760
        %v5016 = vsub.f32 %v4134, %v5015
        %5017 = vmatpush1.msra.mxu0 %v5016
        %v5018 = vand.u32 %v4137, 4294901760
        %v5019 = vsub.f32 %v4137, %v5018
        %5020 = vmatprep.subr.mxu0 %v5019
        %v5021 = vand.u32 %v4136, 4294901760
        %v5022 = vsub.f32 %v4136, %v5021
        %5023 = vmatpush1.msra.mxu0 %v5022
        %v5024 = vand.u32 %v4139, 4294901760
        %v5025 = vsub.f32 %v4139, %v5024
        %5026 = vmatprep.subr.mxu0 %v5025
        %v5027 = vand.u32 %v4138, 4294901760
        %v5028 = vsub.f32 %v4138, %v5027
        %5029 = vmatpush1.msra.mxu0 %v5028
        %v5030 = vand.u32 %v4141, 4294901760
        %v5031 = vsub.f32 %v4141, %v5030
        %5032 = vmatprep.subr.mxu0 %v5031
        %v5033 = vand.u32 %v4140, 4294901760
        %v5034 = vsub.f32 %v4140, %v5033
        %5035 = vmatpush1.msra.mxu0 %v5034
        %v5036 = vand.u32 %v4143, 4294901760
        %v5037 = vsub.f32 %v4143, %v5036
        %5038 = vmatprep.subr.mxu0 %v5037
        %v5039 = vand.u32 %v4142, 4294901760
        %v5040 = vsub.f32 %v4142, %v5039
        %5041 = vmatpush1.msra.mxu0 %v5040
        %v5042 = vand.u32 %v4049, 4294901760
        %v5043 = vsub.f32 %v4049, %v5042
        %5044 = vmatprep.mubr.f32.mxu0 %v5043
        %v5045 = vand.u32 %v4048, 4294901760
        %v5046 = vsub.f32 %v4048, %v5045
        %5047 = vmatmul.mubr.f32.gmra.mrb[0].mxu0 %v5046
        %v5048 = vpop.f32.mrb[0].mxu0
        %v5049 = vadd.f32 %v4790, %v5048
        %v5050 = vpop.f32.mrb[0].mxu0
        %v5051 = vadd.f32 %v4792, %v5050
        %v5052 = vand.u32 %v4051, 4294901760
        %v5053 = vsub.f32 %v4051, %v5052
        %5054 = vmatprep.mubr.f32.mxu0 %v5053
        %v5055 = vand.u32 %v4050, 4294901760
        %v5056 = vsub.f32 %v4050, %v5055
        %5057 = vmatmul.mubr.f32.gmra.mrb[0].mxu0 %v5056
        %v5058 = vpop.f32.mrb[0].mxu0
        %v5059 = vadd.f32 %v4798, %v5058
        %v5060 = vpop.f32.mrb[0].mxu0
        %v5061 = vadd.f32 %v4800, %v5060
        %v5062 = vand.u32 %v4053, 4294901760
        %v5063 = vsub.f32 %v4053, %v5062
        %5064 = vmatprep.mubr.f32.mxu0 %v5063
        %v5065 = vand.u32 %v4052, 4294901760
        %v5066 = vsub.f32 %v4052, %v5065
        %5067 = vmatmul.mubr.f32.gmra.mrb[0].mxu0 %v5066
        %v5068 = vpop.f32.mrb[0].mxu0
        %v5069 = vadd.f32 %v4806, %v5068
        %v5070 = vpop.f32.mrb[0].mxu0
        %v5071 = vadd.f32 %v4808, %v5070
        %v5072 = vand.u32 %v4055, 4294901760
        %v5073 = vsub.f32 %v4055, %v5072
        %5074 = vmatprep.mubr.f32.mxu0 %v5073
        %v5075 = vand.u32 %v4054, 4294901760
        %v5076 = vsub.f32 %v4054, %v5075
        %5077 = vmatmul.mubr.f32.gmra.mrb[0].mxu0 %v5076
        %v5078 = vpop.f32.mrb[0].mxu0
        %v5079 = vadd.f32 %v4814, %v5078
        %v5080 = vpop.f32.mrb[0].mxu0
        %v5081 = vadd.f32 %v4816, %v5080
        %v5082 = vand.u32 %v4057, 4294901760
        %v5083 = vsub.f32 %v4057, %v5082
        %5084 = vmatprep.mubr.f32.mxu0 %v5083
        %v5085 = vand.u32 %v4056, 4294901760
        %v5086 = vsub.f32 %v4056, %v5085
        %5087 = vmatmul.mubr.f32.gmra.mrb[0].mxu0 %v5086
        %v5088 = vpop.f32.mrb[0].mxu0
        %v5089 = vadd.f32 %v4822, %v5088
        %v5090 = vpop.f32.mrb[0].mxu0
        %v5091 = vadd.f32 %v4824, %v5090
        %v5092 = vand.u32 %v4059, 4294901760
        %v5093 = vsub.f32 %v4059, %v5092
        %5094 = vmatprep.mubr.f32.mxu0 %v5093
        %v5095 = vand.u32 %v4058, 4294901760
        %v5096 = vsub.f32 %v4058, %v5095
        %5097 = vmatmul.mubr.f32.gmra.mrb[0].mxu0 %v5096
        %v5098 = vpop.f32.mrb[0].mxu0
        %v5099 = vadd.f32 %v4830, %v5098
        %v5100 = vpop.f32.mrb[0].mxu0
        %v5101 = vadd.f32 %v4832, %v5100
        %v5102 = vand.u32 %v4061, 4294901760
        %v5103 = vsub.f32 %v4061, %v5102
        %5104 = vmatprep.mubr.f32.mxu0 %v5103
        %v5105 = vand.u32 %v4060, 4294901760
        %v5106 = vsub.f32 %v4060, %v5105
        %5107 = vmatmul.mubr.f32.gmra.mrb[0].mxu0 %v5106
        %v5108 = vpop.f32.mrb[0].mxu0
        %v5109 = vadd.f32 %v4838, %v5108
        %v5110 = vpop.f32.mrb[0].mxu0
        %v5111 = vadd.f32 %v4840, %v5110
        %v5112 = vand.u32 %v4063, 4294901760
        %v5113 = vsub.f32 %v4063, %v5112
        %5114 = vmatprep.mubr.f32.mxu0 %v5113
        %v5115 = vand.u32 %v4062, 4294901760
        %v5116 = vsub.f32 %v4062, %v5115
        %5117 = vmatmul.mubr.f32.gmra.mrb[0].mxu0 %v5116
        %v5118 = vpop.f32.mrb[0].mxu0
        %v5119 = vadd.f32 %v4846, %v5118
        %v5120 = vpop.f32.mrb[0].mxu0
        %v5121 = vadd.f32 %v4848, %v5120
        %5122 = vdwg.mxu0
        %v5123 = vand.u32 %v4081, 4294901760
        %5124 = vmatprep.subr.mxu0 %v5123
        %v5125 = vand.u32 %v4080, 4294901760
        %5126 = vmatpush1.msra.mxu0 %v5125
        %v5127 = vand.u32 %v4083, 4294901760
        %5128 = vmatprep.subr.mxu0 %v5127
        %v5129 = vand.u32 %v4082, 4294901760
        %5130 = vmatpush1.msra.mxu0 %v5129
        %v5131 = vand.u32 %v4085, 4294901760
        %5132 = vmatprep.subr.mxu0 %v5131
        %v5133 = vand.u32 %v4084, 4294901760
        %5134 = vmatpush1.msra.mxu0 %v5133
        %v5135 = vand.u32 %v4087, 4294901760
        %5136 = vmatprep.subr.mxu0 %v5135
        %v5137 = vand.u32 %v4086, 4294901760
        %5138 = vmatpush1.msra.mxu0 %v5137
        %v5139 = vand.u32 %v4089, 4294901760
        %5140 = vmatprep.subr.mxu0 %v5139
        %v5141 = vand.u32 %v4088, 4294901760
        %5142 = vmatpush1.msra.mxu0 %v5141
        %v5143 = vand.u32 %v4091, 4294901760
        %5144 = vmatprep.subr.mxu0 %v5143
        %v5145 = vand.u32 %v4090, 4294901760
        %5146 = vmatpush1.msra.mxu0 %v5145
        %v5147 = vand.u32 %v4093, 4294901760
        %5148 = vmatprep.subr.mxu0 %v5147
        %v5149 = vand.u32 %v4092, 4294901760
        %5150 = vmatpush1.msra.mxu0 %v5149
        %v5151 = vand.u32 %v4095, 4294901760
        %5152 = vmatprep.subr.mxu0 %v5151
        %v5153 = vand.u32 %v4094, 4294901760
        %5154 = vmatpush1.msra.mxu0 %v5153
        %v5155 = vand.u32 %v4097, 4294901760
        %5156 = vmatprep.subr.mxu0 %v5155
        %v5157 = vand.u32 %v4096, 4294901760
        %5158 = vmatpush1.msra.mxu0 %v5157
        %v5159 = vand.u32 %v4099, 4294901760
        %5160 = vmatprep.subr.mxu0 %v5159
        %v5161 = vand.u32 %v4098, 4294901760
        %5162 = vmatpush1.msra.mxu0 %v5161
        %v5163 = vand.u32 %v4101, 4294901760
        %5164 = vmatprep.subr.mxu0 %v5163
        %v5165 = vand.u32 %v4100, 4294901760
        %5166 = vmatpush1.msra.mxu0 %v5165
        %v5167 = vand.u32 %v4103, 4294901760
        %5168 = vmatprep.subr.mxu0 %v5167
        %v5169 = vand.u32 %v4102, 4294901760
        %5170 = vmatpush1.msra.mxu0 %v5169
        %v5171 = vand.u32 %v4105, 4294901760
        %5172 = vmatprep.subr.mxu0 %v5171
        %v5173 = vand.u32 %v4104, 4294901760
        %5174 = vmatpush1.msra.mxu0 %v5173
        %v5175 = vand.u32 %v4107, 4294901760
        %5176 = vmatprep.subr.mxu0 %v5175
        %v5177 = vand.u32 %v4106, 4294901760
        %5178 = vmatpush1.msra.mxu0 %v5177
        %v5179 = vand.u32 %v4109, 4294901760
        %5180 = vmatprep.subr.mxu0 %v5179
        %v5181 = vand.u32 %v4108, 4294901760
        %5182 = vmatpush1.msra.mxu0 %v5181
        %v5183 = vand.u32 %v4111, 4294901760
        %5184 = vmatprep.subr.mxu0 %v5183
        %v5185 = vand.u32 %v4110, 4294901760
        %5186 = vmatpush1.msra.mxu0 %v5185
        %v5187 = vand.u32 %v4113, 4294901760
        %5188 = vmatprep.subr.mxu0 %v5187
        %v5189 = vand.u32 %v4112, 4294901760
        %5190 = vmatpush1.msra.mxu0 %v5189
        %v5191 = vand.u32 %v4115, 4294901760
        %5192 = vmatprep.subr.mxu0 %v5191
        %v5193 = vand.u32 %v4114, 4294901760
        %5194 = vmatpush1.msra.mxu0 %v5193
        %v5195 = vand.u32 %v4117, 4294901760
        %5196 = vmatprep.subr.mxu0 %v5195
        %v5197 = vand.u32 %v4116, 4294901760
        %5198 = vmatpush1.msra.mxu0 %v5197
        %v5199 = vand.u32 %v4119, 4294901760
        %5200 = vmatprep.subr.mxu0 %v5199
        %v5201 = vand.u32 %v4118, 4294901760
        %5202 = vmatpush1.msra.mxu0 %v5201
        %v5203 = vand.u32 %v4121, 4294901760
        %5204 = vmatprep.subr.mxu0 %v5203
        %v5205 = vand.u32 %v4120, 4294901760
        %5206 = vmatpush1.msra.mxu0 %v5205
        %v5207 = vand.u32 %v4123, 4294901760
        %5208 = vmatprep.subr.mxu0 %v5207
        %v5209 = vand.u32 %v4122, 4294901760
        %5210 = vmatpush1.msra.mxu0 %v5209
        %v5211 = vand.u32 %v4125, 4294901760
        %5212 = vmatprep.subr.mxu0 %v5211
        %v5213 = vand.u32 %v4124, 4294901760
        %5214 = vmatpush1.msra.mxu0 %v5213
        %v5215 = vand.u32 %v4127, 4294901760
        %5216 = vmatprep.subr.mxu0 %v5215
        %v5217 = vand.u32 %v4126, 4294901760
        %5218 = vmatpush1.msra.mxu0 %v5217
        %v5219 = vand.u32 %v4129, 4294901760
        %5220 = vmatprep.subr.mxu0 %v5219
        %v5221 = vand.u32 %v4128, 4294901760
        %5222 = vmatpush1.msra.mxu0 %v5221
        %v5223 = vand.u32 %v4131, 4294901760
        %5224 = vmatprep.subr.mxu0 %v5223
        %v5225 = vand.u32 %v4130, 4294901760
        %5226 = vmatpush1.msra.mxu0 %v5225
        %v5227 = vand.u32 %v4133, 4294901760
        %5228 = vmatprep.subr.mxu0 %v5227
        %v5229 = vand.u32 %v4132, 4294901760
        %5230 = vmatpush1.msra.mxu0 %v5229
        %v5231 = vand.u32 %v4135, 4294901760
        %5232 = vmatprep.subr.mxu0 %v5231
        %v5233 = vand.u32 %v4134, 4294901760
        %5234 = vmatpush1.msra.mxu0 %v5233
        %v5235 = vand.u32 %v4137, 4294901760
        %5236 = vmatprep.subr.mxu0 %v5235
        %v5237 = vand.u32 %v4136, 4294901760
        %5238 = vmatpush1.msra.mxu0 %v5237
        %v5239 = vand.u32 %v4139, 4294901760
        %5240 = vmatprep.subr.mxu0 %v5239
        %v5241 = vand.u32 %v4138, 4294901760
        %5242 = vmatpush1.msra.mxu0 %v5241
        %v5243 = vand.u32 %v4141, 4294901760
        %5244 = vmatprep.subr.mxu0 %v5243
        %v5245 = vand.u32 %v4140, 4294901760
        %5246 = vmatpush1.msra.mxu0 %v5245
        %v5247 = vand.u32 %v4143, 4294901760
        %5248 = vmatprep.subr.mxu0 %v5247
        %v5249 = vand.u32 %v4142, 4294901760
        %5250 = vmatpush1.msra.mxu0 %v5249
        %v5251 = vand.u32 %v4049, 4294901760
        %v5252 = vsub.f32 %v4049, %v5251
        %v5253 = vand.u32 %v5252, 4294901760
        %5254 = vmatprep.mubr.f32.mxu0 %v5253
        %v5255 = vand.u32 %v4048, 4294901760
        %v5256 = vsub.f32 %v4048, %v5255
        %v5257 = vand.u32 %v5256, 4294901760
        %5258 = vmatmul.mubr.f32.gmra.mrb[0].mxu0 %v5257
        %v5259 = vpop.f32.mrb[0].mxu0
        %v5260 = vadd.f32 %v5049, %v5259
        %v5261 = vpop.f32.mrb[0].mxu0
        %v5262 = vadd.f32 %v5051, %v5261
        %v5263 = vand.u32 %v4051, 4294901760
        %v5264 = vsub.f32 %v4051, %v5263
        %v5265 = vand.u32 %v5264, 4294901760
        %5266 = vmatprep.mubr.f32.mxu0 %v5265
        %v5267 = vand.u32 %v4050, 4294901760
        %v5268 = vsub.f32 %v4050, %v5267
        %v5269 = vand.u32 %v5268, 4294901760
        %5270 = vmatmul.mubr.f32.gmra.mrb[0].mxu0 %v5269
        %v5271 = vpop.f32.mrb[0].mxu0
        %v5272 = vadd.f32 %v5059, %v5271
        %v5273 = vpop.f32.mrb[0].mxu0
        %v5274 = vadd.f32 %v5061, %v5273
        %v5275 = vand.u32 %v4053, 4294901760
        %v5276 = vsub.f32 %v4053, %v5275
        %v5277 = vand.u32 %v5276, 4294901760
        %5278 = vmatprep.mubr.f32.mxu0 %v5277
        %v5279 = vand.u32 %v4052, 4294901760
        %v5280 = vsub.f32 %v4052, %v5279
        %v5281 = vand.u32 %v5280, 4294901760
        %5282 = vmatmul.mubr.f32.gmra.mrb[0].mxu0 %v5281
        %v5283 = vpop.f32.mrb[0].mxu0
        %v5284 = vadd.f32 %v5069, %v5283
        %v5285 = vpop.f32.mrb[0].mxu0
        %v5286 = vadd.f32 %v5071, %v5285
        %v5287 = vand.u32 %v4055, 4294901760
        %v5288 = vsub.f32 %v4055, %v5287
        %v5289 = vand.u32 %v5288, 4294901760
        %5290 = vmatprep.mubr.f32.mxu0 %v5289
        %v5291 = vand.u32 %v4054, 4294901760
        %v5292 = vsub.f32 %v4054, %v5291
        %v5293 = vand.u32 %v5292, 4294901760
        %5294 = vmatmul.mubr.f32.gmra.mrb[0].mxu0 %v5293
        %v5295 = vpop.f32.mrb[0].mxu0
        %v5296 = vadd.f32 %v5079, %v5295
        %v5297 = vpop.f32.mrb[0].mxu0
        %v5298 = vadd.f32 %v5081, %v5297
        %v5299 = vand.u32 %v4057, 4294901760
        %v5300 = vsub.f32 %v4057, %v5299
        %v5301 = vand.u32 %v5300, 4294901760
        %5302 = vmatprep.mubr.f32.mxu0 %v5301
        %v5303 = vand.u32 %v4056, 4294901760
        %v5304 = vsub.f32 %v4056, %v5303
        %v5305 = vand.u32 %v5304, 4294901760
        %5306 = vmatmul.mubr.f32.gmra.mrb[0].mxu0 %v5305
        %v5307 = vpop.f32.mrb[0].mxu0
        %v5308 = vadd.f32 %v5089, %v5307
        %v5309 = vpop.f32.mrb[0].mxu0
        %v5310 = vadd.f32 %v5091, %v5309
        %v5311 = vand.u32 %v4059, 4294901760
        %v5312 = vsub.f32 %v4059, %v5311
        %v5313 = vand.u32 %v5312, 4294901760
        %5314 = vmatprep.mubr.f32.mxu0 %v5313
        %v5315 = vand.u32 %v4058, 4294901760
        %v5316 = vsub.f32 %v4058, %v5315
        %v5317 = vand.u32 %v5316, 4294901760
        %5318 = vmatmul.mubr.f32.gmra.mrb[0].mxu0 %v5317
        %v5319 = vpop.f32.mrb[0].mxu0
        %v5320 = vadd.f32 %v5099, %v5319
        %v5321 = vpop.f32.mrb[0].mxu0
        %v5322 = vadd.f32 %v5101, %v5321
        %v5323 = vand.u32 %v4061, 4294901760
        %v5324 = vsub.f32 %v4061, %v5323
        %v5325 = vand.u32 %v5324, 4294901760
        %5326 = vmatprep.mubr.f32.mxu0 %v5325
        %v5327 = vand.u32 %v4060, 4294901760
        %v5328 = vsub.f32 %v4060, %v5327
        %v5329 = vand.u32 %v5328, 4294901760
        %5330 = vmatmul.mubr.f32.gmra.mrb[0].mxu0 %v5329
        %v5331 = vpop.f32.mrb[0].mxu0
        %v5332 = vadd.f32 %v5109, %v5331
        %v5333 = vpop.f32.mrb[0].mxu0
        %v5334 = vadd.f32 %v5111, %v5333
        %v5335 = vand.u32 %v4063, 4294901760
        %v5336 = vsub.f32 %v4063, %v5335
        %v5337 = vand.u32 %v5336, 4294901760
        %5338 = vmatprep.mubr.f32.mxu0 %v5337
        %v5339 = vand.u32 %v4062, 4294901760
        %v5340 = vsub.f32 %v4062, %v5339
        %v5341 = vand.u32 %v5340, 4294901760
        %5342 = vmatmul.mubr.f32.gmra.mrb[0].mxu0 %v5341
        %v5343 = vpop.f32.mrb[0].mxu0
        %v5344 = vadd.f32 %v5119, %v5343
        %v5345 = vpop.f32.mrb[0].mxu0
        %v5346 = vadd.f32 %v5121, %v5345
        %5347 = vdwg.mxu0
        %v5348 = vand.u32 %v4081, 4294901760
        %v5349 = vsub.f32 %v4081, %v5348
        %v5350 = vand.u32 %v5349, 4294901760
        %5351 = vmatprep.subr.mxu0 %v5350
        %v5352 = vand.u32 %v4080, 4294901760
        %v5353 = vsub.f32 %v4080, %v5352
        %v5354 = vand.u32 %v5353, 4294901760
        %5355 = vmatpush1.msra.mxu0 %v5354
        %v5356 = vand.u32 %v4083, 4294901760
        %v5357 = vsub.f32 %v4083, %v5356
        %v5358 = vand.u32 %v5357, 4294901760
        %5359 = vmatprep.subr.mxu0 %v5358
        %v5360 = vand.u32 %v4082, 4294901760
        %v5361 = vsub.f32 %v4082, %v5360
        %v5362 = vand.u32 %v5361, 4294901760
        %5363 = vmatpush1.msra.mxu0 %v5362
        %v5364 = vand.u32 %v4085, 4294901760
        %v5365 = vsub.f32 %v4085, %v5364
        %v5366 = vand.u32 %v5365, 4294901760
        %5367 = vmatprep.subr.mxu0 %v5366
        %v5368 = vand.u32 %v4084, 4294901760
        %v5369 = vsub.f32 %v4084, %v5368
        %v5370 = vand.u32 %v5369, 4294901760
        %5371 = vmatpush1.msra.mxu0 %v5370
        %v5372 = vand.u32 %v4087, 4294901760
        %v5373 = vsub.f32 %v4087, %v5372
        %v5374 = vand.u32 %v5373, 4294901760
        %5375 = vmatprep.subr.mxu0 %v5374
        %v5376 = vand.u32 %v4086, 4294901760
        %v5377 = vsub.f32 %v4086, %v5376
        %v5378 = vand.u32 %v5377, 4294901760
        %5379 = vmatpush1.msra.mxu0 %v5378
        %v5380 = vand.u32 %v4089, 4294901760
        %v5381 = vsub.f32 %v4089, %v5380
        %v5382 = vand.u32 %v5381, 4294901760
        %5383 = vmatprep.subr.mxu0 %v5382
        %v5384 = vand.u32 %v4088, 4294901760
        %v5385 = vsub.f32 %v4088, %v5384
        %v5386 = vand.u32 %v5385, 4294901760
        %5387 = vmatpush1.msra.mxu0 %v5386
        %v5388 = vand.u32 %v4091, 4294901760
        %v5389 = vsub.f32 %v4091, %v5388
        %v5390 = vand.u32 %v5389, 4294901760
        %5391 = vmatprep.subr.mxu0 %v5390
        %v5392 = vand.u32 %v4090, 4294901760
        %v5393 = vsub.f32 %v4090, %v5392
        %v5394 = vand.u32 %v5393, 4294901760
        %5395 = vmatpush1.msra.mxu0 %v5394
        %v5396 = vand.u32 %v4093, 4294901760
        %v5397 = vsub.f32 %v4093, %v5396
        %v5398 = vand.u32 %v5397, 4294901760
        %5399 = vmatprep.subr.mxu0 %v5398
        %v5400 = vand.u32 %v4092, 4294901760
        %v5401 = vsub.f32 %v4092, %v5400
        %v5402 = vand.u32 %v5401, 4294901760
        %5403 = vmatpush1.msra.mxu0 %v5402
        %v5404 = vand.u32 %v4095, 4294901760
        %v5405 = vsub.f32 %v4095, %v5404
        %v5406 = vand.u32 %v5405, 4294901760
        %5407 = vmatprep.subr.mxu0 %v5406
        %v5408 = vand.u32 %v4094, 4294901760
        %v5409 = vsub.f32 %v4094, %v5408
        %v5410 = vand.u32 %v5409, 4294901760
        %5411 = vmatpush1.msra.mxu0 %v5410
        %v5412 = vand.u32 %v4097, 4294901760
        %v5413 = vsub.f32 %v4097, %v5412
        %v5414 = vand.u32 %v5413, 4294901760
        %5415 = vmatprep.subr.mxu0 %v5414
        %v5416 = vand.u32 %v4096, 4294901760
        %v5417 = vsub.f32 %v4096, %v5416
        %v5418 = vand.u32 %v5417, 4294901760
        %5419 = vmatpush1.msra.mxu0 %v5418
        %v5420 = vand.u32 %v4099, 4294901760
        %v5421 = vsub.f32 %v4099, %v5420
        %v5422 = vand.u32 %v5421, 4294901760
        %5423 = vmatprep.subr.mxu0 %v5422
        %v5424 = vand.u32 %v4098, 4294901760
        %v5425 = vsub.f32 %v4098, %v5424
        %v5426 = vand.u32 %v5425, 4294901760
        %5427 = vmatpush1.msra.mxu0 %v5426
        %v5428 = vand.u32 %v4101, 4294901760
        %v5429 = vsub.f32 %v4101, %v5428
        %v5430 = vand.u32 %v5429, 4294901760
        %5431 = vmatprep.subr.mxu0 %v5430
        %v5432 = vand.u32 %v4100, 4294901760
        %v5433 = vsub.f32 %v4100, %v5432
        %v5434 = vand.u32 %v5433, 4294901760
        %5435 = vmatpush1.msra.mxu0 %v5434
        %v5436 = vand.u32 %v4103, 4294901760
        %v5437 = vsub.f32 %v4103, %v5436
        %v5438 = vand.u32 %v5437, 4294901760
        %5439 = vmatprep.subr.mxu0 %v5438
        %v5440 = vand.u32 %v4102, 4294901760
        %v5441 = vsub.f32 %v4102, %v5440
        %v5442 = vand.u32 %v5441, 4294901760
        %5443 = vmatpush1.msra.mxu0 %v5442
        %v5444 = vand.u32 %v4105, 4294901760
        %v5445 = vsub.f32 %v4105, %v5444
        %v5446 = vand.u32 %v5445, 4294901760
        %5447 = vmatprep.subr.mxu0 %v5446
        %v5448 = vand.u32 %v4104, 4294901760
        %v5449 = vsub.f32 %v4104, %v5448
        %v5450 = vand.u32 %v5449, 4294901760
        %5451 = vmatpush1.msra.mxu0 %v5450
        %v5452 = vand.u32 %v4107, 4294901760
        %v5453 = vsub.f32 %v4107, %v5452
        %v5454 = vand.u32 %v5453, 4294901760
        %5455 = vmatprep.subr.mxu0 %v5454
        %v5456 = vand.u32 %v4106, 4294901760
        %v5457 = vsub.f32 %v4106, %v5456
        %v5458 = vand.u32 %v5457, 4294901760
        %5459 = vmatpush1.msra.mxu0 %v5458
        %v5460 = vand.u32 %v4109, 4294901760
        %v5461 = vsub.f32 %v4109, %v5460
        %v5462 = vand.u32 %v5461, 4294901760
        %5463 = vmatprep.subr.mxu0 %v5462
        %v5464 = vand.u32 %v4108, 4294901760
        %v5465 = vsub.f32 %v4108, %v5464
        %v5466 = vand.u32 %v5465, 4294901760
        %5467 = vmatpush1.msra.mxu0 %v5466
        %v5468 = vand.u32 %v4111, 4294901760
        %v5469 = vsub.f32 %v4111, %v5468
        %v5470 = vand.u32 %v5469, 4294901760
        %5471 = vmatprep.subr.mxu0 %v5470
        %v5472 = vand.u32 %v4110, 4294901760
        %v5473 = vsub.f32 %v4110, %v5472
        %v5474 = vand.u32 %v5473, 4294901760
        %5475 = vmatpush1.msra.mxu0 %v5474
        %v5476 = vand.u32 %v4113, 4294901760
        %v5477 = vsub.f32 %v4113, %v5476
        %v5478 = vand.u32 %v5477, 4294901760
        %5479 = vmatprep.subr.mxu0 %v5478
        %v5480 = vand.u32 %v4112, 4294901760
        %v5481 = vsub.f32 %v4112, %v5480
        %v5482 = vand.u32 %v5481, 4294901760
        %5483 = vmatpush1.msra.mxu0 %v5482
        %v5484 = vand.u32 %v4115, 4294901760
        %v5485 = vsub.f32 %v4115, %v5484
        %v5486 = vand.u32 %v5485, 4294901760
        %5487 = vmatprep.subr.mxu0 %v5486
        %v5488 = vand.u32 %v4114, 4294901760
        %v5489 = vsub.f32 %v4114, %v5488
        %v5490 = vand.u32 %v5489, 4294901760
        %5491 = vmatpush1.msra.mxu0 %v5490
        %v5492 = vand.u32 %v4117, 4294901760
        %v5493 = vsub.f32 %v4117, %v5492
        %v5494 = vand.u32 %v5493, 4294901760
        %5495 = vmatprep.subr.mxu0 %v5494
        %v5496 = vand.u32 %v4116, 4294901760
        %v5497 = vsub.f32 %v4116, %v5496
        %v5498 = vand.u32 %v5497, 4294901760
        %5499 = vmatpush1.msra.mxu0 %v5498
        %v5500 = vand.u32 %v4119, 4294901760
        %v5501 = vsub.f32 %v4119, %v5500
        %v5502 = vand.u32 %v5501, 4294901760
        %5503 = vmatprep.subr.mxu0 %v5502
        %v5504 = vand.u32 %v4118, 4294901760
        %v5505 = vsub.f32 %v4118, %v5504
        %v5506 = vand.u32 %v5505, 4294901760
        %5507 = vmatpush1.msra.mxu0 %v5506
        %v5508 = vand.u32 %v4121, 4294901760
        %v5509 = vsub.f32 %v4121, %v5508
        %v5510 = vand.u32 %v5509, 4294901760
        %5511 = vmatprep.subr.mxu0 %v5510
        %v5512 = vand.u32 %v4120, 4294901760
        %v5513 = vsub.f32 %v4120, %v5512
        %v5514 = vand.u32 %v5513, 4294901760
        %5515 = vmatpush1.msra.mxu0 %v5514
        %v5516 = vand.u32 %v4123, 4294901760
        %v5517 = vsub.f32 %v4123, %v5516
        %v5518 = vand.u32 %v5517, 4294901760
        %5519 = vmatprep.subr.mxu0 %v5518
        %v5520 = vand.u32 %v4122, 4294901760
        %v5521 = vsub.f32 %v4122, %v5520
        %v5522 = vand.u32 %v5521, 4294901760
        %5523 = vmatpush1.msra.mxu0 %v5522
        %v5524 = vand.u32 %v4125, 4294901760
        %v5525 = vsub.f32 %v4125, %v5524
        %v5526 = vand.u32 %v5525, 4294901760
        %5527 = vmatprep.subr.mxu0 %v5526
        %v5528 = vand.u32 %v4124, 4294901760
        %v5529 = vsub.f32 %v4124, %v5528
        %v5530 = vand.u32 %v5529, 4294901760
        %5531 = vmatpush1.msra.mxu0 %v5530
        %v5532 = vand.u32 %v4127, 4294901760
        %v5533 = vsub.f32 %v4127, %v5532
        %v5534 = vand.u32 %v5533, 4294901760
        %5535 = vmatprep.subr.mxu0 %v5534
        %v5536 = vand.u32 %v4126, 4294901760
        %v5537 = vsub.f32 %v4126, %v5536
        %v5538 = vand.u32 %v5537, 4294901760
        %5539 = vmatpush1.msra.mxu0 %v5538
        %v5540 = vand.u32 %v4129, 4294901760
        %v5541 = vsub.f32 %v4129, %v5540
        %v5542 = vand.u32 %v5541, 4294901760
        %5543 = vmatprep.subr.mxu0 %v5542
        %v5544 = vand.u32 %v4128, 4294901760
        %v5545 = vsub.f32 %v4128, %v5544
        %v5546 = vand.u32 %v5545, 4294901760
        %5547 = vmatpush1.msra.mxu0 %v5546
        %v5548 = vand.u32 %v4131, 4294901760
        %v5549 = vsub.f32 %v4131, %v5548
        %v5550 = vand.u32 %v5549, 4294901760
        %5551 = vmatprep.subr.mxu0 %v5550
        %v5552 = vand.u32 %v4130, 4294901760
        %v5553 = vsub.f32 %v4130, %v5552
        %v5554 = vand.u32 %v5553, 4294901760
        %5555 = vmatpush1.msra.mxu0 %v5554
        %v5556 = vand.u32 %v4133, 4294901760
        %v5557 = vsub.f32 %v4133, %v5556
        %v5558 = vand.u32 %v5557, 4294901760
        %5559 = vmatprep.subr.mxu0 %v5558
        %v5560 = vand.u32 %v4132, 4294901760
        %v5561 = vsub.f32 %v4132, %v5560
        %v5562 = vand.u32 %v5561, 4294901760
        %5563 = vmatpush1.msra.mxu0 %v5562
        %v5564 = vand.u32 %v4135, 4294901760
        %v5565 = vsub.f32 %v4135, %v5564
        %v5566 = vand.u32 %v5565, 4294901760
        %5567 = vmatprep.subr.mxu0 %v5566
        %v5568 = vand.u32 %v4134, 4294901760
        %v5569 = vsub.f32 %v4134, %v5568
        %v5570 = vand.u32 %v5569, 4294901760
        %5571 = vmatpush1.msra.mxu0 %v5570
        %v5572 = vand.u32 %v4137, 4294901760
        %v5573 = vsub.f32 %v4137, %v5572
        %v5574 = vand.u32 %v5573, 4294901760
        %5575 = vmatprep.subr.mxu0 %v5574
        %v5576 = vand.u32 %v4136, 4294901760
        %v5577 = vsub.f32 %v4136, %v5576
        %v5578 = vand.u32 %v5577, 4294901760
        %5579 = vmatpush1.msra.mxu0 %v5578
        %v5580 = vand.u32 %v4139, 4294901760
        %v5581 = vsub.f32 %v4139, %v5580
        %v5582 = vand.u32 %v5581, 4294901760
        %5583 = vmatprep.subr.mxu0 %v5582
        %v5584 = vand.u32 %v4138, 4294901760
        %v5585 = vsub.f32 %v4138, %v5584
        %v5586 = vand.u32 %v5585, 4294901760
        %5587 = vmatpush1.msra.mxu0 %v5586
        %v5588 = vand.u32 %v4141, 4294901760
        %v5589 = vsub.f32 %v4141, %v5588
        %v5590 = vand.u32 %v5589, 4294901760
        %5591 = vmatprep.subr.mxu0 %v5590
        %v5592 = vand.u32 %v4140, 4294901760
        %v5593 = vsub.f32 %v4140, %v5592
        %v5594 = vand.u32 %v5593, 4294901760
        %5595 = vmatpush1.msra.mxu0 %v5594
        %v5596 = vand.u32 %v4143, 4294901760
        %v5597 = vsub.f32 %v4143, %v5596
        %v5598 = vand.u32 %v5597, 4294901760
        %5599 = vmatprep.subr.mxu0 %v5598
        %v5600 = vand.u32 %v4142, 4294901760
        %v5601 = vsub.f32 %v4142, %v5600
        %v5602 = vand.u32 %v5601, 4294901760
        %5603 = vmatpush1.msra.mxu0 %v5602
        %v5604 = vand.u32 %v4049, 4294901760
        %5605 = vmatprep.mubr.f32.mxu0 %v5604
        %v5606 = vand.u32 %v4048, 4294901760
        %5607 = vmatmul.mubr.f32.gmra.mrb[0].mxu0 %v5606
        %v5608 = vpop.f32.mrb[0].mxu0
        %v5609 = vadd.f32 %v5260, %v5608
        %v5610 = vpop.f32.mrb[0].mxu0
        %v5611 = vadd.f32 %v5262, %v5610
        %v5612 = vand.u32 %v4051, 4294901760
        %5613 = vmatprep.mubr.f32.mxu0 %v5612
        %v5614 = vand.u32 %v4050, 4294901760
        %5615 = vmatmul.mubr.f32.gmra.mrb[0].mxu0 %v5614
        %v5616 = vpop.f32.mrb[0].mxu0
        %v5617 = vadd.f32 %v5272, %v5616
        %v5618 = vpop.f32.mrb[0].mxu0
        %v5619 = vadd.f32 %v5274, %v5618
        %v5620 = vand.u32 %v4053, 4294901760
        %5621 = vmatprep.mubr.f32.mxu0 %v5620
        %v5622 = vand.u32 %v4052, 4294901760
        %5623 = vmatmul.mubr.f32.gmra.mrb[0].mxu0 %v5622
        %v5624 = vpop.f32.mrb[0].mxu0
        %v5625 = vadd.f32 %v5284, %v5624
        %v5626 = vpop.f32.mrb[0].mxu0
        %v5627 = vadd.f32 %v5286, %v5626
        %v5628 = vand.u32 %v4055, 4294901760
        %5629 = vmatprep.mubr.f32.mxu0 %v5628
        %v5630 = vand.u32 %v4054, 4294901760
        %5631 = vmatmul.mubr.f32.gmra.mrb[0].mxu0 %v5630
        %v5632 = vpop.f32.mrb[0].mxu0
        %v5633 = vadd.f32 %v5296, %v5632
        %v5634 = vpop.f32.mrb[0].mxu0
        %v5635 = vadd.f32 %v5298, %v5634
        %v5636 = vand.u32 %v4057, 4294901760
        %5637 = vmatprep.mubr.f32.mxu0 %v5636
        %v5638 = vand.u32 %v4056, 4294901760
        %5639 = vmatmul.mubr.f32.gmra.mrb[0].mxu0 %v5638
        %v5640 = vpop.f32.mrb[0].mxu0
        %v5641 = vadd.f32 %v5308, %v5640
        %v5642 = vpop.f32.mrb[0].mxu0
        %v5643 = vadd.f32 %v5310, %v5642
        %v5644 = vand.u32 %v4059, 4294901760
        %5645 = vmatprep.mubr.f32.mxu0 %v5644
        %v5646 = vand.u32 %v4058, 4294901760
        %5647 = vmatmul.mubr.f32.gmra.mrb[0].mxu0 %v5646
        %v5648 = vpop.f32.mrb[0].mxu0
        %v5649 = vadd.f32 %v5320, %v5648
        %v5650 = vpop.f32.mrb[0].mxu0
        %v5651 = vadd.f32 %v5322, %v5650
        %v5652 = vand.u32 %v4061, 4294901760
        %5653 = vmatprep.mubr.f32.mxu0 %v5652
        %v5654 = vand.u32 %v4060, 4294901760
        %5655 = vmatmul.mubr.f32.gmra.mrb[0].mxu0 %v5654
        %v5656 = vpop.f32.mrb[0].mxu0
        %v5657 = vadd.f32 %v5332, %v5656
        %v5658 = vpop.f32.mrb[0].mxu0
        %v5659 = vadd.f32 %v5334, %v5658
        %v5660 = vand.u32 %v4063, 4294901760
        %5661 = vmatprep.mubr.f32.mxu0 %v5660
        %v5662 = vand.u32 %v4062, 4294901760
        %5663 = vmatmul.mubr.f32.gmra.mrb[0].mxu0 %v5662
        %v5664 = vpop.f32.mrb[0].mxu0
        %v5665 = vadd.f32 %v5344, %v5664
        %v5666 = vpop.f32.mrb[0].mxu0
        %v5667 = vadd.f32 %v5346, %v5666
        %5668 = vdwg.mxu0
        %v5669 = vand.u32 %v4081, 4294901760
        %5670 = vmatprep.subr.mxu0 %v5669
        %v5671 = vand.u32 %v4080, 4294901760
        %5672 = vmatpush1.msra.mxu0 %v5671
        %v5673 = vand.u32 %v4083, 4294901760
        %5674 = vmatprep.subr.mxu0 %v5673
        %v5675 = vand.u32 %v4082, 4294901760
        %5676 = vmatpush1.msra.mxu0 %v5675
        %v5677 = vand.u32 %v4085, 4294901760
        %5678 = vmatprep.subr.mxu0 %v5677
        %v5679 = vand.u32 %v4084, 4294901760
        %5680 = vmatpush1.msra.mxu0 %v5679
        %v5681 = vand.u32 %v4087, 4294901760
        %5682 = vmatprep.subr.mxu0 %v5681
        %v5683 = vand.u32 %v4086, 4294901760
        %5684 = vmatpush1.msra.mxu0 %v5683
        %v5685 = vand.u32 %v4089, 4294901760
        %5686 = vmatprep.subr.mxu0 %v5685
        %v5687 = vand.u32 %v4088, 4294901760
        %5688 = vmatpush1.msra.mxu0 %v5687
        %v5689 = vand.u32 %v4091, 4294901760
        %5690 = vmatprep.subr.mxu0 %v5689
        %v5691 = vand.u32 %v4090, 4294901760
        %5692 = vmatpush1.msra.mxu0 %v5691
        %v5693 = vand.u32 %v4093, 4294901760
        %5694 = vmatprep.subr.mxu0 %v5693
        %v5695 = vand.u32 %v4092, 4294901760
        %5696 = vmatpush1.msra.mxu0 %v5695
        %v5697 = vand.u32 %v4095, 4294901760
        %5698 = vmatprep.subr.mxu0 %v5697
        %v5699 = vand.u32 %v4094, 4294901760
        %5700 = vmatpush1.msra.mxu0 %v5699
        %v5701 = vand.u32 %v4097, 4294901760
        %5702 = vmatprep.subr.mxu0 %v5701
        %v5703 = vand.u32 %v4096, 4294901760
        %5704 = vmatpush1.msra.mxu0 %v5703
        %v5705 = vand.u32 %v4099, 4294901760
        %5706 = vmatprep.subr.mxu0 %v5705
        %v5707 = vand.u32 %v4098, 4294901760
        %5708 = vmatpush1.msra.mxu0 %v5707
        %v5709 = vand.u32 %v4101, 4294901760
        %5710 = vmatprep.subr.mxu0 %v5709
        %v5711 = vand.u32 %v4100, 4294901760
        %5712 = vmatpush1.msra.mxu0 %v5711
        %v5713 = vand.u32 %v4103, 4294901760
        %5714 = vmatprep.subr.mxu0 %v5713
        %v5715 = vand.u32 %v4102, 4294901760
        %5716 = vmatpush1.msra.mxu0 %v5715
        %v5717 = vand.u32 %v4105, 4294901760
        %5718 = vmatprep.subr.mxu0 %v5717
        %v5719 = vand.u32 %v4104, 4294901760
        %5720 = vmatpush1.msra.mxu0 %v5719
        %v5721 = vand.u32 %v4107, 4294901760
        %5722 = vmatprep.subr.mxu0 %v5721
        %v5723 = vand.u32 %v4106, 4294901760
        %5724 = vmatpush1.msra.mxu0 %v5723
        %v5725 = vand.u32 %v4109, 4294901760
        %5726 = vmatprep.subr.mxu0 %v5725
        %v5727 = vand.u32 %v4108, 4294901760
        %5728 = vmatpush1.msra.mxu0 %v5727
        %v5729 = vand.u32 %v4111, 4294901760
        %5730 = vmatprep.subr.mxu0 %v5729
        %v5731 = vand.u32 %v4110, 4294901760
        %5732 = vmatpush1.msra.mxu0 %v5731
        %v5733 = vand.u32 %v4113, 4294901760
        %5734 = vmatprep.subr.mxu0 %v5733
        %v5735 = vand.u32 %v4112, 4294901760
        %5736 = vmatpush1.msra.mxu0 %v5735
        %v5737 = vand.u32 %v4115, 4294901760
        %5738 = vmatprep.subr.mxu0 %v5737
        %v5739 = vand.u32 %v4114, 4294901760
        %5740 = vmatpush1.msra.mxu0 %v5739
        %v5741 = vand.u32 %v4117, 4294901760
        %5742 = vmatprep.subr.mxu0 %v5741
        %v5743 = vand.u32 %v4116, 4294901760
        %5744 = vmatpush1.msra.mxu0 %v5743
        %v5745 = vand.u32 %v4119, 4294901760
        %5746 = vmatprep.subr.mxu0 %v5745
        %v5747 = vand.u32 %v4118, 4294901760
        %5748 = vmatpush1.msra.mxu0 %v5747
        %v5749 = vand.u32 %v4121, 4294901760
        %5750 = vmatprep.subr.mxu0 %v5749
        %v5751 = vand.u32 %v4120, 4294901760
        %5752 = vmatpush1.msra.mxu0 %v5751
        %v5753 = vand.u32 %v4123, 4294901760
        %5754 = vmatprep.subr.mxu0 %v5753
        %v5755 = vand.u32 %v4122, 4294901760
        %5756 = vmatpush1.msra.mxu0 %v5755
        %v5757 = vand.u32 %v4125, 4294901760
        %5758 = vmatprep.subr.mxu0 %v5757
        %v5759 = vand.u32 %v4124, 4294901760
        %5760 = vmatpush1.msra.mxu0 %v5759
        %v5761 = vand.u32 %v4127, 4294901760
        %5762 = vmatprep.subr.mxu0 %v5761
        %v5763 = vand.u32 %v4126, 4294901760
        %5764 = vmatpush1.msra.mxu0 %v5763
        %v5765 = vand.u32 %v4129, 4294901760
        %5766 = vmatprep.subr.mxu0 %v5765
        %v5767 = vand.u32 %v4128, 4294901760
        %5768 = vmatpush1.msra.mxu0 %v5767
        %v5769 = vand.u32 %v4131, 4294901760
        %5770 = vmatprep.subr.mxu0 %v5769
        %v5771 = vand.u32 %v4130, 4294901760
        %5772 = vmatpush1.msra.mxu0 %v5771
        %v5773 = vand.u32 %v4133, 4294901760
        %5774 = vmatprep.subr.mxu0 %v5773
        %v5775 = vand.u32 %v4132, 4294901760
        %5776 = vmatpush1.msra.mxu0 %v5775
        %v5777 = vand.u32 %v4135, 4294901760
        %5778 = vmatprep.subr.mxu0 %v5777
        %v5779 = vand.u32 %v4134, 4294901760
        %5780 = vmatpush1.msra.mxu0 %v5779
        %v5781 = vand.u32 %v4137, 4294901760
        %5782 = vmatprep.subr.mxu0 %v5781
        %v5783 = vand.u32 %v4136, 4294901760
        %5784 = vmatpush1.msra.mxu0 %v5783
        %v5785 = vand.u32 %v4139, 4294901760
        %5786 = vmatprep.subr.mxu0 %v5785
        %v5787 = vand.u32 %v4138, 4294901760
        %5788 = vmatpush1.msra.mxu0 %v5787
        %v5789 = vand.u32 %v4141, 4294901760
        %5790 = vmatprep.subr.mxu0 %v5789
        %v5791 = vand.u32 %v4140, 4294901760
        %5792 = vmatpush1.msra.mxu0 %v5791
        %v5793 = vand.u32 %v4143, 4294901760
        %5794 = vmatprep.subr.mxu0 %v5793
        %v5795 = vand.u32 %v4142, 4294901760
        %5796 = vmatpush1.msra.mxu0 %v5795
        %v5797 = vand.u32 %v4049, 4294901760
        %5798 = vmatprep.mubr.f32.mxu0 %v5797
        %v5799 = vand.u32 %v4048, 4294901760
        %5800 = vmatmul.mubr.f32.gmra.mrb[0].mxu0 %v5799
        %v5801 = vpop.f32.mrb[0].mxu0
        %v5802 = vadd.f32 %v5609, %v5801
        %v5803 = vpop.f32.mrb[0].mxu0
        %v5804 = vadd.f32 %v5611, %v5803
        %v5805 = vand.u32 %v4051, 4294901760
        %5806 = vmatprep.mubr.f32.mxu0 %v5805
        %v5807 = vand.u32 %v4050, 4294901760
        %5808 = vmatmul.mubr.f32.gmra.mrb[0].mxu0 %v5807
        %v5809 = vpop.f32.mrb[0].mxu0
        %v5810 = vadd.f32 %v5617, %v5809
        %v5811 = vpop.f32.mrb[0].mxu0
        %v5812 = vadd.f32 %v5619, %v5811
        %v5813 = vand.u32 %v4053, 4294901760
        %5814 = vmatprep.mubr.f32.mxu0 %v5813
        %v5815 = vand.u32 %v4052, 4294901760
        %5816 = vmatmul.mubr.f32.gmra.mrb[0].mxu0 %v5815
        %v5817 = vpop.f32.mrb[0].mxu0
        %v5818 = vadd.f32 %v5625, %v5817
        %v5819 = vpop.f32.mrb[0].mxu0
        %v5820 = vadd.f32 %v5627, %v5819
        %v5821 = vand.u32 %v4055, 4294901760
        %5822 = vmatprep.mubr.f32.mxu0 %v5821
        %v5823 = vand.u32 %v4054, 4294901760
        %5824 = vmatmul.mubr.f32.gmra.mrb[0].mxu0 %v5823
        %v5825 = vpop.f32.mrb[0].mxu0
        %v5826 = vadd.f32 %v5633, %v5825
        %v5827 = vpop.f32.mrb[0].mxu0
        %v5828 = vadd.f32 %v5635, %v5827
        %v5829 = vand.u32 %v4057, 4294901760
        %5830 = vmatprep.mubr.f32.mxu0 %v5829
        %v5831 = vand.u32 %v4056, 4294901760
        %5832 = vmatmul.mubr.f32.gmra.mrb[0].mxu0 %v5831
        %v5833 = vpop.f32.mrb[0].mxu0
        %v5834 = vadd.f32 %v5641, %v5833
        %v5835 = vpop.f32.mrb[0].mxu0
        %v5836 = vadd.f32 %v5643, %v5835
        %v5837 = vand.u32 %v4059, 4294901760
        %5838 = vmatprep.mubr.f32.mxu0 %v5837
        %v5839 = vand.u32 %v4058, 4294901760
        %5840 = vmatmul.mubr.f32.gmra.mrb[0].mxu0 %v5839
        %v5841 = vpop.f32.mrb[0].mxu0
        %v5842 = vadd.f32 %v5649, %v5841
        %v5843 = vpop.f32.mrb[0].mxu0
        %v5844 = vadd.f32 %v5651, %v5843
        %v5845 = vand.u32 %v4061, 4294901760
        %5846 = vmatprep.mubr.f32.mxu0 %v5845
        %v5847 = vand.u32 %v4060, 4294901760
        %5848 = vmatmul.mubr.f32.gmra.mrb[0].mxu0 %v5847
        %v5849 = vpop.f32.mrb[0].mxu0
        %v5850 = vadd.f32 %v5657, %v5849
        %v5851 = vpop.f32.mrb[0].mxu0
        %v5852 = vadd.f32 %v5659, %v5851
        %v5853 = vand.u32 %v4063, 4294901760
        %5854 = vmatprep.mubr.f32.mxu0 %v5853
        %v5855 = vand.u32 %v4062, 4294901760
        %5856 = vmatmul.mubr.f32.gmra.mrb[0].mxu0 %v5855
        %v5857 = vpop.f32.mrb[0].mxu0
        %v5858 = vadd.f32 %v5665, %v5857
        %v5859 = vpop.f32.mrb[0].mxu0
        %v5860 = vadd.f32 %v5667, %v5859
        %5861 = vdwg.mxu0
        %v5862 = vadd.f32 %v4064, %v5802
        %v5863 = vadd.f32 %v4065, %v5804
        %v5864 = vadd.f32 %v4066, %v5810
        %v5865 = vadd.f32 %v4067, %v5812
        %v5866 = vadd.f32 %v4068, %v5818
        %v5867 = vadd.f32 %v4069, %v5820
        %v5868 = vadd.f32 %v4070, %v5826
        %v5869 = vadd.f32 %v4071, %v5828
        %v5870 = vadd.f32 %v4072, %v5834
        %v5871 = vadd.f32 %v4073, %v5836
        %v5872 = vadd.f32 %v4074, %v5842
        %v5873 = vadd.f32 %v4075, %v5844
        %v5874 = vadd.f32 %v4076, %v5850
        %v5875 = vadd.f32 %v4077, %v5852
        %v5876 = vadd.f32 %v4078, %v5858
        %v5877 = vadd.f32 %v4079, %v5860
        %5878 = vst [vmem:[#allocation2] sm:$0xff] %v5862
        %5879 = vst [vmem:[#allocation2 + $0x8] sm:$0xff] %v5863
        %5880 = vst [vmem:[#allocation2 + $0x10] sm:$0xff] %v5864
        %5881 = vst [vmem:[#allocation2 + $0x18] sm:$0xff] %v5865
        %5882 = vst [vmem:[#allocation2 + $0x20] sm:$0xff] %v5866
        %5883 = vst [vmem:[#allocation2 + $0x28] sm:$0xff] %v5867
        %5884 = vst [vmem:[#allocation2 + $0x30] sm:$0xff] %v5868
        %5885 = vst [vmem:[#allocation2 + $0x38] sm:$0xff] %v5869
        %5886 = vst [vmem:[#allocation2 + $0x40] sm:$0xff] %v5870
        %5887 = vst [vmem:[#allocation2 + $0x48] sm:$0xff] %v5871
        %5888 = vst [vmem:[#allocation2 + $0x50] sm:$0xff] %v5872
        %5889 = vst [vmem:[#allocation2 + $0x58] sm:$0xff] %v5873
        %5890 = vst [vmem:[#allocation2 + $0x60] sm:$0xff] %v5874
        %5891 = vst [vmem:[#allocation2 + $0x68] sm:$0xff] %v5875
        %5892 = vst [vmem:[#allocation2 + $0x70] sm:$0xff] %v5876
        %5893 = vst [vmem:[#allocation2 + $0x78] sm:$0xff] %v5877
        %p5894 = scmp.eq.s32.totalorder %s32, 1
        // Predicated region
        $region57: #{tpu_custom_call.1} parent=35 // pred_check
          %p5895 = pneg %p5894
        $region58: #{tpu_custom_call.1} parent=35 // pred_check_branch
          %5897 = sbr.rel (%p5895) target = $region60
        $region59: #{tpu_custom_call.1} parent=35 // pred_region
          %v5898 = vld [vmem:[#allocation2] sm:$0xff]
          %v5899 = vld [vmem:[#allocation2 + $0x8] sm:$0xff]
          %v5900 = vld [vmem:[#allocation2 + $0x10] sm:$0xff]
          %v5901 = vld [vmem:[#allocation2 + $0x18] sm:$0xff]
          %v5902 = vld [vmem:[#allocation2 + $0x20] sm:$0xff]
          %v5903 = vld [vmem:[#allocation2 + $0x28] sm:$0xff]
          %v5904 = vld [vmem:[#allocation2 + $0x30] sm:$0xff]
          %v5905 = vld [vmem:[#allocation2 + $0x38] sm:$0xff]
          %v5906 = vld [vmem:[#allocation2 + $0x40] sm:$0xff]
          %v5907 = vld [vmem:[#allocation2 + $0x48] sm:$0xff]
          %v5908 = vld [vmem:[#allocation2 + $0x50] sm:$0xff]
          %v5909 = vld [vmem:[#allocation2 + $0x58] sm:$0xff]
          %v5910 = vld [vmem:[#allocation2 + $0x60] sm:$0xff]
          %v5911 = vld [vmem:[#allocation2 + $0x68] sm:$0xff]
          %v5912 = vld [vmem:[#allocation2 + $0x70] sm:$0xff]
          %v5913 = vld [vmem:[#allocation2 + $0x78] sm:$0xff]
          %5914 = vst [vmem:[%s346] sm:$0xff] %v5898
          %5915 = vst [vmem:[%s346 + $0x8] sm:$0xff] %v5899
          %5916 = vst [vmem:[%s346 + $0x10] sm:$0xff] %v5900
          %5917 = vst [vmem:[%s346 + $0x18] sm:$0xff] %v5901
          %5918 = vst [vmem:[%s346 + $0x20] sm:$0xff] %v5902
          %5919 = vst [vmem:[%s346 + $0x28] sm:$0xff] %v5903
          %5920 = vst [vmem:[%s346 + $0x30] sm:$0xff] %v5904
          %5921 = vst [vmem:[%s346 + $0x38] sm:$0xff] %v5905
          %5922 = vst [vmem:[%s346 + $0x40] sm:$0xff] %v5906
          %5923 = vst [vmem:[%s346 + $0x48] sm:$0xff] %v5907
          %5924 = vst [vmem:[%s346 + $0x50] sm:$0xff] %v5908
          %5925 = vst [vmem:[%s346 + $0x58] sm:$0xff] %v5909
          %5926 = vst [vmem:[%s346 + $0x60] sm:$0xff] %v5910
          %5927 = vst [vmem:[%s346 + $0x68] sm:$0xff] %v5911
          %5928 = vst [vmem:[%s346 + $0x70] sm:$0xff] %v5912
          %5929 = vst [vmem:[%s346 + $0x78] sm:$0xff] %v5913
        $region60: #{tpu_custom_call.1} parent=35 // pred_fallthru
          _
        %s5930 = sand.u32 %s151, 1
        %s5931 = scalar_lea.sflag [#allocation5], %s5930
        %s5932 = sand.u32 %s151, 1
        %s5933 = smul.addr %s5932, 128
        %s5934 = scalar_lea.vmem [#allocation11], %s5933
        // Predicated region
        $region61: #{tpu_custom_call.1} parent=35 // pred_check
          %p5935 = pneg %p161
        $region62: #{tpu_custom_call.1} parent=35 // pred_check_branch
          %5937 = sbr.rel (%p5935) target = $region64
        $region63: #{tpu_custom_call.1} parent=35 // pred_region
          %s5938 = smul.u32 8, %s31
          %s5940 = ssub.s32 2048, 2048
          %5941 = vsyncadd %s5931, %s5940
          %s5942 = smul.addr %s5938, 2
          %s5943 = smul.addr %s5942, 128
          %s5944 = scalar_lea.hbm %s4, %s5943
          %s5945 = sshll.u32 %s5934, 4
          %s5946 = int_to_ptr.vmem [resolvable:$true] %s5945
          %5951 = dma.vmem_to_hbm [thread:$0]  %s5946, 2048, %s5944, %s5931, 256, 256, 16
        $region64: #{tpu_custom_call.1} parent=35 // pred_fallthru
          _
      $region36: #{tpu_custom_call.1} parent=5 // pred_fallthru
        _
      %p5952 = scmp.le.s32.totalorder 2, %s22
      // Predicated region
      $region65: #{tpu_custom_call.1} parent=5 // pred_check
        %p5953 = pneg %p5952
      $region66: #{tpu_custom_call.1} parent=5 // pred_check_branch
        %5955 = sbr.rel (%p5953) target = $region68
      $region67: #{tpu_custom_call.1} parent=5 // pred_region
        %s5956 = ssub.s32 %s22, 2
        // Predicated region
        $region69: #{tpu_custom_call.1} parent=67 // pred_check
          %p5957 = pneg %p167
        $region70: #{tpu_custom_call.1} parent=67 // pred_check_branch
          %5959 = sbr.rel (%p5957) target = $region72
        $region71: #{tpu_custom_call.1} parent=67 // pred_region
          %s5960 = sand.u32 %s152, 1
          %s5961 = scalar_lea.sflag [#allocation5], %s5960
          %s5962 = sand.u32 %s152, 1
          %s5963 = smul.addr %s5962, 128
          %s5964 = scalar_lea.vmem [#allocation11], %s5963
          %5965 = dma.done %s5961, 2048
        $region72: #{tpu_custom_call.1} parent=67 // pred_fallthru
          _
      $region68: #{tpu_custom_call.1} parent=5 // pred_fallthru
        _
    $region6: #{tpu_custom_call.1} parent=1 // loop_footer
      %s26 = sadd.s32 1, %s22
    $region7: #{tpu_custom_call.1} parent=1 // loop_footer_branch
      %21 = sbr.rel target = $region3
    $region8: #{tpu_custom_call.1} parent=1 // loop_exit
      _
    %5966 = vsyncpa [#allocation4], 1
    %s5967 = scalar_lea.sflag [#allocation4], 1
    %5968 = vsyncpa %s5967, 1
    %5969 = vsyncpa [#allocation7], 1
    %s5970 = scalar_lea.sflag [#allocation7], 1
    %5971 = vsyncpa %s5970, 1
    %5972 = vsyncpa [#allocation10], 1
    %s5973 = scalar_lea.sflag [#allocation10], 1
    %5974 = vsyncpa %s5973, 1
    %5975 = vsyncpa [#allocation5], 1
    %s5976 = scalar_lea.sflag [#allocation5], 1
    %5977 = vsyncpa %s5976, 1

</llo_original>
